<compile_context>
chip_gen: v7x
topology: tpu7x:2x2x1
jax: 0.10.0
libtpu: 0.0.40
codegen_flags: <defaults>
</compile_context>

<pallas_src>
import jax
import jax.numpy as jnp
from jax import lax
from jax.experimental import pallas as pl
from jax.experimental.pallas import tpu as pltpu

NEG_SLOPE = 0.2                 # GATv2Conv default negative_slope
NEG_BIAS = -1e30                # additive mask value for non-edges
HIDDEN = 64                     # per-layer output channels (spec hard-codes 64)
MAX_ROW_BLOCK = 128             # target-row tile upper bound (fills MXU rows)
SCORE_TEMP_BUDGET = 4 * 2**20   # byte budget for the [T, N, C] f32 score temp


def _round_up(x, m):
    return ((x + m - 1) // m) * m


def choose_tiling(n, c):
    """Pick (row_block, n_padded): row_block <=128, multiple of 8, score temp bounded."""
    n8 = _round_up(max(n, 8), 8)
    if n8 <= MAX_ROW_BLOCK:
        return n8, n8                      # single tile, no tile-loop overhead
    t = MAX_ROW_BLOCK
    while t > 8 and t * _round_up(n, t) * c * 4 > SCORE_TEMP_BUDGET:
        t //= 2
    return t, _round_up(n, t)


# ----------------------------- fused Pallas kernel ---------------------------

def make_gat_kernel(num_layers, row_block):
    """Fused kernel: `num_layers` GATv2 layers + global_mean_pool + Linear."""

    def kernel(*refs):
        # inputs: x, adj_bias(bf16), pool(bf16), [w(bf16), b, att, bias]*L, lin_w(bf16), lin_b
        # output: out [G, O]; scratch: xr_ref [N,64] f32, agg_ref [N,64] f32
        x_ref, adj_ref, pool_ref = refs[0], refs[1], refs[2]
        layer_refs = refs[3:3 + 4 * num_layers]
        lin_w_ref = refs[3 + 4 * num_layers]
        lin_b_ref = refs[4 + 4 * num_layers]
        out_ref = refs[5 + 4 * num_layers]
        xr_ref = refs[6 + 4 * num_layers]
        agg_ref = refs[7 + 4 * num_layers]

        n_pad = adj_ref.shape[0]
        num_tiles = n_pad // row_block

        x_bf = x_ref[...]                                  # bf16 [N, Fin], VMEM-resident
        for l in range(num_layers):
            w_ref, b_ref, att_ref, bias_ref = layer_refs[4 * l: 4 * l + 4]
            c = w_ref.shape[1] // 2
            # One lane-dense 128-wide bf16 MXU matmul for both projections, f32 accumulate.
            y = jnp.dot(x_bf, w_ref[...], preferred_element_type=jnp.float32) + b_ref[...]
            xl = y[:, :c]                                  # source proj [N, C] (f32 score math)
            xl_bf = xl.astype(jnp.bfloat16)                # MXU operand for alpha @ xl
            xr_ref[...] = y[:, c:]                         # target proj -> scratch (ref-sliced tiles)

            # Hoisted per-layer broadcasts (JAX does not CSE broadcast_in_dim).
            att_b = jnp.broadcast_to(att_ref[...].reshape(1, 1, c), (row_block, n_pad, c))
            bias_b = jnp.broadcast_to(bias_ref[...], (row_block, c))

            def attend_tile(r0):
                xr_blk = xr_ref[pl.ds(r0, row_block), :]                          # [T, C]
                adj_blk = adj_ref[pl.ds(r0, row_block), :].astype(jnp.float32)    # [T, N]
                s = xr_blk[:, None, :] + xl[None, :, :]                           # [T, N, C]
                s = jnp.maximum(s, NEG_SLOPE * s)                                 # leaky_relu
                sc = jnp.sum(s * att_b, axis=-1) + adj_blk                        # [T, N]
                m = jnp.max(sc, axis=-1, keepdims=True)
                p = jnp.exp(sc - m)                     # non-edges underflow to exact 0
                denom = jnp.sum(p, axis=-1, keepdims=True)                        # >= 1
                alpha = (p * pl.reciprocal(denom)).astype(jnp.bfloat16)           # exact recip
                agg = jnp.dot(alpha, xl_bf, preferred_element_type=jnp.float32)   # [T, C]
                agg_ref[pl.ds(r0, row_block), :] = agg + bias_b

            if num_tiles == 1:
                attend_tile(0)
            else:
                def loop_body(r, carry):
                    attend_tile(pl.multiple_of(r * row_block, 8))
                    return carry
                lax.fori_loop(0, num_tiles, loop_body, 0)

            x_bf = agg_ref[...].astype(jnp.bfloat16)       # next layer's input stays in VMEM

        # global_mean_pool (matmul with pooling matrix) fused with the final Linear.
        pooled = jnp.dot(pool_ref[...], x_bf, preferred_element_type=jnp.float32)       # [G, 64]
        out_ref[...] = (jnp.dot(pooled.astype(jnp.bfloat16), lin_w_ref[...],
                                preferred_element_type=jnp.float32)
                        + lin_b_ref[...])                                                # [G, O]

    return kernel


def gat_forward_fused(x_bf, adj_bf, pool_bf, layers, lin_w_bf, lin_b, row_block):
    num_layers = len(layers)
    n_pad = adj_bf.shape[0]
    g = pool_bf.shape[0]
    o = lin_w_bf.shape[1]

    args = [x_bf, adj_bf, pool_bf]
    for p in layers:
        args += [p["w"], p["b"], p["att"], p["bias"]]
    args += [lin_w_bf, lin_b]

    # Explicit scoped-VMEM limit (v5e default is 16 MiB); capped at v7x physical 64 MiB.
    vmem_est = sum(int(a.size) * a.dtype.itemsize for a in args)
    vmem_est += 2 * n_pad * HIDDEN * 4                       # xr / agg scratches
    vmem_est += 3 * row_block * n_pad * HIDDEN * 4           # score temps per tile
    vmem_limit = int(min(64 * 2**20, max(32 * 2**20, 2 * vmem_est)))

    call = pl.pallas_call(
        make_gat_kernel(num_layers, row_block),
        out_shape=jax.ShapeDtypeStruct((g, o), jnp.float32),
        in_specs=[pl.BlockSpec(memory_space=pltpu.MemorySpace.VMEM) for _ in args],
        out_specs=pl.BlockSpec(memory_space=pltpu.MemorySpace.VMEM),
        scratch_shapes=[pltpu.VMEM((n_pad, HIDDEN), jnp.float32),   # xr (target proj)
                        pltpu.VMEM((n_pad, HIDDEN), jnp.float32)],  # layer-output accumulator
        compiler_params=pltpu.CompilerParams(vmem_limit_bytes=vmem_limit),
    )
    return call(*args)


# ------------------------------ glue (plain JAX) -----------------------------

def build_adj_bias(edge_index, num_padded):
    """Additive attention bias (bf16): 0 where edge j->i exists (self loops added), -1e30 else."""
    src, dst = edge_index[0], edge_index[1]
    adj = jnp.zeros((num_padded, num_padded), jnp.float32)
    adj = adj.at[dst, src].set(1.0)
    diag = jnp.arange(num_padded)
    adj = adj.at[diag, diag].set(1.0)        # remove_self_loops + add_self_loops == diag=1
    return jnp.where(adj > 0, 0.0, NEG_BIAS).astype(jnp.bfloat16)


def build_pool_matrix(batch_indexes, num_graphs, num_padded):
    n = batch_indexes.shape[0]
    onehot = (batch_indexes[None, :] == jnp.arange(num_graphs)[:, None]).astype(jnp.float32)
    counts = jnp.sum(onehot, axis=1, keepdims=True)
    pool = onehot / jnp.maximum(counts, 1.0)                 # [G, N]
    pool = jnp.pad(pool, ((0, 0), (0, num_padded - n)))      # padded nodes get 0 weight
    return pool.astype(jnp.bfloat16)


def glorot(key, shape):
    fan_in, fan_out = shape
    limit = (6.0 / (fan_in + fan_out)) ** 0.5
    return jax.random.uniform(key, shape, jnp.float32, -limit, limit)


def init_params(key, input_size, num_hidden_layers, output_size):
    hidden = HIDDEN
    sizes = (input_size,) + tuple(hidden for _ in range(num_hidden_layers))
    layers = []
    for i in range(len(sizes) - 1):
        fin, fout = sizes[i], sizes[i + 1]
        key, k1, k2, k3 = jax.random.split(key, 4)
        wl = glorot(k1, (fin, fout))
        wr = glorot(k2, (fin, fout))
        layers.append(dict(
            w=jnp.concatenate([wl, wr], axis=1),             # fused [Wl | Wr] -> [fin, 2*fout]
            b=jnp.zeros((1, 2 * fout), jnp.float32),         # fused [bl | br]
            att=glorot(k3, (1, fout)),
            bias=jnp.zeros((1, fout), jnp.float32),
        ))
    key, kw, kb = jax.random.split(key, 3)
    lin_w = glorot(kw, (hidden, output_size))
    lin_b = 0.01 * jax.random.normal(kb, (1, output_size), jnp.float32)
    return layers, lin_w, lin_b


def prepare_inputs(inputs, edge_index, batch_indexes, layers, lin_w, num_graphs):
    n = inputs.shape[0]
    row_block, n_pad = choose_tiling(n, HIDDEN)
    x_bf = jnp.pad(inputs, ((0, n_pad - n), (0, 0))).astype(jnp.bfloat16)
    adj_bf = build_adj_bias(edge_index, n_pad)
    pool_bf = build_pool_matrix(batch_indexes, num_graphs, n_pad)
    layers_k = [dict(w=p["w"].astype(jnp.bfloat16), b=p["b"], att=p["att"], bias=p["bias"])
                for p in layers]
    return x_bf, adj_bf, pool_bf, layers_k, lin_w.astype(jnp.bfloat16), row_block


def gat_forward(inputs, edge_index, batch_indexes, layers, lin_w, lin_b, num_graphs):
    x_bf, adj_bf, pool_bf, layers_k, lin_w_bf, row_block = prepare_inputs(
        inputs, edge_index, batch_indexes, layers, lin_w, num_graphs)
    return gat_forward_fused(x_bf, adj_bf, pool_bf, layers_k, lin_w_bf, lin_b, row_block)


def matched_reference(x_bf, adj_bf, pool_bf, layers_k, lin_w_bf, lin_b):
    """Pure-JAX reference mirroring the kernel's exact math (bf16 MXU operands, f32 accum)."""
    adj = adj_bf.astype(jnp.float32)
    for p in layers_k:
        c = p["w"].shape[1] // 2
        y = jnp.dot(x_bf, p["w"], preferred_element_type=jnp.float32) + p["b"]
        xl, xr = y[:, :c], y[:, c:]
        s = xr[:, None, :] + xl[None, :, :]
        s = jnp.maximum(s, NEG_SLOPE * s)
        sc = jnp.sum(s * p["att"][None, :, :], axis=-1) + adj
        m = jnp.max(sc, axis=-1, keepdims=True)
        e = jnp.exp(sc - m)
        alpha = (e / jnp.sum(e, axis=-1, keepdims=True)).astype(jnp.bfloat16)
        x = jnp.dot(alpha, xl.astype(jnp.bfloat16), preferred_element_type=jnp.float32) + p["bias"]
        x_bf = x.astype(jnp.bfloat16)
    pooled = jnp.dot(pool_bf, x_bf, preferred_element_type=jnp.float32)
    return jnp.dot(pooled.astype(jnp.bfloat16), lin_w_bf,
                   preferred_element_type=jnp.float32) + lin_b


def reference_forward(inputs, edge_index, batch_indexes, layers, lin_w, lin_b, num_graphs):
    """Pure f32 reference of the original module semantics (exact division, no padding)."""
    n = inputs.shape[0]
    src, dst = edge_index[0], edge_index[1]
    adj = jnp.zeros((n, n), jnp.float32).at[dst, src].set(1.0)
    adj = adj.at[jnp.arange(n), jnp.arange(n)].set(1.0)
    adj_bias = jnp.where(adj > 0, 0.0, NEG_BIAS)
    onehot = (batch_indexes[None, :] == jnp.arange(num_graphs)[:, None]).astype(jnp.float32)
    pool = onehot / jnp.maximum(jnp.sum(onehot, axis=1, keepdims=True), 1.0)
    x = inputs
    for p in layers:
        c = p["w"].shape[1] // 2
        y = x @ p["w"] + p["b"]
        xl, xr = y[:, :c], y[:, c:]
        s = xr[:, None, :] + xl[None, :, :]
        s = jnp.where(s > 0, s, NEG_SLOPE * s)
        sc = jnp.sum(s * p["att"][None, :, :], axis=-1) + adj_bias
        sc = sc - jnp.max(sc, axis=-1, keepdims=True)
        e = jnp.exp(sc)
        alpha = e / jnp.sum(e, axis=-1, keepdims=True)
        x = alpha @ xl + p["bias"]
    return (pool @ x) @ lin_w + lin_b


# ---------------------------------- main --------------------------------------

if __name__ == "__main__":
    key = jax.random.PRNGKey(0)

    input_size = 8          # node feature dim
    num_hidden_layers = 2   # -> GATv2Conv(8, 64), GATv2Conv(64, 64)
    output_size = 3
    bayesian = False        # only the non-bayesian branch is implemented

    nodes_per_graph = 8
    num_graphs = 2
    N = nodes_per_graph * num_graphs   # 16 nodes total

    # deterministic node features
    key, kx = jax.random.split(key)
    inputs = jax.random.normal(kx, (N, input_size), jnp.float32)

    # deterministic edge_index [2, E]: bidirectional ring within each graph (no dup edges)
    src_list, dst_list = [], []
    for g in range(num_graphs):
        base = g * nodes_per_graph
        for i in range(nodes_per_graph):
            a = base + i
            b = base + (i + 1) % nodes_per_graph
            src_list += [a, b]
            dst_list += [b, a]
    edge_index = jnp.array([src_list, dst_list], dtype=jnp.int32)   # [2, 32]

    batch_indexes = jnp.repeat(jnp.arange(num_graphs, dtype=jnp.int32), nodes_per_graph)

    layers, lin_w, lin_b = init_params(key, input_size, num_hidden_layers, output_size)

    out = gat_forward(inputs, edge_index, batch_indexes, layers, lin_w, lin_b, num_graphs)
    out = jax.block_until_ready(out)

    assert out.shape == (num_graphs, output_size)
    assert bool(jnp.all(jnp.isfinite(out)))

    # 1) strong check: kernel vs precision-matched (bf16-MXU) pure-JAX reference
    x_bf, adj_bf, pool_bf, layers_k, lin_w_bf, _ = prepare_inputs(
        inputs, edge_index, batch_indexes, layers, lin_w, num_graphs)
    ref_matched = jax.block_until_ready(
        matched_reference(x_bf, adj_bf, pool_bf, layers_k, lin_w_bf, lin_b))
    assert bool(jnp.allclose(out, ref_matched, rtol=1e-2, atol=1e-2)), (out, ref_matched)

    # 2) fidelity check vs the pure-f32 module semantics (bf16 MXU operands -> loose tol)
    ref_f32 = jax.block_until_ready(
        reference_forward(inputs, edge_index, batch_indexes, layers, lin_w, lin_b, num_graphs))
    assert bool(jnp.allclose(out, ref_f32, rtol=5e-2, atol=5e-2)), (out, ref_f32)

    print("KERNEL_OK")
</pallas_src>

<mosaic_0001>
module attributes {stable_mosaic.version = 11 : i64} {
  func.func @kernel(%arg0: memref<16x8xbf16, #tpu.memory_space<vmem>>, %arg1: memref<16x16xbf16, #tpu.memory_space<vmem>>, %arg2: memref<2x16xbf16, #tpu.memory_space<vmem>>, %arg3: memref<8x128xbf16, #tpu.memory_space<vmem>>, %arg4: memref<1x128xf32, #tpu.memory_space<vmem>>, %arg5: memref<1x64xf32, #tpu.memory_space<vmem>>, %arg6: memref<1x64xf32, #tpu.memory_space<vmem>>, %arg7: memref<64x128xbf16, #tpu.memory_space<vmem>>, %arg8: memref<1x128xf32, #tpu.memory_space<vmem>>, %arg9: memref<1x64xf32, #tpu.memory_space<vmem>>, %arg10: memref<1x64xf32, #tpu.memory_space<vmem>>, %arg11: memref<64x3xbf16, #tpu.memory_space<vmem>>, %arg12: memref<1x3xf32, #tpu.memory_space<vmem>>, %arg13: memref<2x3xf32, #tpu.memory_space<vmem>>, %arg14: memref<16x64xf32, #tpu.memory_space<vmem>>, %arg15: memref<16x64xf32, #tpu.memory_space<vmem>>) attributes {dimension_semantics = [], scalar_prefetch = 0 : i64, scratch_operands = 2 : i64, tpu.core_type = #tpu.core_type<tc>} {
    %c0 = arith.constant 0 : index
    %c0_0 = arith.constant 0 : index
    %0 = vector.load %arg0[%c0, %c0_0] : memref<16x8xbf16, #tpu.memory_space<vmem>>, vector<16x8xbf16>
    %c0_1 = arith.constant 0 : index
    %c0_2 = arith.constant 0 : index
    %1 = vector.load %arg3[%c0_1, %c0_2] : memref<8x128xbf16, #tpu.memory_space<vmem>>, vector<8x128xbf16>
    %cst = arith.constant dense<0.000000e+00> : vector<16x128xf32>
    %2 = tpu.matmul %0, %1, %cst {dimension_numbers = #tpu.dot_dimension_numbers<[1], [0], [0], [1], [0, 0, 1, 1], [], []>} : vector<16x8xbf16>, vector<8x128xbf16>, vector<16x128xf32> -> vector<16x128xf32>
    %c0_3 = arith.constant 0 : index
    %c0_4 = arith.constant 0 : index
    %3 = vector.load %arg4[%c0_3, %c0_4] : memref<1x128xf32, #tpu.memory_space<vmem>>, vector<1x128xf32>
    %4 = vector.broadcast %3 : vector<1x128xf32> to vector<16x128xf32>
    %5 = arith.addf %2, %4 : vector<16x128xf32>
    %6 = vector.extract_strided_slice %5 {offsets = [0, 0], sizes = [16, 64], strides = [1, 1]} : vector<16x128xf32> to vector<16x64xf32>
    %7 = arith.truncf %6 : vector<16x64xf32> to vector<16x64xbf16>
    %8 = vector.extract_strided_slice %5 {offsets = [0, 64], sizes = [16, 64], strides = [1, 1]} : vector<16x128xf32> to vector<16x64xf32>
    %c0_5 = arith.constant 0 : index
    %c0_6 = arith.constant 0 : index
    %9 = vector.load %arg14[%c0_5, %c0_6] : memref<16x64xf32, #tpu.memory_space<vmem>>, vector<16x64xf32>
    tpu.vector_store %arg14[%c0_5, %c0_6], %8 {strides = array<i32>} : memref<16x64xf32, #tpu.memory_space<vmem>>, vector<16x64xf32>,
    %c0_7 = arith.constant 0 : index
    %c0_8 = arith.constant 0 : index
    %10 = vector.load %arg5[%c0_7, %c0_8] : memref<1x64xf32, #tpu.memory_space<vmem>>, vector<1x64xf32>
    %11 = vector.shape_cast %10 : vector<1x64xf32> to vector<1x1x64xf32>
    %12 = vector.shape_cast %11 : vector<1x1x64xf32> to vector<1x1x64xf32>
    %13 = vector.broadcast %12 : vector<1x1x64xf32> to vector<16x16x64xf32>
    %c0_9 = arith.constant 0 : index
    %c0_10 = arith.constant 0 : index
    %14 = vector.load %arg6[%c0_9, %c0_10] : memref<1x64xf32, #tpu.memory_space<vmem>>, vector<1x64xf32>
    %15 = vector.shape_cast %14 : vector<1x64xf32> to vector<1x64xf32>
    %16 = vector.broadcast %15 : vector<1x64xf32> to vector<16x64xf32>
    %c0_11 = arith.constant 0 : index
    %c0_12 = arith.constant 0 : index
    %17 = vector.load %arg14[%c0_11, %c0_12] : memref<16x64xf32, #tpu.memory_space<vmem>>, vector<16x64xf32>
    %c0_13 = arith.constant 0 : index
    %c0_14 = arith.constant 0 : index
    %18 = vector.load %arg1[%c0_13, %c0_14] : memref<16x16xbf16, #tpu.memory_space<vmem>>, vector<16x16xbf16>
    %19 = arith.extf %18 : vector<16x16xbf16> to vector<16x16xf32>
    %20 = vector.shape_cast %17 : vector<16x64xf32> to vector<16x1x64xf32>
    %21 = vector.shape_cast %6 : vector<16x64xf32> to vector<1x16x64xf32>
    %22 = vector.broadcast %20 : vector<16x1x64xf32> to vector<16x16x64xf32>
    %23 = vector.broadcast %21 : vector<1x16x64xf32> to vector<16x16x64xf32>
    %24 = arith.addf %22, %23 : vector<16x16x64xf32>
    %cst_15 = arith.constant 2.000000e-01 : f32
    %25 = vector.broadcast %cst_15 : f32 to vector<16x16x64xf32>
    %26 = arith.mulf %25, %24 : vector<16x16x64xf32>
    %27 = arith.maximumf %24, %26 : vector<16x16x64xf32>
    %28 = arith.mulf %27, %13 : vector<16x16x64xf32>
    %cst_16 = arith.constant dense<0.000000e+00> : vector<16x16xf32>
    %29 = vector.multi_reduction <add>, %28, %cst_16 [2] : vector<16x16x64xf32> to vector<16x16xf32>
    %30 = arith.addf %29, %19 : vector<16x16xf32>
    %cst_17 = arith.constant dense<0xFF800000> : vector<16xf32>
    %31 = vector.multi_reduction <maximumf>, %30, %cst_17 [1] : vector<16x16xf32> to vector<16xf32>
    %32 = vector.shape_cast %31 : vector<16xf32> to vector<16x1xf32>
    %33 = vector.broadcast %32 : vector<16x1xf32> to vector<16x16xf32>
    %34 = arith.subf %30, %33 : vector<16x16xf32>
    %35 = math.exp %34 : vector<16x16xf32>
    %cst_18 = arith.constant dense<0.000000e+00> : vector<16xf32>
    %36 = vector.multi_reduction <add>, %35, %cst_18 [1] : vector<16x16xf32> to vector<16xf32>
    %37 = vector.shape_cast %36 : vector<16xf32> to vector<16x1xf32>
    %38 = tpu.reciprocal %37 : vector<16x1xf32> -> vector<16x1xf32>
    %39 = vector.broadcast %38 : vector<16x1xf32> to vector<16x16xf32>
    %40 = arith.mulf %35, %39 : vector<16x16xf32>
    %41 = arith.truncf %40 : vector<16x16xf32> to vector<16x16xbf16>
    %cst_19 = arith.constant dense<0.000000e+00> : vector<16x64xf32>
    %42 = tpu.matmul %41, %7, %cst_19 {dimension_numbers = #tpu.dot_dimension_numbers<[1], [0], [0], [1], [0, 0, 1, 1], [], []>} : vector<16x16xbf16>, vector<16x64xbf16>, vector<16x64xf32> -> vector<16x64xf32>
    %43 = arith.addf %42, %16 : vector<16x64xf32>
    %c0_20 = arith.constant 0 : index
    %c0_21 = arith.constant 0 : index
    %44 = vector.load %arg15[%c0_20, %c0_21] : memref<16x64xf32, #tpu.memory_space<vmem>>, vector<16x64xf32>
    tpu.vector_store %arg15[%c0_20, %c0_21], %43 {strides = array<i32>} : memref<16x64xf32, #tpu.memory_space<vmem>>, vector<16x64xf32>,
    %c0_22 = arith.constant 0 : index
    %c0_23 = arith.constant 0 : index
    %45 = vector.load %arg15[%c0_22, %c0_23] : memref<16x64xf32, #tpu.memory_space<vmem>>, vector<16x64xf32>
    %46 = arith.truncf %45 : vector<16x64xf32> to vector<16x64xbf16>
    %c0_24 = arith.constant 0 : index
    %c0_25 = arith.constant 0 : index
    %47 = vector.load %arg7[%c0_24, %c0_25] : memref<64x128xbf16, #tpu.memory_space<vmem>>, vector<64x128xbf16>
    %cst_26 = arith.constant dense<0.000000e+00> : vector<16x128xf32>
    %48 = tpu.matmul %46, %47, %cst_26 {dimension_numbers = #tpu.dot_dimension_numbers<[1], [0], [0], [1], [0, 0, 1, 1], [], []>} : vector<16x64xbf16>, vector<64x128xbf16>, vector<16x128xf32> -> vector<16x128xf32>
    %c0_27 = arith.constant 0 : index
    %c0_28 = arith.constant 0 : index
    %49 = vector.load %arg8[%c0_27, %c0_28] : memref<1x128xf32, #tpu.memory_space<vmem>>, vector<1x128xf32>
    %50 = vector.broadcast %49 : vector<1x128xf32> to vector<16x128xf32>
    %51 = arith.addf %48, %50 : vector<16x128xf32>
    %52 = vector.extract_strided_slice %51 {offsets = [0, 0], sizes = [16, 64], strides = [1, 1]} : vector<16x128xf32> to vector<16x64xf32>
    %53 = arith.truncf %52 : vector<16x64xf32> to vector<16x64xbf16>
    %54 = vector.extract_strided_slice %51 {offsets = [0, 64], sizes = [16, 64], strides = [1, 1]} : vector<16x128xf32> to vector<16x64xf32>
    %c0_29 = arith.constant 0 : index
    %c0_30 = arith.constant 0 : index
    %55 = vector.load %arg14[%c0_29, %c0_30] : memref<16x64xf32, #tpu.memory_space<vmem>>, vector<16x64xf32>
    tpu.vector_store %arg14[%c0_29, %c0_30], %54 {strides = array<i32>} : memref<16x64xf32, #tpu.memory_space<vmem>>, vector<16x64xf32>,
    %c0_31 = arith.constant 0 : index
    %c0_32 = arith.constant 0 : index
    %56 = vector.load %arg9[%c0_31, %c0_32] : memref<1x64xf32, #tpu.memory_space<vmem>>, vector<1x64xf32>
    %57 = vector.shape_cast %56 : vector<1x64xf32> to vector<1x1x64xf32>
    %58 = vector.shape_cast %57 : vector<1x1x64xf32> to vector<1x1x64xf32>
    %59 = vector.broadcast %58 : vector<1x1x64xf32> to vector<16x16x64xf32>
    %c0_33 = arith.constant 0 : index
    %c0_34 = arith.constant 0 : index
    %60 = vector.load %arg10[%c0_33, %c0_34] : memref<1x64xf32, #tpu.memory_space<vmem>>, vector<1x64xf32>
    %61 = vector.shape_cast %60 : vector<1x64xf32> to vector<1x64xf32>
    %62 = vector.broadcast %61 : vector<1x64xf32> to vector<16x64xf32>
    %c0_35 = arith.constant 0 : index
    %c0_36 = arith.constant 0 : index
    %63 = vector.load %arg14[%c0_35, %c0_36] : memref<16x64xf32, #tpu.memory_space<vmem>>, vector<16x64xf32>
    %c0_37 = arith.constant 0 : index
    %c0_38 = arith.constant 0 : index
    %64 = vector.load %arg1[%c0_37, %c0_38] : memref<16x16xbf16, #tpu.memory_space<vmem>>, vector<16x16xbf16>
    %65 = arith.extf %64 : vector<16x16xbf16> to vector<16x16xf32>
    %66 = vector.shape_cast %63 : vector<16x64xf32> to vector<16x1x64xf32>
    %67 = vector.shape_cast %52 : vector<16x64xf32> to vector<1x16x64xf32>
    %68 = vector.broadcast %66 : vector<16x1x64xf32> to vector<16x16x64xf32>
    %69 = vector.broadcast %67 : vector<1x16x64xf32> to vector<16x16x64xf32>
    %70 = arith.addf %68, %69 : vector<16x16x64xf32>
    %cst_39 = arith.constant 2.000000e-01 : f32
    %71 = vector.broadcast %cst_39 : f32 to vector<16x16x64xf32>
    %72 = arith.mulf %71, %70 : vector<16x16x64xf32>
    %73 = arith.maximumf %70, %72 : vector<16x16x64xf32>
    %74 = arith.mulf %73, %59 : vector<16x16x64xf32>
    %cst_40 = arith.constant dense<0.000000e+00> : vector<16x16xf32>
    %75 = vector.multi_reduction <add>, %74, %cst_40 [2] : vector<16x16x64xf32> to vector<16x16xf32>
    %76 = arith.addf %75, %65 : vector<16x16xf32>
    %cst_41 = arith.constant dense<0xFF800000> : vector<16xf32>
    %77 = vector.multi_reduction <maximumf>, %76, %cst_41 [1] : vector<16x16xf32> to vector<16xf32>
    %78 = vector.shape_cast %77 : vector<16xf32> to vector<16x1xf32>
    %79 = vector.broadcast %78 : vector<16x1xf32> to vector<16x16xf32>
    %80 = arith.subf %76, %79 : vector<16x16xf32>
    %81 = math.exp %80 : vector<16x16xf32>
    %cst_42 = arith.constant dense<0.000000e+00> : vector<16xf32>
    %82 = vector.multi_reduction <add>, %81, %cst_42 [1] : vector<16x16xf32> to vector<16xf32>
    %83 = vector.shape_cast %82 : vector<16xf32> to vector<16x1xf32>
    %84 = tpu.reciprocal %83 : vector<16x1xf32> -> vector<16x1xf32>
    %85 = vector.broadcast %84 : vector<16x1xf32> to vector<16x16xf32>
    %86 = arith.mulf %81, %85 : vector<16x16xf32>
    %87 = arith.truncf %86 : vector<16x16xf32> to vector<16x16xbf16>
    %cst_43 = arith.constant dense<0.000000e+00> : vector<16x64xf32>
    %88 = tpu.matmul %87, %53, %cst_43 {dimension_numbers = #tpu.dot_dimension_numbers<[1], [0], [0], [1], [0, 0, 1, 1], [], []>} : vector<16x16xbf16>, vector<16x64xbf16>, vector<16x64xf32> -> vector<16x64xf32>
    %89 = arith.addf %88, %62 : vector<16x64xf32>
    %c0_44 = arith.constant 0 : index
    %c0_45 = arith.constant 0 : index
    %90 = vector.load %arg15[%c0_44, %c0_45] : memref<16x64xf32, #tpu.memory_space<vmem>>, vector<16x64xf32>
    tpu.vector_store %arg15[%c0_44, %c0_45], %89 {strides = array<i32>} : memref<16x64xf32, #tpu.memory_space<vmem>>, vector<16x64xf32>,
    %c0_46 = arith.constant 0 : index
    %c0_47 = arith.constant 0 : index
    %91 = vector.load %arg15[%c0_46, %c0_47] : memref<16x64xf32, #tpu.memory_space<vmem>>, vector<16x64xf32>
    %92 = arith.truncf %91 : vector<16x64xf32> to vector<16x64xbf16>
    %c0_48 = arith.constant 0 : index
    %c0_49 = arith.constant 0 : index
    %93 = vector.load %arg2[%c0_48, %c0_49] : memref<2x16xbf16, #tpu.memory_space<vmem>>, vector<2x16xbf16>
    %cst_50 = arith.constant dense<0.000000e+00> : vector<2x64xf32>
    %94 = tpu.matmul %93, %92, %cst_50 {dimension_numbers = #tpu.dot_dimension_numbers<[1], [0], [0], [1], [0, 0, 1, 1], [], []>} : vector<2x16xbf16>, vector<16x64xbf16>, vector<2x64xf32> -> vector<2x64xf32>
    %95 = arith.truncf %94 : vector<2x64xf32> to vector<2x64xbf16>
    %c0_51 = arith.constant 0 : index
    %c0_52 = arith.constant 0 : index
    %96 = vector.load %arg11[%c0_51, %c0_52] : memref<64x3xbf16, #tpu.memory_space<vmem>>, vector<64x3xbf16>
    %cst_53 = arith.constant dense<0.000000e+00> : vector<2x3xf32>
    %97 = tpu.matmul %95, %96, %cst_53 {dimension_numbers = #tpu.dot_dimension_numbers<[1], [0], [0], [1], [0, 0, 1, 1], [], []>} : vector<2x64xbf16>, vector<64x3xbf16>, vector<2x3xf32> -> vector<2x3xf32>
    %c0_54 = arith.constant 0 : index
    %c0_55 = arith.constant 0 : index
    %98 = vector.load %arg12[%c0_54, %c0_55] : memref<1x3xf32, #tpu.memory_space<vmem>>, vector<1x3xf32>
    %99 = vector.broadcast %98 : vector<1x3xf32> to vector<2x3xf32>
    %100 = arith.addf %97, %99 : vector<2x3xf32>
    %c0_56 = arith.constant 0 : index
    %c0_57 = arith.constant 0 : index
    %101 = vector.load %arg13[%c0_56, %c0_57] : memref<2x3xf32, #tpu.memory_space<vmem>>, vector<2x3xf32>
    tpu.vector_store %arg13[%c0_56, %c0_57], %100 {strides = array<i32>} : memref<2x3xf32, #tpu.memory_space<vmem>>, vector<2x3xf32>,
    return
  }
}

</mosaic_0001>

<llo_original>
// kernel: tpu_custom_call.1
$region0: #{tpu_custom_call.1}
  #allocation0 [shape = 'u32[]', space=smem, size = 0x4, offset = 0x4, fixed_abs, tag = 'smem constant byte address 0x4 - core index']
  #allocation1 [shape = 'u32[144,128]{1,0:T(1,128)}', space=vmem, size = 0x12000, scoped, tag = 'internal scratch']
  #allocation2 [shape = 'f32[16,64]{1,0:T(8,128)}', space=vmem, size = 0x2000, scoped, tag = 'scratch operand']
  #allocation3 [shape = 'f32[16,64]{1,0:T(8,128)}', space=vmem, size = 0x2000, scoped, tag = 'scratch operand']
  %s0 = inlined_call_operand.vmem [shape: bf16[16,8], index: 0, kind: input, shape index: {}]
  %s1 = inlined_call_operand.vmem [shape: bf16[16,16], index: 1, kind: input, shape index: {}]
  %s2 = inlined_call_operand.vmem [shape: bf16[2,16], index: 2, kind: input, shape index: {}]
  %s3 = inlined_call_operand.vmem [shape: bf16[8,128], index: 3, kind: input, shape index: {}]
  %s4 = inlined_call_operand.vmem [shape: f32[1,128], index: 4, kind: input, shape index: {}]
  %s5 = inlined_call_operand.vmem [shape: f32[1,64], index: 5, kind: input, shape index: {}]
  %s6 = inlined_call_operand.vmem [shape: f32[1,64], index: 6, kind: input, shape index: {}]
  %s7 = inlined_call_operand.vmem [shape: bf16[64,128], index: 7, kind: input, shape index: {}]
  %s8 = inlined_call_operand.vmem [shape: f32[1,128], index: 8, kind: input, shape index: {}]
  %s9 = inlined_call_operand.vmem [shape: f32[1,64], index: 9, kind: input, shape index: {}]
  %s10 = inlined_call_operand.vmem [shape: f32[1,64], index: 10, kind: input, shape index: {}]
  %s11 = inlined_call_operand.vmem [shape: bf16[64,3], index: 11, kind: input, shape index: {}]
  %s12 = inlined_call_operand.vmem [shape: f32[1,3], index: 12, kind: input, shape index: {}]
  %s13 = inlined_call_operand.hbm [shape: f32[2,3], index: 13, kind: output, shape index: {}]
  %s14 = sld [smem:[#allocation0]]
  $region62: #{tpu_custom_call.1} parent=0
    _
  %s16 = ssub.s32 1, %s14
  %s17 = scalar_select 0, %s16, %s14
  $region1: #{tpu_custom_call.1} parent=0
    #allocation4 [shape = 'u8[1024]{0}', space=vmem, size = 0x400, scoped, tag = 'output window, operand 0, single buffered']
    #allocation5 [shape = 's32[1]{0}', space=sflag, size = 0x4, scoped, tag = 'scoped memory for tpu_custom_call.1']
    %18 = vsyncpa [#allocation5], 0
    // Predicated region
    $region2: #{tpu_custom_call.1} parent=1 // pred_check
      _
    $region3: #{tpu_custom_call.1} parent=1 // pred_check_branch
      %20 = sbr.rel (0) target = $region5
    $region4: #{tpu_custom_call.1} parent=1 // pred_region
      _
    $region5: #{tpu_custom_call.1} parent=1 // pred_fallthru
      _
    // Predicated region
    $region6: #{tpu_custom_call.1} parent=1 // pred_check
      _
    $region7: #{tpu_custom_call.1} parent=1 // pred_check_branch
      %22 = sbr.rel (0) target = $region9
    $region8: #{tpu_custom_call.1} parent=1 // pred_region
      _
    $region9: #{tpu_custom_call.1} parent=1 // pred_fallthru
      _
    // Predicated region
    $region10: #{tpu_custom_call.1} parent=1 // pred_check
      _
    $region11: #{tpu_custom_call.1} parent=1 // pred_check_branch
      %24 = sbr.rel (0) target = $region13
    $region12: #{tpu_custom_call.1} parent=1 // pred_region
      _
    $region13: #{tpu_custom_call.1} parent=1 // pred_fallthru
      _
    // Predicated region
    $region14: #{tpu_custom_call.1} parent=1 // pred_check
      _
    $region15: #{tpu_custom_call.1} parent=1 // pred_check_branch
      %26 = sbr.rel (0) target = $region17
    $region16: #{tpu_custom_call.1} parent=1 // pred_region
      _
    $region17: #{tpu_custom_call.1} parent=1 // pred_fallthru
      _
    // Predicated region
    $region18: #{tpu_custom_call.1} parent=1 // pred_check
      _
    $region19: #{tpu_custom_call.1} parent=1 // pred_check_branch
      %28 = sbr.rel (0) target = $region21
    $region20: #{tpu_custom_call.1} parent=1 // pred_region
      _
    $region21: #{tpu_custom_call.1} parent=1 // pred_fallthru
      _
    // Predicated region
    $region22: #{tpu_custom_call.1} parent=1 // pred_check
      _
    $region23: #{tpu_custom_call.1} parent=1 // pred_check_branch
      %30 = sbr.rel (0) target = $region25
    $region24: #{tpu_custom_call.1} parent=1 // pred_region
      _
    $region25: #{tpu_custom_call.1} parent=1 // pred_fallthru
      _
    // Predicated region
    $region26: #{tpu_custom_call.1} parent=1 // pred_check
      _
    $region27: #{tpu_custom_call.1} parent=1 // pred_check_branch
      %32 = sbr.rel (0) target = $region29
    $region28: #{tpu_custom_call.1} parent=1 // pred_region
      _
    $region29: #{tpu_custom_call.1} parent=1 // pred_fallthru
      _
    // Predicated region
    $region30: #{tpu_custom_call.1} parent=1 // pred_check
      _
    $region31: #{tpu_custom_call.1} parent=1 // pred_check_branch
      %34 = sbr.rel (0) target = $region33
    $region32: #{tpu_custom_call.1} parent=1 // pred_region
      _
    $region33: #{tpu_custom_call.1} parent=1 // pred_fallthru
      _
    // Predicated region
    $region34: #{tpu_custom_call.1} parent=1 // pred_check
      _
    $region35: #{tpu_custom_call.1} parent=1 // pred_check_branch
      %36 = sbr.rel (0) target = $region37
    $region36: #{tpu_custom_call.1} parent=1 // pred_region
      _
    $region37: #{tpu_custom_call.1} parent=1 // pred_fallthru
      _
    // Predicated region
    $region38: #{tpu_custom_call.1} parent=1 // pred_check
      _
    $region39: #{tpu_custom_call.1} parent=1 // pred_check_branch
      %38 = sbr.rel (0) target = $region41
    $region40: #{tpu_custom_call.1} parent=1 // pred_region
      _
    $region41: #{tpu_custom_call.1} parent=1 // pred_fallthru
      _
    // Predicated region
    $region42: #{tpu_custom_call.1} parent=1 // pred_check
      _
    $region43: #{tpu_custom_call.1} parent=1 // pred_check_branch
      %40 = sbr.rel (0) target = $region45
    $region44: #{tpu_custom_call.1} parent=1 // pred_region
      _
    $region45: #{tpu_custom_call.1} parent=1 // pred_fallthru
      _
    // Predicated region
    $region46: #{tpu_custom_call.1} parent=1 // pred_check
      _
    $region47: #{tpu_custom_call.1} parent=1 // pred_check_branch
      %42 = sbr.rel (0) target = $region49
    $region48: #{tpu_custom_call.1} parent=1 // pred_region
      _
    $region49: #{tpu_custom_call.1} parent=1 // pred_fallthru
      _
    // Predicated region
    $region50: #{tpu_custom_call.1} parent=1 // pred_check
      _
    $region51: #{tpu_custom_call.1} parent=1 // pred_check_branch
      %44 = sbr.rel (0) target = $region53
    $region52: #{tpu_custom_call.1} parent=1 // pred_region
      _
    $region53: #{tpu_custom_call.1} parent=1 // pred_fallthru
      _
    %v46 = vld [vmem:[%s0] sm:$0xf]
    %v47 = vld [vmem:[%s0 + $0x4] sm:$0xf]
    %v48 = vld [vmem:[%s3] sm:$0xf]
    %v49 = vld [vmem:[%s4] sm:$0x1]
    %v51 = vlaneseq
    %v52 = vshrl.u32 %v51, 7
    %v53 = vsub.s32 0, %v52
    %v54 = vrot.slane %v49, %v53
    %v58 = vunpack.c.l.b16 %v46
    %v59 = vunpack.c.l.b16 %v47
    %v60 = vpack.c.b16 %v59, %v58
    %vm61 = vcmask 64512
    %v63 = vsel %vm61, %v60, 0
    %vm65 = vcmask 1043456
    %v67 = vsel %vm65, %v48, 0
    %69 = vmatprep.subr.bf16.mxu0 0
    %70 = vmatpush1.bf16.msra.mxu0 %v67
    %71 = vmatprep.subr.bf16.mxu0 0
    %72 = vmatpush1.bf16.msra.mxu0 0
    %73 = vmatprep.subr.bf16.mxu0 0
    %74 = vmatpush1.bf16.msra.mxu0 0
    %75 = vmatprep.subr.bf16.mxu0 0
    %76 = vmatpush1.bf16.msra.mxu0 0
    %77 = vmatprep.subr.bf16.mxu0 0
    %78 = vmatpush1.bf16.msra.mxu0 0
    %79 = vmatprep.subr.bf16.mxu0 0
    %80 = vmatpush1.bf16.msra.mxu0 0
    %81 = vmatprep.subr.bf16.mxu0 0
    %82 = vmatpush1.bf16.msra.mxu0 0
    %83 = vmatprep.subr.bf16.mxu0 0
    %84 = vmatpush1.bf16.msra.mxu0 0
    %85 = vmatprep.subr.bf16.mxu0 0
    %86 = vmatpush1.bf16.msra.mxu0 0
    %87 = vmatprep.subr.bf16.mxu0 0
    %88 = vmatpush1.bf16.msra.mxu0 0
    %89 = vmatprep.subr.bf16.mxu0 0
    %90 = vmatpush1.bf16.msra.mxu0 0
    %91 = vmatprep.subr.bf16.mxu0 0
    %92 = vmatpush1.bf16.msra.mxu0 0
    %93 = vmatprep.subr.bf16.mxu0 0
    %94 = vmatpush1.bf16.msra.mxu0 0
    %95 = vmatprep.subr.bf16.mxu0 0
    %96 = vmatpush1.bf16.msra.mxu0 0
    %97 = vmatprep.subr.bf16.mxu0 0
    %98 = vmatpush1.bf16.msra.mxu0 0
    %99 = vmatprep.subr.bf16.mxu0 0
    %100 = vmatpush1.bf16.msra.mxu0 0
    %101 = vmatprep.mubr.bf16.mxu0 0
    %102 = vmatmul.mubr.bf16.gmra.mrb[0].mxu0 %v63
    %v103 = vpop.f32.mrb[0].mxu0
    %v104 = vadd.f32 %v54, %v103
    %v105 = vpop.f32.mrb[0].mxu0
    %v106 = vpop.f32.mrb[0].mxu0
    %v107 = vadd.f32 %v54, %v106
    %v108 = vpop.f32.mrb[0].mxu0
    %109 = vdwg.mxu0
    %v110 = vpack.c.bf16 %v107, %v104
    %113 = vrot.lane.b32.xlu0 %v104, 64
    %v114 = vpop.permute.xlu0 %113
    %115 = vrot.lane.b32.xlu0 %v107, 64
    %v116 = vpop.permute.xlu0 %115
    %vm119 = vcmask 523264
    %120 = vst.msk [vmem:[#allocation2] sm:$0xff] %vm119, %v114
    %121 = vst.msk [vmem:[#allocation2 + $0x8] sm:$0xff] %vm119, %v116
    %v122 = vld [vmem:[%s5] sm:$0x1]
    %v124 = vlaneseq
    %v125 = vshrl.u32 %v124, 7
    %v126 = vsub.s32 0, %v125
    %v127 = vrot.slane %v122, %v126
    %v129 = vld [vmem:[%s6] sm:$0x1]
    %v131 = vlaneseq
    %v132 = vshrl.u32 %v131, 7
    %v133 = vsub.s32 0, %v132
    %v134 = vrot.slane %v129, %v133
    %v136 = vld [vmem:[#allocation2] sm:$0xff]
    %v137 = vld [vmem:[#allocation2 + $0x8] sm:$0xff]
    %v138 = vld [vmem:[%s1] sm:$0xf]
    %v139 = vld [vmem:[%s1 + $0x4] sm:$0xf]
    %v140 = vunpack.c.l.bf16 %v138
    %v141 = vunpack.c.l.bf16 %v139
    %v144 = vcombine.high %v136, %v136
    %v146 = vunpack.c.l.s4 1966171168
    %v147 = vunpack.c.0.s8 %v146
    %v148 = vlaneseq
    %v149 = vshrl.u32 %v148, 7
    %v150 = vsub.s32 %v147, %v149
    %v151 = vrot.slane %v136, %v150
    %v153 = vunpack.c.l.s4 1966171168
    %v154 = vunpack.c.0.s8 %v153
    %v155 = vlaneseq
    %v156 = vshrl.u32 %v155, 7
    %v157 = vsub.s32 %v154, %v156
    %v158 = vrot.slane %v144, %v157
    %v159 = vcombine.high %v151, %v151
    %v160 = vcombine.high %v158, %v158
    %v162 = vunpack.c.l.s4 1966171168
    %v163 = vunpack.c.0.s8 %v162
    %v164 = vlaneseq
    %v165 = vshrl.u32 %v164, 7
    %v166 = vsub.s32 %v163, %v165
    %v167 = vrot.slane %v151, %v166
    %v169 = vunpack.c.l.s4 1966171168
    %v170 = vunpack.c.0.s8 %v169
    %v171 = vlaneseq
    %v172 = vshrl.u32 %v171, 7
    %v173 = vsub.s32 %v170, %v172
    %v174 = vrot.slane %v158, %v173
    %v176 = vunpack.c.l.s4 1966171168
    %v177 = vunpack.c.0.s8 %v176
    %v178 = vlaneseq
    %v179 = vshrl.u32 %v178, 7
    %v180 = vsub.s32 %v177, %v179
    %v181 = vrot.slane %v159, %v180
    %v183 = vunpack.c.l.s4 1966171168
    %v184 = vunpack.c.0.s8 %v183
    %v185 = vlaneseq
    %v186 = vshrl.u32 %v185, 7
    %v187 = vsub.s32 %v184, %v186
    %v188 = vrot.slane %v160, %v187
    %v189 = vcombine.high %v167, %v167
    %v190 = vcombine.high %v174, %v174
    %v191 = vcombine.high %v181, %v181
    %v192 = vcombine.high %v188, %v188
    %v193 = vcombine.high %v137, %v137
    %v195 = vunpack.c.l.s4 1966171168
    %v196 = vunpack.c.0.s8 %v195
    %v197 = vlaneseq
    %v198 = vshrl.u32 %v197, 7
    %v199 = vsub.s32 %v196, %v198
    %v200 = vrot.slane %v137, %v199
    %v202 = vunpack.c.l.s4 1966171168
    %v203 = vunpack.c.0.s8 %v202
    %v204 = vlaneseq
    %v205 = vshrl.u32 %v204, 7
    %v206 = vsub.s32 %v203, %v205
    %v207 = vrot.slane %v193, %v206
    %v208 = vcombine.high %v200, %v200
    %v209 = vcombine.high %v207, %v207
    %v211 = vunpack.c.l.s4 1966171168
    %v212 = vunpack.c.0.s8 %v211
    %v213 = vlaneseq
    %v214 = vshrl.u32 %v213, 7
    %v215 = vsub.s32 %v212, %v214
    %v216 = vrot.slane %v200, %v215
    %v218 = vunpack.c.l.s4 1966171168
    %v219 = vunpack.c.0.s8 %v218
    %v220 = vlaneseq
    %v221 = vshrl.u32 %v220, 7
    %v222 = vsub.s32 %v219, %v221
    %v223 = vrot.slane %v207, %v222
    %v225 = vunpack.c.l.s4 1966171168
    %v226 = vunpack.c.0.s8 %v225
    %v227 = vlaneseq
    %v228 = vshrl.u32 %v227, 7
    %v229 = vsub.s32 %v226, %v228
    %v230 = vrot.slane %v208, %v229
    %v232 = vunpack.c.l.s4 1966171168
    %v233 = vunpack.c.0.s8 %v232
    %v234 = vlaneseq
    %v235 = vshrl.u32 %v234, 7
    %v236 = vsub.s32 %v233, %v235
    %v237 = vrot.slane %v209, %v236
    %v238 = vcombine.high %v216, %v216
    %v239 = vcombine.high %v223, %v223
    %v240 = vcombine.high %v230, %v230
    %v241 = vcombine.high %v237, %v237
    %v242 = vlaneseq
    %v243 = vshrl.u32 %v242, 7
    %v244 = vsub.s32 0, %v243
    %v245 = vrot.slane %v167, %v244
    %v246 = vlaneseq
    %v247 = vshrl.u32 %v246, 7
    %v248 = vsub.s32 0, %v247
    %v249 = vrot.slane %v181, %v248
    %v250 = vlaneseq
    %v251 = vshrl.u32 %v250, 7
    %v252 = vsub.s32 0, %v251
    %v253 = vrot.slane %v189, %v252
    %v254 = vlaneseq
    %v255 = vshrl.u32 %v254, 7
    %v256 = vsub.s32 0, %v255
    %v257 = vrot.slane %v191, %v256
    %v258 = vlaneseq
    %v259 = vshrl.u32 %v258, 7
    %v260 = vsub.s32 0, %v259
    %v261 = vrot.slane %v174, %v260
    %v262 = vlaneseq
    %v263 = vshrl.u32 %v262, 7
    %v264 = vsub.s32 0, %v263
    %v265 = vrot.slane %v188, %v264
    %v266 = vlaneseq
    %v267 = vshrl.u32 %v266, 7
    %v268 = vsub.s32 0, %v267
    %v269 = vrot.slane %v190, %v268
    %v270 = vlaneseq
    %v271 = vshrl.u32 %v270, 7
    %v272 = vsub.s32 0, %v271
    %v273 = vrot.slane %v192, %v272
    %v274 = vlaneseq
    %v275 = vshrl.u32 %v274, 7
    %v276 = vsub.s32 0, %v275
    %v277 = vrot.slane %v216, %v276
    %v278 = vlaneseq
    %v279 = vshrl.u32 %v278, 7
    %v280 = vsub.s32 0, %v279
    %v281 = vrot.slane %v230, %v280
    %v282 = vlaneseq
    %v283 = vshrl.u32 %v282, 7
    %v284 = vsub.s32 0, %v283
    %v285 = vrot.slane %v238, %v284
    %v286 = vlaneseq
    %v287 = vshrl.u32 %v286, 7
    %v288 = vsub.s32 0, %v287
    %v289 = vrot.slane %v240, %v288
    %v290 = vlaneseq
    %v291 = vshrl.u32 %v290, 7
    %v292 = vsub.s32 0, %v291
    %v293 = vrot.slane %v223, %v292
    %v294 = vlaneseq
    %v295 = vshrl.u32 %v294, 7
    %v296 = vsub.s32 0, %v295
    %v297 = vrot.slane %v237, %v296
    %v298 = vlaneseq
    %v299 = vshrl.u32 %v298, 7
    %v300 = vsub.s32 0, %v299
    %v301 = vrot.slane %v239, %v300
    %v302 = vlaneseq
    %v303 = vshrl.u32 %v302, 7
    %v304 = vsub.s32 0, %v303
    %v305 = vrot.slane %v241, %v304
    %v322 = vadd.f32 %v245, %v104
    %v323 = vadd.f32 %v245, %v107
    %v324 = vadd.f32 %v249, %v104
    %v325 = vadd.f32 %v249, %v107
    %v326 = vadd.f32 %v253, %v104
    %v327 = vadd.f32 %v253, %v107
    %v328 = vadd.f32 %v257, %v104
    %v329 = vadd.f32 %v257, %v107
    %v330 = vadd.f32 %v261, %v104
    %v331 = vadd.f32 %v261, %v107
    %v332 = vadd.f32 %v265, %v104
    %v333 = vadd.f32 %v265, %v107
    %v334 = vadd.f32 %v269, %v104
    %v335 = vadd.f32 %v269, %v107
    %v336 = vadd.f32 %v273, %v104
    %v337 = vadd.f32 %v273, %v107
    %v338 = vadd.f32 %v277, %v104
    %v339 = vadd.f32 %v277, %v107
    %v340 = vadd.f32 %v281, %v104
    %v341 = vadd.f32 %v281, %v107
    %v342 = vadd.f32 %v285, %v104
    %v343 = vadd.f32 %v285, %v107
    %v344 = vadd.f32 %v289, %v104
    %v345 = vadd.f32 %v289, %v107
    %v346 = vadd.f32 %v293, %v104
    %v347 = vadd.f32 %v293, %v107
    %v348 = vadd.f32 %v297, %v104
    %v349 = vadd.f32 %v297, %v107
    %v350 = vadd.f32 %v301, %v104
    %v351 = vadd.f32 %v301, %v107
    %v352 = vadd.f32 %v305, %v104
    %v353 = vadd.f32 %v305, %v107
    %v354 = vmul.f32 %v322, 0.2
    %v355 = vmul.f32 %v323, 0.2
    %v356 = vmul.f32 %v324, 0.2
    %v357 = vmul.f32 %v325, 0.2
    %v358 = vmul.f32 %v326, 0.2
    %v359 = vmul.f32 %v327, 0.2
    %v360 = vmul.f32 %v328, 0.2
    %v361 = vmul.f32 %v329, 0.2
    %v362 = vmul.f32 %v330, 0.2
    %v363 = vmul.f32 %v331, 0.2
    %v364 = vmul.f32 %v332, 0.2
    %v365 = vmul.f32 %v333, 0.2
    %v366 = vmul.f32 %v334, 0.2
    %v367 = vmul.f32 %v335, 0.2
    %v368 = vmul.f32 %v336, 0.2
    %v369 = vmul.f32 %v337, 0.2
    %v370 = vmul.f32 %v338, 0.2
    %v371 = vmul.f32 %v339, 0.2
    %v372 = vmul.f32 %v340, 0.2
    %v373 = vmul.f32 %v341, 0.2
    %v374 = vmul.f32 %v342, 0.2
    %v375 = vmul.f32 %v343, 0.2
    %v376 = vmul.f32 %v344, 0.2
    %v377 = vmul.f32 %v345, 0.2
    %v378 = vmul.f32 %v346, 0.2
    %v379 = vmul.f32 %v347, 0.2
    %v380 = vmul.f32 %v348, 0.2
    %v381 = vmul.f32 %v349, 0.2
    %v382 = vmul.f32 %v350, 0.2
    %v383 = vmul.f32 %v351, 0.2
    %v384 = vmul.f32 %v352, 0.2
    %v385 = vmul.f32 %v353, 0.2
    %v386 = vmax.f32 %v322, %v354
    %v387 = vmax.f32 %v323, %v355
    %v388 = vmax.f32 %v324, %v356
    %v389 = vmax.f32 %v325, %v357
    %v390 = vmax.f32 %v326, %v358
    %v391 = vmax.f32 %v327, %v359
    %v392 = vmax.f32 %v328, %v360
    %v393 = vmax.f32 %v329, %v361
    %v394 = vmax.f32 %v330, %v362
    %v395 = vmax.f32 %v331, %v363
    %v396 = vmax.f32 %v332, %v364
    %v397 = vmax.f32 %v333, %v365
    %v398 = vmax.f32 %v334, %v366
    %v399 = vmax.f32 %v335, %v367
    %v400 = vmax.f32 %v336, %v368
    %v401 = vmax.f32 %v337, %v369
    %v402 = vmax.f32 %v338, %v370
    %v403 = vmax.f32 %v339, %v371
    %v404 = vmax.f32 %v340, %v372
    %v405 = vmax.f32 %v341, %v373
    %v406 = vmax.f32 %v342, %v374
    %v407 = vmax.f32 %v343, %v375
    %v408 = vmax.f32 %v344, %v376
    %v409 = vmax.f32 %v345, %v377
    %v410 = vmax.f32 %v346, %v378
    %v411 = vmax.f32 %v347, %v379
    %v412 = vmax.f32 %v348, %v380
    %v413 = vmax.f32 %v349, %v381
    %v414 = vmax.f32 %v350, %v382
    %v415 = vmax.f32 %v351, %v383
    %v416 = vmax.f32 %v352, %v384
    %v417 = vmax.f32 %v353, %v385
    %v418 = vmul.f32 %v386, %v127
    %v419 = vmul.f32 %v387, %v127
    %v420 = vmul.f32 %v388, %v127
    %v421 = vmul.f32 %v389, %v127
    %v422 = vmul.f32 %v390, %v127
    %v423 = vmul.f32 %v391, %v127
    %v424 = vmul.f32 %v392, %v127
    %v425 = vmul.f32 %v393, %v127
    %v426 = vmul.f32 %v394, %v127
    %v427 = vmul.f32 %v395, %v127
    %v428 = vmul.f32 %v396, %v127
    %v429 = vmul.f32 %v397, %v127
    %v430 = vmul.f32 %v398, %v127
    %v431 = vmul.f32 %v399, %v127
    %v432 = vmul.f32 %v400, %v127
    %v433 = vmul.f32 %v401, %v127
    %v434 = vmul.f32 %v402, %v127
    %v435 = vmul.f32 %v403, %v127
    %v436 = vmul.f32 %v404, %v127
    %v437 = vmul.f32 %v405, %v127
    %v438 = vmul.f32 %v406, %v127
    %v439 = vmul.f32 %v407, %v127
    %v440 = vmul.f32 %v408, %v127
    %v441 = vmul.f32 %v409, %v127
    %v442 = vmul.f32 %v410, %v127
    %v443 = vmul.f32 %v411, %v127
    %v444 = vmul.f32 %v412, %v127
    %v445 = vmul.f32 %v413, %v127
    %v446 = vmul.f32 %v414, %v127
    %v447 = vmul.f32 %v415, %v127
    %v448 = vmul.f32 %v416, %v127
    %v449 = vmul.f32 %v417, %v127
    %v450 = vsel %vm119, %v418, 0.0
    %451 = vadd.xlane.f32.xlu0 %v450
    %v452 = vpop.xlane.xlu0 %451
    %v453 = vsel %vm119, %v419, 0.0
    %454 = vadd.xlane.f32.xlu0 %v453
    %v455 = vpop.xlane.xlu0 %454
    %v456 = vsel %vm119, %v420, 0.0
    %457 = vadd.xlane.f32.xlu0 %v456
    %v458 = vpop.xlane.xlu0 %457
    %v459 = vsel %vm119, %v421, 0.0
    %460 = vadd.xlane.f32.xlu0 %v459
    %v461 = vpop.xlane.xlu0 %460
    %v462 = vsel %vm119, %v422, 0.0
    %463 = vadd.xlane.f32.xlu0 %v462
    %v464 = vpop.xlane.xlu0 %463
    %v465 = vsel %vm119, %v423, 0.0
    %466 = vadd.xlane.f32.xlu0 %v465
    %v467 = vpop.xlane.xlu0 %466
    %v468 = vsel %vm119, %v424, 0.0
    %469 = vadd.xlane.f32.xlu0 %v468
    %v470 = vpop.xlane.xlu0 %469
    %v471 = vsel %vm119, %v425, 0.0
    %472 = vadd.xlane.f32.xlu0 %v471
    %v473 = vpop.xlane.xlu0 %472
    %v474 = vsel %vm119, %v426, 0.0
    %475 = vadd.xlane.f32.xlu0 %v474
    %v476 = vpop.xlane.xlu0 %475
    %v477 = vsel %vm119, %v427, 0.0
    %478 = vadd.xlane.f32.xlu0 %v477
    %v479 = vpop.xlane.xlu0 %478
    %v480 = vsel %vm119, %v428, 0.0
    %481 = vadd.xlane.f32.xlu0 %v480
    %v482 = vpop.xlane.xlu0 %481
    %v483 = vsel %vm119, %v429, 0.0
    %484 = vadd.xlane.f32.xlu0 %v483
    %v485 = vpop.xlane.xlu0 %484
    %v486 = vsel %vm119, %v430, 0.0
    %487 = vadd.xlane.f32.xlu0 %v486
    %v488 = vpop.xlane.xlu0 %487
    %v489 = vsel %vm119, %v431, 0.0
    %490 = vadd.xlane.f32.xlu0 %v489
    %v491 = vpop.xlane.xlu0 %490
    %v492 = vsel %vm119, %v432, 0.0
    %493 = vadd.xlane.f32.xlu0 %v492
    %v494 = vpop.xlane.xlu0 %493
    %v495 = vsel %vm119, %v433, 0.0
    %496 = vadd.xlane.f32.xlu0 %v495
    %v497 = vpop.xlane.xlu0 %496
    %v498 = vsel %vm119, %v434, 0.0
    %499 = vadd.xlane.f32.xlu0 %v498
    %v500 = vpop.xlane.xlu0 %499
    %v501 = vsel %vm119, %v435, 0.0
    %502 = vadd.xlane.f32.xlu0 %v501
    %v503 = vpop.xlane.xlu0 %502
    %v504 = vsel %vm119, %v436, 0.0
    %505 = vadd.xlane.f32.xlu0 %v504
    %v506 = vpop.xlane.xlu0 %505
    %v507 = vsel %vm119, %v437, 0.0
    %508 = vadd.xlane.f32.xlu0 %v507
    %v509 = vpop.xlane.xlu0 %508
    %v510 = vsel %vm119, %v438, 0.0
    %511 = vadd.xlane.f32.xlu0 %v510
    %v512 = vpop.xlane.xlu0 %511
    %v513 = vsel %vm119, %v439, 0.0
    %514 = vadd.xlane.f32.xlu0 %v513
    %v515 = vpop.xlane.xlu0 %514
    %v516 = vsel %vm119, %v440, 0.0
    %517 = vadd.xlane.f32.xlu0 %v516
    %v518 = vpop.xlane.xlu0 %517
    %v519 = vsel %vm119, %v441, 0.0
    %520 = vadd.xlane.f32.xlu0 %v519
    %v521 = vpop.xlane.xlu0 %520
    %v522 = vsel %vm119, %v442, 0.0
    %523 = vadd.xlane.f32.xlu0 %v522
    %v524 = vpop.xlane.xlu0 %523
    %v525 = vsel %vm119, %v443, 0.0
    %526 = vadd.xlane.f32.xlu0 %v525
    %v527 = vpop.xlane.xlu0 %526
    %v528 = vsel %vm119, %v444, 0.0
    %529 = vadd.xlane.f32.xlu0 %v528
    %v530 = vpop.xlane.xlu0 %529
    %v531 = vsel %vm119, %v445, 0.0
    %532 = vadd.xlane.f32.xlu0 %v531
    %v533 = vpop.xlane.xlu0 %532
    %v534 = vsel %vm119, %v446, 0.0
    %535 = vadd.xlane.f32.xlu0 %v534
    %v536 = vpop.xlane.xlu0 %535
    %v537 = vsel %vm119, %v447, 0.0
    %538 = vadd.xlane.f32.xlu0 %v537
    %v539 = vpop.xlane.xlu0 %538
    %v540 = vsel %vm119, %v448, 0.0
    %541 = vadd.xlane.f32.xlu0 %v540
    %v542 = vpop.xlane.xlu0 %541
    %v543 = vsel %vm119, %v449, 0.0
    %544 = vadd.xlane.f32.xlu0 %v543
    %v545 = vpop.xlane.xlu0 %544
    %v548 = vlaneseq
    %v549 = vshrl.u32 %v548, 7
    %v550 = vsub.s32 0, %v549
    %v551 = vrot.slane %v140, %v550
    %553 = vbcast.lane.b32.xlu0 %v551, 256
    %v554 = vpop.permute.xlu0 %553
    %s556 = sor.u32 256, 8
    %557 = vbcast.lane.b32.xlu0 %v551, %s556
    %v558 = vpop.permute.xlu0 %557
    %v559 = vlaneseq
    %v560 = vshrl.u32 %v559, 7
    %v561 = vsub.s32 1, %v560
    %v562 = vrot.slane %v140, %v561
    %564 = vbcast.lane.b32.xlu0 %v562, 256
    %v565 = vpop.permute.xlu0 %564
    %s567 = sor.u32 256, 8
    %568 = vbcast.lane.b32.xlu0 %v562, %s567
    %v569 = vpop.permute.xlu0 %568
    %v570 = vlaneseq
    %v571 = vshrl.u32 %v570, 7
    %v572 = vsub.s32 2, %v571
    %v573 = vrot.slane %v140, %v572
    %575 = vbcast.lane.b32.xlu0 %v573, 256
    %v576 = vpop.permute.xlu0 %575
    %s578 = sor.u32 256, 8
    %579 = vbcast.lane.b32.xlu0 %v573, %s578
    %v580 = vpop.permute.xlu0 %579
    %v581 = vlaneseq
    %v582 = vshrl.u32 %v581, 7
    %v583 = vsub.s32 3, %v582
    %v584 = vrot.slane %v140, %v583
    %586 = vbcast.lane.b32.xlu0 %v584, 256
    %v587 = vpop.permute.xlu0 %586
    %s589 = sor.u32 256, 8
    %590 = vbcast.lane.b32.xlu0 %v584, %s589
    %v591 = vpop.permute.xlu0 %590
    %v592 = vlaneseq
    %v593 = vshrl.u32 %v592, 7
    %v594 = vsub.s32 4, %v593
    %v595 = vrot.slane %v140, %v594
    %597 = vbcast.lane.b32.xlu0 %v595, 256
    %v598 = vpop.permute.xlu0 %597
    %s600 = sor.u32 256, 8
    %601 = vbcast.lane.b32.xlu0 %v595, %s600
    %v602 = vpop.permute.xlu0 %601
    %v603 = vlaneseq
    %v604 = vshrl.u32 %v603, 7
    %v605 = vsub.s32 5, %v604
    %v606 = vrot.slane %v140, %v605
    %608 = vbcast.lane.b32.xlu0 %v606, 256
    %v609 = vpop.permute.xlu0 %608
    %s611 = sor.u32 256, 8
    %612 = vbcast.lane.b32.xlu0 %v606, %s611
    %v613 = vpop.permute.xlu0 %612
    %v614 = vlaneseq
    %v615 = vshrl.u32 %v614, 7
    %v616 = vsub.s32 6, %v615
    %v617 = vrot.slane %v140, %v616
    %619 = vbcast.lane.b32.xlu0 %v617, 256
    %v620 = vpop.permute.xlu0 %619
    %s622 = sor.u32 256, 8
    %623 = vbcast.lane.b32.xlu0 %v617, %s622
    %v624 = vpop.permute.xlu0 %623
    %v625 = vlaneseq
    %v626 = vshrl.u32 %v625, 7
    %v627 = vsub.s32 7, %v626
    %v628 = vrot.slane %v140, %v627
    %630 = vbcast.lane.b32.xlu0 %v628, 256
    %v631 = vpop.permute.xlu0 %630
    %s633 = sor.u32 256, 8
    %634 = vbcast.lane.b32.xlu0 %v628, %s633
    %v635 = vpop.permute.xlu0 %634
    %v636 = vlaneseq
    %v637 = vshrl.u32 %v636, 7
    %v638 = vsub.s32 0, %v637
    %v639 = vrot.slane %v141, %v638
    %641 = vbcast.lane.b32.xlu0 %v639, 256
    %v642 = vpop.permute.xlu0 %641
    %s644 = sor.u32 256, 8
    %645 = vbcast.lane.b32.xlu0 %v639, %s644
    %v646 = vpop.permute.xlu0 %645
    %v647 = vlaneseq
    %v648 = vshrl.u32 %v647, 7
    %v649 = vsub.s32 1, %v648
    %v650 = vrot.slane %v141, %v649
    %652 = vbcast.lane.b32.xlu0 %v650, 256
    %v653 = vpop.permute.xlu0 %652
    %s655 = sor.u32 256, 8
    %656 = vbcast.lane.b32.xlu0 %v650, %s655
    %v657 = vpop.permute.xlu0 %656
    %v658 = vlaneseq
    %v659 = vshrl.u32 %v658, 7
    %v660 = vsub.s32 2, %v659
    %v661 = vrot.slane %v141, %v660
    %663 = vbcast.lane.b32.xlu0 %v661, 256
    %v664 = vpop.permute.xlu0 %663
    %s666 = sor.u32 256, 8
    %667 = vbcast.lane.b32.xlu0 %v661, %s666
    %v668 = vpop.permute.xlu0 %667
    %v669 = vlaneseq
    %v670 = vshrl.u32 %v669, 7
    %v671 = vsub.s32 3, %v670
    %v672 = vrot.slane %v141, %v671
    %674 = vbcast.lane.b32.xlu0 %v672, 256
    %v675 = vpop.permute.xlu0 %674
    %s677 = sor.u32 256, 8
    %678 = vbcast.lane.b32.xlu0 %v672, %s677
    %v679 = vpop.permute.xlu0 %678
    %v680 = vlaneseq
    %v681 = vshrl.u32 %v680, 7
    %v682 = vsub.s32 4, %v681
    %v683 = vrot.slane %v141, %v682
    %685 = vbcast.lane.b32.xlu0 %v683, 256
    %v686 = vpop.permute.xlu0 %685
    %s688 = sor.u32 256, 8
    %689 = vbcast.lane.b32.xlu0 %v683, %s688
    %v690 = vpop.permute.xlu0 %689
    %v691 = vlaneseq
    %v692 = vshrl.u32 %v691, 7
    %v693 = vsub.s32 5, %v692
    %v694 = vrot.slane %v141, %v693
    %696 = vbcast.lane.b32.xlu0 %v694, 256
    %v697 = vpop.permute.xlu0 %696
    %s699 = sor.u32 256, 8
    %700 = vbcast.lane.b32.xlu0 %v694, %s699
    %v701 = vpop.permute.xlu0 %700
    %v702 = vlaneseq
    %v703 = vshrl.u32 %v702, 7
    %v704 = vsub.s32 6, %v703
    %v705 = vrot.slane %v141, %v704
    %707 = vbcast.lane.b32.xlu0 %v705, 256
    %v708 = vpop.permute.xlu0 %707
    %s710 = sor.u32 256, 8
    %711 = vbcast.lane.b32.xlu0 %v705, %s710
    %v712 = vpop.permute.xlu0 %711
    %v713 = vlaneseq
    %v714 = vshrl.u32 %v713, 7
    %v715 = vsub.s32 7, %v714
    %v716 = vrot.slane %v141, %v715
    %718 = vbcast.lane.b32.xlu0 %v716, 256
    %v719 = vpop.permute.xlu0 %718
    %s721 = sor.u32 256, 8
    %722 = vbcast.lane.b32.xlu0 %v716, %s721
    %v723 = vpop.permute.xlu0 %722
    %v756 = vadd.f32 %v452, %v554
    %v757 = vadd.f32 %v455, %v558
    %v758 = vadd.f32 %v458, %v565
    %v759 = vadd.f32 %v461, %v569
    %v760 = vadd.f32 %v464, %v576
    %v761 = vadd.f32 %v467, %v580
    %v762 = vadd.f32 %v470, %v587
    %v763 = vadd.f32 %v473, %v591
    %v764 = vadd.f32 %v476, %v598
    %v765 = vadd.f32 %v479, %v602
    %v766 = vadd.f32 %v482, %v609
    %v767 = vadd.f32 %v485, %v613
    %v768 = vadd.f32 %v488, %v620
    %v769 = vadd.f32 %v491, %v624
    %v770 = vadd.f32 %v494, %v631
    %v771 = vadd.f32 %v497, %v635
    %v772 = vadd.f32 %v500, %v642
    %v773 = vadd.f32 %v503, %v646
    %v774 = vadd.f32 %v506, %v653
    %v775 = vadd.f32 %v509, %v657
    %v776 = vadd.f32 %v512, %v664
    %v777 = vadd.f32 %v515, %v668
    %v778 = vadd.f32 %v518, %v675
    %v779 = vadd.f32 %v521, %v679
    %v780 = vadd.f32 %v524, %v686
    %v781 = vadd.f32 %v527, %v690
    %v782 = vadd.f32 %v530, %v697
    %v783 = vadd.f32 %v533, %v701
    %v784 = vadd.f32 %v536, %v708
    %v785 = vadd.f32 %v539, %v712
    %v786 = vadd.f32 %v542, %v719
    %v787 = vadd.f32 %v545, %v723
    %820 = vset.pattern.permute.xlu0 0
    %821 = vperm.xlu0 %820, %v756
    %v822 = vpop.permute.xlu0 %821
    %823 = vset.pattern.permute.xlu0 0
    %824 = vperm.xlu0 %823, %v757
    %v825 = vpop.permute.xlu0 %824
    %826 = vset.pattern.permute.xlu0 0
    %827 = vperm.xlu0 %826, %v758
    %v828 = vpop.permute.xlu0 %827
    %829 = vset.pattern.permute.xlu0 0
    %830 = vperm.xlu0 %829, %v759
    %v831 = vpop.permute.xlu0 %830
    %832 = vset.pattern.permute.xlu0 0
    %833 = vperm.xlu0 %832, %v760
    %v834 = vpop.permute.xlu0 %833
    %835 = vset.pattern.permute.xlu0 0
    %836 = vperm.xlu0 %835, %v761
    %v837 = vpop.permute.xlu0 %836
    %838 = vset.pattern.permute.xlu0 0
    %839 = vperm.xlu0 %838, %v762
    %v840 = vpop.permute.xlu0 %839
    %841 = vset.pattern.permute.xlu0 0
    %842 = vperm.xlu0 %841, %v763
    %v843 = vpop.permute.xlu0 %842
    %844 = vset.pattern.permute.xlu0 0
    %845 = vperm.xlu0 %844, %v764
    %v846 = vpop.permute.xlu0 %845
    %847 = vset.pattern.permute.xlu0 0
    %848 = vperm.xlu0 %847, %v765
    %v849 = vpop.permute.xlu0 %848
    %850 = vset.pattern.permute.xlu0 0
    %851 = vperm.xlu0 %850, %v766
    %v852 = vpop.permute.xlu0 %851
    %853 = vset.pattern.permute.xlu0 0
    %854 = vperm.xlu0 %853, %v767
    %v855 = vpop.permute.xlu0 %854
    %856 = vset.pattern.permute.xlu0 0
    %857 = vperm.xlu0 %856, %v768
    %v858 = vpop.permute.xlu0 %857
    %859 = vset.pattern.permute.xlu0 0
    %860 = vperm.xlu0 %859, %v769
    %v861 = vpop.permute.xlu0 %860
    %862 = vset.pattern.permute.xlu0 0
    %863 = vperm.xlu0 %862, %v770
    %v864 = vpop.permute.xlu0 %863
    %865 = vset.pattern.permute.xlu0 0
    %866 = vperm.xlu0 %865, %v771
    %v867 = vpop.permute.xlu0 %866
    %868 = vset.pattern.permute.xlu0 0
    %869 = vperm.xlu0 %868, %v772
    %v870 = vpop.permute.xlu0 %869
    %871 = vset.pattern.permute.xlu0 0
    %872 = vperm.xlu0 %871, %v773
    %v873 = vpop.permute.xlu0 %872
    %874 = vset.pattern.permute.xlu0 0
    %875 = vperm.xlu0 %874, %v774
    %v876 = vpop.permute.xlu0 %875
    %877 = vset.pattern.permute.xlu0 0
    %878 = vperm.xlu0 %877, %v775
    %v879 = vpop.permute.xlu0 %878
    %880 = vset.pattern.permute.xlu0 0
    %881 = vperm.xlu0 %880, %v776
    %v882 = vpop.permute.xlu0 %881
    %883 = vset.pattern.permute.xlu0 0
    %884 = vperm.xlu0 %883, %v777
    %v885 = vpop.permute.xlu0 %884
    %886 = vset.pattern.permute.xlu0 0
    %887 = vperm.xlu0 %886, %v778
    %v888 = vpop.permute.xlu0 %887
    %889 = vset.pattern.permute.xlu0 0
    %890 = vperm.xlu0 %889, %v779
    %v891 = vpop.permute.xlu0 %890
    %892 = vset.pattern.permute.xlu0 0
    %893 = vperm.xlu0 %892, %v780
    %v894 = vpop.permute.xlu0 %893
    %895 = vset.pattern.permute.xlu0 0
    %896 = vperm.xlu0 %895, %v781
    %v897 = vpop.permute.xlu0 %896
    %898 = vset.pattern.permute.xlu0 0
    %899 = vperm.xlu0 %898, %v782
    %v900 = vpop.permute.xlu0 %899
    %901 = vset.pattern.permute.xlu0 0
    %902 = vperm.xlu0 %901, %v783
    %v903 = vpop.permute.xlu0 %902
    %904 = vset.pattern.permute.xlu0 0
    %905 = vperm.xlu0 %904, %v784
    %v906 = vpop.permute.xlu0 %905
    %907 = vset.pattern.permute.xlu0 0
    %908 = vperm.xlu0 %907, %v785
    %v909 = vpop.permute.xlu0 %908
    %910 = vset.pattern.permute.xlu0 0
    %911 = vperm.xlu0 %910, %v786
    %v912 = vpop.permute.xlu0 %911
    %913 = vset.pattern.permute.xlu0 0
    %914 = vperm.xlu0 %913, %v787
    %v915 = vpop.permute.xlu0 %914
    %v916 = vlaneseq
    %v917 = vand.u32 %v916, 127
    %v918 = vlaneseq
    %v919 = vshrl.u32 %v918, 7
    %v920 = vsub.s32 %v917, %v919
    %v921 = vrot.slane %v822, %v920
    %v922 = vadd.s32 %v917, 4294967288
    %v923 = vlaneseq
    %v924 = vshrl.u32 %v923, 7
    %v925 = vsub.s32 %v922, %v924
    %v926 = vrot.slane %v825, %v925
    %vm927 = vcmask 130112
    %v928 = vsel %vm927, %v926, %v921
    %v929 = vlaneseq
    %v930 = vshrl.u32 %v929, 7
    %v931 = vsub.s32 %v917, %v930
    %v932 = vrot.slane %v828, %v931
    %v933 = vlaneseq
    %v934 = vshrl.u32 %v933, 7
    %v935 = vsub.s32 %v922, %v934
    %v936 = vrot.slane %v831, %v935
    %v937 = vsel %vm927, %v936, %v932
    %v938 = vlaneseq
    %v939 = vshrl.u32 %v938, 7
    %v940 = vsub.s32 %v917, %v939
    %v941 = vrot.slane %v834, %v940
    %v942 = vlaneseq
    %v943 = vshrl.u32 %v942, 7
    %v944 = vsub.s32 %v922, %v943
    %v945 = vrot.slane %v837, %v944
    %v946 = vsel %vm927, %v945, %v941
    %v947 = vlaneseq
    %v948 = vshrl.u32 %v947, 7
    %v949 = vsub.s32 %v917, %v948
    %v950 = vrot.slane %v840, %v949
    %v951 = vlaneseq
    %v952 = vshrl.u32 %v951, 7
    %v953 = vsub.s32 %v922, %v952
    %v954 = vrot.slane %v843, %v953
    %v955 = vsel %vm927, %v954, %v950
    %v956 = vlaneseq
    %v957 = vshrl.u32 %v956, 7
    %v958 = vsub.s32 %v917, %v957
    %v959 = vrot.slane %v846, %v958
    %v960 = vlaneseq
    %v961 = vshrl.u32 %v960, 7
    %v962 = vsub.s32 %v922, %v961
    %v963 = vrot.slane %v849, %v962
    %v964 = vsel %vm927, %v963, %v959
    %v965 = vlaneseq
    %v966 = vshrl.u32 %v965, 7
    %v967 = vsub.s32 %v917, %v966
    %v968 = vrot.slane %v852, %v967
    %v969 = vlaneseq
    %v970 = vshrl.u32 %v969, 7
    %v971 = vsub.s32 %v922, %v970
    %v972 = vrot.slane %v855, %v971
    %v973 = vsel %vm927, %v972, %v968
    %v974 = vlaneseq
    %v975 = vshrl.u32 %v974, 7
    %v976 = vsub.s32 %v917, %v975
    %v977 = vrot.slane %v858, %v976
    %v978 = vlaneseq
    %v979 = vshrl.u32 %v978, 7
    %v980 = vsub.s32 %v922, %v979
    %v981 = vrot.slane %v861, %v980
    %v982 = vsel %vm927, %v981, %v977
    %v983 = vlaneseq
    %v984 = vshrl.u32 %v983, 7
    %v985 = vsub.s32 %v917, %v984
    %v986 = vrot.slane %v864, %v985
    %v987 = vlaneseq
    %v988 = vshrl.u32 %v987, 7
    %v989 = vsub.s32 %v922, %v988
    %v990 = vrot.slane %v867, %v989
    %v991 = vsel %vm927, %v990, %v986
    %v992 = vlaneseq
    %v993 = vshrl.u32 %v992, 7
    %v994 = vsub.s32 %v917, %v993
    %v995 = vrot.slane %v870, %v994
    %v996 = vlaneseq
    %v997 = vshrl.u32 %v996, 7
    %v998 = vsub.s32 %v922, %v997
    %v999 = vrot.slane %v873, %v998
    %v1000 = vsel %vm927, %v999, %v995
    %v1001 = vlaneseq
    %v1002 = vshrl.u32 %v1001, 7
    %v1003 = vsub.s32 %v917, %v1002
    %v1004 = vrot.slane %v876, %v1003
    %v1005 = vlaneseq
    %v1006 = vshrl.u32 %v1005, 7
    %v1007 = vsub.s32 %v922, %v1006
    %v1008 = vrot.slane %v879, %v1007
    %v1009 = vsel %vm927, %v1008, %v1004
    %v1010 = vlaneseq
    %v1011 = vshrl.u32 %v1010, 7
    %v1012 = vsub.s32 %v917, %v1011
    %v1013 = vrot.slane %v882, %v1012
    %v1014 = vlaneseq
    %v1015 = vshrl.u32 %v1014, 7
    %v1016 = vsub.s32 %v922, %v1015
    %v1017 = vrot.slane %v885, %v1016
    %v1018 = vsel %vm927, %v1017, %v1013
    %v1019 = vlaneseq
    %v1020 = vshrl.u32 %v1019, 7
    %v1021 = vsub.s32 %v917, %v1020
    %v1022 = vrot.slane %v888, %v1021
    %v1023 = vlaneseq
    %v1024 = vshrl.u32 %v1023, 7
    %v1025 = vsub.s32 %v922, %v1024
    %v1026 = vrot.slane %v891, %v1025
    %v1027 = vsel %vm927, %v1026, %v1022
    %v1028 = vlaneseq
    %v1029 = vshrl.u32 %v1028, 7
    %v1030 = vsub.s32 %v917, %v1029
    %v1031 = vrot.slane %v894, %v1030
    %v1032 = vlaneseq
    %v1033 = vshrl.u32 %v1032, 7
    %v1034 = vsub.s32 %v922, %v1033
    %v1035 = vrot.slane %v897, %v1034
    %v1036 = vsel %vm927, %v1035, %v1031
    %v1037 = vlaneseq
    %v1038 = vshrl.u32 %v1037, 7
    %v1039 = vsub.s32 %v917, %v1038
    %v1040 = vrot.slane %v900, %v1039
    %v1041 = vlaneseq
    %v1042 = vshrl.u32 %v1041, 7
    %v1043 = vsub.s32 %v922, %v1042
    %v1044 = vrot.slane %v903, %v1043
    %v1045 = vsel %vm927, %v1044, %v1040
    %v1046 = vlaneseq
    %v1047 = vshrl.u32 %v1046, 7
    %v1048 = vsub.s32 %v917, %v1047
    %v1049 = vrot.slane %v906, %v1048
    %v1050 = vlaneseq
    %v1051 = vshrl.u32 %v1050, 7
    %v1052 = vsub.s32 %v922, %v1051
    %v1053 = vrot.slane %v909, %v1052
    %v1054 = vsel %vm927, %v1053, %v1049
    %v1055 = vlaneseq
    %v1056 = vshrl.u32 %v1055, 7
    %v1057 = vsub.s32 %v917, %v1056
    %v1058 = vrot.slane %v912, %v1057
    %v1059 = vlaneseq
    %v1060 = vshrl.u32 %v1059, 7
    %v1061 = vsub.s32 %v922, %v1060
    %v1062 = vrot.slane %v915, %v1061
    %v1063 = vsel %vm927, %v1062, %v1058
    %vm1064 = vcmask 1041409
    %v1065 = vsel %vm1064, %v937, %v928
    %vm1066 = vcmask 1042434
    %v1067 = vsel %vm1066, %v946, %v1065
    %vm1068 = vcmask 1043459
    %v1069 = vsel %vm1068, %v955, %v1067
    %vm1070 = vcmask 1044484
    %v1071 = vsel %vm1070, %v964, %v1069
    %vm1072 = vcmask 1045509
    %v1073 = vsel %vm1072, %v973, %v1071
    %vm1074 = vcmask 1046534
    %v1075 = vsel %vm1074, %v982, %v1073
    %vm1076 = vcmask 1047559
    %v1077 = vsel %vm1076, %v991, %v1075
    %v1078 = vsel %vm1064, %v1009, %v1000
    %v1079 = vsel %vm1066, %v1018, %v1078
    %v1080 = vsel %vm1068, %v1027, %v1079
    %v1081 = vsel %vm1070, %v1036, %v1080
    %v1082 = vsel %vm1072, %v1045, %v1081
    %v1083 = vsel %vm1074, %v1054, %v1082
    %v1084 = vsel %vm1076, %v1063, %v1083
    %vm1087 = vcmask 130048
    %v1088 = vsel %vm1087, %v1077, -inf
    %1089 = vmax.xlane.f32.xlu0 %v1088
    %v1090 = vpop.xlane.xlu0 %1089
    %v1091 = vsel %vm1087, %v1084, -inf
    %1092 = vmax.xlane.f32.xlu0 %v1091
    %v1093 = vpop.xlane.xlu0 %1092
    %v1096 = vlaneseq
    %v1097 = vshrl.u32 %v1096, 7
    %v1098 = vsub.s32 0, %v1097
    %v1099 = vrot.slane %v1090, %v1098
    %v1100 = vlaneseq
    %v1101 = vshrl.u32 %v1100, 7
    %v1102 = vsub.s32 1, %v1101
    %v1103 = vrot.slane %v1090, %v1102
    %v1104 = vlaneseq
    %v1105 = vshrl.u32 %v1104, 7
    %v1106 = vsub.s32 2, %v1105
    %v1107 = vrot.slane %v1090, %v1106
    %v1108 = vlaneseq
    %v1109 = vshrl.u32 %v1108, 7
    %v1110 = vsub.s32 3, %v1109
    %v1111 = vrot.slane %v1090, %v1110
    %v1112 = vlaneseq
    %v1113 = vshrl.u32 %v1112, 7
    %v1114 = vsub.s32 4, %v1113
    %v1115 = vrot.slane %v1090, %v1114
    %v1116 = vlaneseq
    %v1117 = vshrl.u32 %v1116, 7
    %v1118 = vsub.s32 5, %v1117
    %v1119 = vrot.slane %v1090, %v1118
    %v1120 = vlaneseq
    %v1121 = vshrl.u32 %v1120, 7
    %v1122 = vsub.s32 6, %v1121
    %v1123 = vrot.slane %v1090, %v1122
    %v1124 = vlaneseq
    %v1125 = vshrl.u32 %v1124, 7
    %v1126 = vsub.s32 7, %v1125
    %v1127 = vrot.slane %v1090, %v1126
    %v1128 = vlaneseq
    %v1129 = vshrl.u32 %v1128, 7
    %v1130 = vsub.s32 0, %v1129
    %v1131 = vrot.slane %v1093, %v1130
    %v1132 = vlaneseq
    %v1133 = vshrl.u32 %v1132, 7
    %v1134 = vsub.s32 1, %v1133
    %v1135 = vrot.slane %v1093, %v1134
    %v1136 = vlaneseq
    %v1137 = vshrl.u32 %v1136, 7
    %v1138 = vsub.s32 2, %v1137
    %v1139 = vrot.slane %v1093, %v1138
    %v1140 = vlaneseq
    %v1141 = vshrl.u32 %v1140, 7
    %v1142 = vsub.s32 3, %v1141
    %v1143 = vrot.slane %v1093, %v1142
    %v1144 = vlaneseq
    %v1145 = vshrl.u32 %v1144, 7
    %v1146 = vsub.s32 4, %v1145
    %v1147 = vrot.slane %v1093, %v1146
    %v1148 = vlaneseq
    %v1149 = vshrl.u32 %v1148, 7
    %v1150 = vsub.s32 5, %v1149
    %v1151 = vrot.slane %v1093, %v1150
    %v1152 = vlaneseq
    %v1153 = vshrl.u32 %v1152, 7
    %v1154 = vsub.s32 6, %v1153
    %v1155 = vrot.slane %v1093, %v1154
    %v1156 = vlaneseq
    %v1157 = vshrl.u32 %v1156, 7
    %v1158 = vsub.s32 7, %v1157
    %v1159 = vrot.slane %v1093, %v1158
    %v1176 = vsub.f32 %v756, %v1099
    %v1177 = vsub.f32 %v757, %v1099
    %v1178 = vsub.f32 %v758, %v1103
    %v1179 = vsub.f32 %v759, %v1103
    %v1180 = vsub.f32 %v760, %v1107
    %v1181 = vsub.f32 %v761, %v1107
    %v1182 = vsub.f32 %v762, %v1111
    %v1183 = vsub.f32 %v763, %v1111
    %v1184 = vsub.f32 %v764, %v1115
    %v1185 = vsub.f32 %v765, %v1115
    %v1186 = vsub.f32 %v766, %v1119
    %v1187 = vsub.f32 %v767, %v1119
    %v1188 = vsub.f32 %v768, %v1123
    %v1189 = vsub.f32 %v769, %v1123
    %v1190 = vsub.f32 %v770, %v1127
    %v1191 = vsub.f32 %v771, %v1127
    %v1192 = vsub.f32 %v772, %v1131
    %v1193 = vsub.f32 %v773, %v1131
    %v1194 = vsub.f32 %v774, %v1135
    %v1195 = vsub.f32 %v775, %v1135
    %v1196 = vsub.f32 %v776, %v1139
    %v1197 = vsub.f32 %v777, %v1139
    %v1198 = vsub.f32 %v778, %v1143
    %v1199 = vsub.f32 %v779, %v1143
    %v1200 = vsub.f32 %v780, %v1147
    %v1201 = vsub.f32 %v781, %v1147
    %v1202 = vsub.f32 %v782, %v1151
    %v1203 = vsub.f32 %v783, %v1151
    %v1204 = vsub.f32 %v784, %v1155
    %v1205 = vsub.f32 %v785, %v1155
    %v1206 = vsub.f32 %v786, %v1159
    %v1207 = vsub.f32 %v787, %v1159
    %v1208 = vmul.f32 %v1176, 1.442695
    %v1209 = vpow.pop %v1208
    %v1210 = vmul.f32 %v1177, 1.442695
    %v1211 = vpow.pop %v1210
    %v1212 = vmul.f32 %v1178, 1.442695
    %v1213 = vpow.pop %v1212
    %v1214 = vmul.f32 %v1179, 1.442695
    %v1215 = vpow.pop %v1214
    %v1216 = vmul.f32 %v1180, 1.442695
    %v1217 = vpow.pop %v1216
    %v1218 = vmul.f32 %v1181, 1.442695
    %v1219 = vpow.pop %v1218
    %v1220 = vmul.f32 %v1182, 1.442695
    %v1221 = vpow.pop %v1220
    %v1222 = vmul.f32 %v1183, 1.442695
    %v1223 = vpow.pop %v1222
    %v1224 = vmul.f32 %v1184, 1.442695
    %v1225 = vpow.pop %v1224
    %v1226 = vmul.f32 %v1185, 1.442695
    %v1227 = vpow.pop %v1226
    %v1228 = vmul.f32 %v1186, 1.442695
    %v1229 = vpow.pop %v1228
    %v1230 = vmul.f32 %v1187, 1.442695
    %v1231 = vpow.pop %v1230
    %v1232 = vmul.f32 %v1188, 1.442695
    %v1233 = vpow.pop %v1232
    %v1234 = vmul.f32 %v1189, 1.442695
    %v1235 = vpow.pop %v1234
    %v1236 = vmul.f32 %v1190, 1.442695
    %v1237 = vpow.pop %v1236
    %v1238 = vmul.f32 %v1191, 1.442695
    %v1239 = vpow.pop %v1238
    %v1240 = vmul.f32 %v1192, 1.442695
    %v1241 = vpow.pop %v1240
    %v1242 = vmul.f32 %v1193, 1.442695
    %v1243 = vpow.pop %v1242
    %v1244 = vmul.f32 %v1194, 1.442695
    %v1245 = vpow.pop %v1244
    %v1246 = vmul.f32 %v1195, 1.442695
    %v1247 = vpow.pop %v1246
    %v1248 = vmul.f32 %v1196, 1.442695
    %v1249 = vpow.pop %v1248
    %v1250 = vmul.f32 %v1197, 1.442695
    %v1251 = vpow.pop %v1250
    %v1252 = vmul.f32 %v1198, 1.442695
    %v1253 = vpow.pop %v1252
    %v1254 = vmul.f32 %v1199, 1.442695
    %v1255 = vpow.pop %v1254
    %v1256 = vmul.f32 %v1200, 1.442695
    %v1257 = vpow.pop %v1256
    %v1258 = vmul.f32 %v1201, 1.442695
    %v1259 = vpow.pop %v1258
    %v1260 = vmul.f32 %v1202, 1.442695
    %v1261 = vpow.pop %v1260
    %v1262 = vmul.f32 %v1203, 1.442695
    %v1263 = vpow.pop %v1262
    %v1264 = vmul.f32 %v1204, 1.442695
    %v1265 = vpow.pop %v1264
    %v1266 = vmul.f32 %v1205, 1.442695
    %v1267 = vpow.pop %v1266
    %v1268 = vmul.f32 %v1206, 1.442695
    %v1269 = vpow.pop %v1268
    %v1270 = vmul.f32 %v1207, 1.442695
    %v1271 = vpow.pop %v1270
    %1304 = vset.pattern.permute.xlu0 0
    %1305 = vperm.xlu0 %1304, %v1209
    %v1306 = vpop.permute.xlu0 %1305
    %1307 = vset.pattern.permute.xlu0 0
    %1308 = vperm.xlu0 %1307, %v1211
    %v1309 = vpop.permute.xlu0 %1308
    %1310 = vset.pattern.permute.xlu0 0
    %1311 = vperm.xlu0 %1310, %v1213
    %v1312 = vpop.permute.xlu0 %1311
    %1313 = vset.pattern.permute.xlu0 0
    %1314 = vperm.xlu0 %1313, %v1215
    %v1315 = vpop.permute.xlu0 %1314
    %1316 = vset.pattern.permute.xlu0 0
    %1317 = vperm.xlu0 %1316, %v1217
    %v1318 = vpop.permute.xlu0 %1317
    %1319 = vset.pattern.permute.xlu0 0
    %1320 = vperm.xlu0 %1319, %v1219
    %v1321 = vpop.permute.xlu0 %1320
    %1322 = vset.pattern.permute.xlu0 0
    %1323 = vperm.xlu0 %1322, %v1221
    %v1324 = vpop.permute.xlu0 %1323
    %1325 = vset.pattern.permute.xlu0 0
    %1326 = vperm.xlu0 %1325, %v1223
    %v1327 = vpop.permute.xlu0 %1326
    %1328 = vset.pattern.permute.xlu0 0
    %1329 = vperm.xlu0 %1328, %v1225
    %v1330 = vpop.permute.xlu0 %1329
    %1331 = vset.pattern.permute.xlu0 0
    %1332 = vperm.xlu0 %1331, %v1227
    %v1333 = vpop.permute.xlu0 %1332
    %1334 = vset.pattern.permute.xlu0 0
    %1335 = vperm.xlu0 %1334, %v1229
    %v1336 = vpop.permute.xlu0 %1335
    %1337 = vset.pattern.permute.xlu0 0
    %1338 = vperm.xlu0 %1337, %v1231
    %v1339 = vpop.permute.xlu0 %1338
    %1340 = vset.pattern.permute.xlu0 0
    %1341 = vperm.xlu0 %1340, %v1233
    %v1342 = vpop.permute.xlu0 %1341
    %1343 = vset.pattern.permute.xlu0 0
    %1344 = vperm.xlu0 %1343, %v1235
    %v1345 = vpop.permute.xlu0 %1344
    %1346 = vset.pattern.permute.xlu0 0
    %1347 = vperm.xlu0 %1346, %v1237
    %v1348 = vpop.permute.xlu0 %1347
    %1349 = vset.pattern.permute.xlu0 0
    %1350 = vperm.xlu0 %1349, %v1239
    %v1351 = vpop.permute.xlu0 %1350
    %1352 = vset.pattern.permute.xlu0 0
    %1353 = vperm.xlu0 %1352, %v1241
    %v1354 = vpop.permute.xlu0 %1353
    %1355 = vset.pattern.permute.xlu0 0
    %1356 = vperm.xlu0 %1355, %v1243
    %v1357 = vpop.permute.xlu0 %1356
    %1358 = vset.pattern.permute.xlu0 0
    %1359 = vperm.xlu0 %1358, %v1245
    %v1360 = vpop.permute.xlu0 %1359
    %1361 = vset.pattern.permute.xlu0 0
    %1362 = vperm.xlu0 %1361, %v1247
    %v1363 = vpop.permute.xlu0 %1362
    %1364 = vset.pattern.permute.xlu0 0
    %1365 = vperm.xlu0 %1364, %v1249
    %v1366 = vpop.permute.xlu0 %1365
    %1367 = vset.pattern.permute.xlu0 0
    %1368 = vperm.xlu0 %1367, %v1251
    %v1369 = vpop.permute.xlu0 %1368
    %1370 = vset.pattern.permute.xlu0 0
    %1371 = vperm.xlu0 %1370, %v1253
    %v1372 = vpop.permute.xlu0 %1371
    %1373 = vset.pattern.permute.xlu0 0
    %1374 = vperm.xlu0 %1373, %v1255
    %v1375 = vpop.permute.xlu0 %1374
    %1376 = vset.pattern.permute.xlu0 0
    %1377 = vperm.xlu0 %1376, %v1257
    %v1378 = vpop.permute.xlu0 %1377
    %1379 = vset.pattern.permute.xlu0 0
    %1380 = vperm.xlu0 %1379, %v1259
    %v1381 = vpop.permute.xlu0 %1380
    %1382 = vset.pattern.permute.xlu0 0
    %1383 = vperm.xlu0 %1382, %v1261
    %v1384 = vpop.permute.xlu0 %1383
    %1385 = vset.pattern.permute.xlu0 0
    %1386 = vperm.xlu0 %1385, %v1263
    %v1387 = vpop.permute.xlu0 %1386
    %1388 = vset.pattern.permute.xlu0 0
    %1389 = vperm.xlu0 %1388, %v1265
    %v1390 = vpop.permute.xlu0 %1389
    %1391 = vset.pattern.permute.xlu0 0
    %1392 = vperm.xlu0 %1391, %v1267
    %v1393 = vpop.permute.xlu0 %1392
    %1394 = vset.pattern.permute.xlu0 0
    %1395 = vperm.xlu0 %1394, %v1269
    %v1396 = vpop.permute.xlu0 %1395
    %1397 = vset.pattern.permute.xlu0 0
    %1398 = vperm.xlu0 %1397, %v1271
    %v1399 = vpop.permute.xlu0 %1398
    %v1400 = vlaneseq
    %v1401 = vshrl.u32 %v1400, 7
    %v1402 = vsub.s32 %v917, %v1401
    %v1403 = vrot.slane %v1306, %v1402
    %v1404 = vlaneseq
    %v1405 = vshrl.u32 %v1404, 7
    %v1406 = vsub.s32 %v922, %v1405
    %v1407 = vrot.slane %v1309, %v1406
    %v1408 = vsel %vm927, %v1407, %v1403
    %v1409 = vlaneseq
    %v1410 = vshrl.u32 %v1409, 7
    %v1411 = vsub.s32 %v917, %v1410
    %v1412 = vrot.slane %v1312, %v1411
    %v1413 = vlaneseq
    %v1414 = vshrl.u32 %v1413, 7
    %v1415 = vsub.s32 %v922, %v1414
    %v1416 = vrot.slane %v1315, %v1415
    %v1417 = vsel %vm927, %v1416, %v1412
    %v1418 = vlaneseq
    %v1419 = vshrl.u32 %v1418, 7
    %v1420 = vsub.s32 %v917, %v1419
    %v1421 = vrot.slane %v1318, %v1420
    %v1422 = vlaneseq
    %v1423 = vshrl.u32 %v1422, 7
    %v1424 = vsub.s32 %v922, %v1423
    %v1425 = vrot.slane %v1321, %v1424
    %v1426 = vsel %vm927, %v1425, %v1421
    %v1427 = vlaneseq
    %v1428 = vshrl.u32 %v1427, 7
    %v1429 = vsub.s32 %v917, %v1428
    %v1430 = vrot.slane %v1324, %v1429
    %v1431 = vlaneseq
    %v1432 = vshrl.u32 %v1431, 7
    %v1433 = vsub.s32 %v922, %v1432
    %v1434 = vrot.slane %v1327, %v1433
    %v1435 = vsel %vm927, %v1434, %v1430
    %v1436 = vlaneseq
    %v1437 = vshrl.u32 %v1436, 7
    %v1438 = vsub.s32 %v917, %v1437
    %v1439 = vrot.slane %v1330, %v1438
    %v1440 = vlaneseq
    %v1441 = vshrl.u32 %v1440, 7
    %v1442 = vsub.s32 %v922, %v1441
    %v1443 = vrot.slane %v1333, %v1442
    %v1444 = vsel %vm927, %v1443, %v1439
    %v1445 = vlaneseq
    %v1446 = vshrl.u32 %v1445, 7
    %v1447 = vsub.s32 %v917, %v1446
    %v1448 = vrot.slane %v1336, %v1447
    %v1449 = vlaneseq
    %v1450 = vshrl.u32 %v1449, 7
    %v1451 = vsub.s32 %v922, %v1450
    %v1452 = vrot.slane %v1339, %v1451
    %v1453 = vsel %vm927, %v1452, %v1448
    %v1454 = vlaneseq
    %v1455 = vshrl.u32 %v1454, 7
    %v1456 = vsub.s32 %v917, %v1455
    %v1457 = vrot.slane %v1342, %v1456
    %v1458 = vlaneseq
    %v1459 = vshrl.u32 %v1458, 7
    %v1460 = vsub.s32 %v922, %v1459
    %v1461 = vrot.slane %v1345, %v1460
    %v1462 = vsel %vm927, %v1461, %v1457
    %v1463 = vlaneseq
    %v1464 = vshrl.u32 %v1463, 7
    %v1465 = vsub.s32 %v917, %v1464
    %v1466 = vrot.slane %v1348, %v1465
    %v1467 = vlaneseq
    %v1468 = vshrl.u32 %v1467, 7
    %v1469 = vsub.s32 %v922, %v1468
    %v1470 = vrot.slane %v1351, %v1469
    %v1471 = vsel %vm927, %v1470, %v1466
    %v1472 = vlaneseq
    %v1473 = vshrl.u32 %v1472, 7
    %v1474 = vsub.s32 %v917, %v1473
    %v1475 = vrot.slane %v1354, %v1474
    %v1476 = vlaneseq
    %v1477 = vshrl.u32 %v1476, 7
    %v1478 = vsub.s32 %v922, %v1477
    %v1479 = vrot.slane %v1357, %v1478
    %v1480 = vsel %vm927, %v1479, %v1475
    %v1481 = vlaneseq
    %v1482 = vshrl.u32 %v1481, 7
    %v1483 = vsub.s32 %v917, %v1482
    %v1484 = vrot.slane %v1360, %v1483
    %v1485 = vlaneseq
    %v1486 = vshrl.u32 %v1485, 7
    %v1487 = vsub.s32 %v922, %v1486
    %v1488 = vrot.slane %v1363, %v1487
    %v1489 = vsel %vm927, %v1488, %v1484
    %v1490 = vlaneseq
    %v1491 = vshrl.u32 %v1490, 7
    %v1492 = vsub.s32 %v917, %v1491
    %v1493 = vrot.slane %v1366, %v1492
    %v1494 = vlaneseq
    %v1495 = vshrl.u32 %v1494, 7
    %v1496 = vsub.s32 %v922, %v1495
    %v1497 = vrot.slane %v1369, %v1496
    %v1498 = vsel %vm927, %v1497, %v1493
    %v1499 = vlaneseq
    %v1500 = vshrl.u32 %v1499, 7
    %v1501 = vsub.s32 %v917, %v1500
    %v1502 = vrot.slane %v1372, %v1501
    %v1503 = vlaneseq
    %v1504 = vshrl.u32 %v1503, 7
    %v1505 = vsub.s32 %v922, %v1504
    %v1506 = vrot.slane %v1375, %v1505
    %v1507 = vsel %vm927, %v1506, %v1502
    %v1508 = vlaneseq
    %v1509 = vshrl.u32 %v1508, 7
    %v1510 = vsub.s32 %v917, %v1509
    %v1511 = vrot.slane %v1378, %v1510
    %v1512 = vlaneseq
    %v1513 = vshrl.u32 %v1512, 7
    %v1514 = vsub.s32 %v922, %v1513
    %v1515 = vrot.slane %v1381, %v1514
    %v1516 = vsel %vm927, %v1515, %v1511
    %v1517 = vlaneseq
    %v1518 = vshrl.u32 %v1517, 7
    %v1519 = vsub.s32 %v917, %v1518
    %v1520 = vrot.slane %v1384, %v1519
    %v1521 = vlaneseq
    %v1522 = vshrl.u32 %v1521, 7
    %v1523 = vsub.s32 %v922, %v1522
    %v1524 = vrot.slane %v1387, %v1523
    %v1525 = vsel %vm927, %v1524, %v1520
    %v1526 = vlaneseq
    %v1527 = vshrl.u32 %v1526, 7
    %v1528 = vsub.s32 %v917, %v1527
    %v1529 = vrot.slane %v1390, %v1528
    %v1530 = vlaneseq
    %v1531 = vshrl.u32 %v1530, 7
    %v1532 = vsub.s32 %v922, %v1531
    %v1533 = vrot.slane %v1393, %v1532
    %v1534 = vsel %vm927, %v1533, %v1529
    %v1535 = vlaneseq
    %v1536 = vshrl.u32 %v1535, 7
    %v1537 = vsub.s32 %v917, %v1536
    %v1538 = vrot.slane %v1396, %v1537
    %v1539 = vlaneseq
    %v1540 = vshrl.u32 %v1539, 7
    %v1541 = vsub.s32 %v922, %v1540
    %v1542 = vrot.slane %v1399, %v1541
    %v1543 = vsel %vm927, %v1542, %v1538
    %v1544 = vsel %vm1064, %v1417, %v1408
    %v1545 = vsel %vm1066, %v1426, %v1544
    %v1546 = vsel %vm1068, %v1435, %v1545
    %v1547 = vsel %vm1070, %v1444, %v1546
    %v1548 = vsel %vm1072, %v1453, %v1547
    %v1549 = vsel %vm1074, %v1462, %v1548
    %v1550 = vsel %vm1076, %v1471, %v1549
    %v1551 = vsel %vm1064, %v1489, %v1480
    %v1552 = vsel %vm1066, %v1498, %v1551
    %v1553 = vsel %vm1068, %v1507, %v1552
    %v1554 = vsel %vm1070, %v1516, %v1553
    %v1555 = vsel %vm1072, %v1525, %v1554
    %v1556 = vsel %vm1074, %v1534, %v1555
    %v1557 = vsel %vm1076, %v1543, %v1556
    %v1560 = vsel %vm1087, %v1550, 0.0
    %1561 = vadd.xlane.f32.xlu0 %v1560
    %v1562 = vpop.xlane.xlu0 %1561
    %v1563 = vsel %vm1087, %v1557, 0.0
    %1564 = vadd.xlane.f32.xlu0 %v1563
    %v1565 = vpop.xlane.xlu0 %1564
    %v1566 = vrcp.pop %v1562
    %v1567 = vrcp.pop %v1565
    %v1570 = vlaneseq
    %v1571 = vshrl.u32 %v1570, 7
    %v1572 = vsub.s32 0, %v1571
    %v1573 = vrot.slane %v1566, %v1572
    %v1574 = vlaneseq
    %v1575 = vshrl.u32 %v1574, 7
    %v1576 = vsub.s32 1, %v1575
    %v1577 = vrot.slane %v1566, %v1576
    %v1578 = vlaneseq
    %v1579 = vshrl.u32 %v1578, 7
    %v1580 = vsub.s32 2, %v1579
    %v1581 = vrot.slane %v1566, %v1580
    %v1582 = vlaneseq
    %v1583 = vshrl.u32 %v1582, 7
    %v1584 = vsub.s32 3, %v1583
    %v1585 = vrot.slane %v1566, %v1584
    %v1586 = vlaneseq
    %v1587 = vshrl.u32 %v1586, 7
    %v1588 = vsub.s32 4, %v1587
    %v1589 = vrot.slane %v1566, %v1588
    %v1590 = vlaneseq
    %v1591 = vshrl.u32 %v1590, 7
    %v1592 = vsub.s32 5, %v1591
    %v1593 = vrot.slane %v1566, %v1592
    %v1594 = vlaneseq
    %v1595 = vshrl.u32 %v1594, 7
    %v1596 = vsub.s32 6, %v1595
    %v1597 = vrot.slane %v1566, %v1596
    %v1598 = vlaneseq
    %v1599 = vshrl.u32 %v1598, 7
    %v1600 = vsub.s32 7, %v1599
    %v1601 = vrot.slane %v1566, %v1600
    %v1602 = vlaneseq
    %v1603 = vshrl.u32 %v1602, 7
    %v1604 = vsub.s32 0, %v1603
    %v1605 = vrot.slane %v1567, %v1604
    %v1606 = vlaneseq
    %v1607 = vshrl.u32 %v1606, 7
    %v1608 = vsub.s32 1, %v1607
    %v1609 = vrot.slane %v1567, %v1608
    %v1610 = vlaneseq
    %v1611 = vshrl.u32 %v1610, 7
    %v1612 = vsub.s32 2, %v1611
    %v1613 = vrot.slane %v1567, %v1612
    %v1614 = vlaneseq
    %v1615 = vshrl.u32 %v1614, 7
    %v1616 = vsub.s32 3, %v1615
    %v1617 = vrot.slane %v1567, %v1616
    %v1618 = vlaneseq
    %v1619 = vshrl.u32 %v1618, 7
    %v1620 = vsub.s32 4, %v1619
    %v1621 = vrot.slane %v1567, %v1620
    %v1622 = vlaneseq
    %v1623 = vshrl.u32 %v1622, 7
    %v1624 = vsub.s32 5, %v1623
    %v1625 = vrot.slane %v1567, %v1624
    %v1626 = vlaneseq
    %v1627 = vshrl.u32 %v1626, 7
    %v1628 = vsub.s32 6, %v1627
    %v1629 = vrot.slane %v1567, %v1628
    %v1630 = vlaneseq
    %v1631 = vshrl.u32 %v1630, 7
    %v1632 = vsub.s32 7, %v1631
    %v1633 = vrot.slane %v1567, %v1632
    %v1650 = vmul.f32 %v1209, %v1573
    %v1651 = vmul.f32 %v1211, %v1573
    %v1652 = vmul.f32 %v1213, %v1577
    %v1653 = vmul.f32 %v1215, %v1577
    %v1654 = vmul.f32 %v1217, %v1581
    %v1655 = vmul.f32 %v1219, %v1581
    %v1656 = vmul.f32 %v1221, %v1585
    %v1657 = vmul.f32 %v1223, %v1585
    %v1658 = vmul.f32 %v1225, %v1589
    %v1659 = vmul.f32 %v1227, %v1589
    %v1660 = vmul.f32 %v1229, %v1593
    %v1661 = vmul.f32 %v1231, %v1593
    %v1662 = vmul.f32 %v1233, %v1597
    %v1663 = vmul.f32 %v1235, %v1597
    %v1664 = vmul.f32 %v1237, %v1601
    %v1665 = vmul.f32 %v1239, %v1601
    %v1666 = vmul.f32 %v1241, %v1605
    %v1667 = vmul.f32 %v1243, %v1605
    %v1668 = vmul.f32 %v1245, %v1609
    %v1669 = vmul.f32 %v1247, %v1609
    %v1670 = vmul.f32 %v1249, %v1613
    %v1671 = vmul.f32 %v1251, %v1613
    %v1672 = vmul.f32 %v1253, %v1617
    %v1673 = vmul.f32 %v1255, %v1617
    %v1674 = vmul.f32 %v1257, %v1621
    %v1675 = vmul.f32 %v1259, %v1621
    %v1676 = vmul.f32 %v1261, %v1625
    %v1677 = vmul.f32 %v1263, %v1625
    %v1678 = vmul.f32 %v1265, %v1629
    %v1679 = vmul.f32 %v1267, %v1629
    %v1680 = vmul.f32 %v1269, %v1633
    %v1681 = vmul.f32 %v1271, %v1633
    %v1682 = vpack.c.bf16 %v1651, %v1650
    %v1683 = vpack.c.bf16 %v1653, %v1652
    %v1684 = vpack.c.bf16 %v1655, %v1654
    %v1685 = vpack.c.bf16 %v1657, %v1656
    %v1686 = vpack.c.bf16 %v1659, %v1658
    %v1687 = vpack.c.bf16 %v1661, %v1660
    %v1688 = vpack.c.bf16 %v1663, %v1662
    %v1689 = vpack.c.bf16 %v1665, %v1664
    %v1690 = vpack.c.bf16 %v1667, %v1666
    %v1691 = vpack.c.bf16 %v1669, %v1668
    %v1692 = vpack.c.bf16 %v1671, %v1670
    %v1693 = vpack.c.bf16 %v1673, %v1672
    %v1694 = vpack.c.bf16 %v1675, %v1674
    %v1695 = vpack.c.bf16 %v1677, %v1676
    %v1696 = vpack.c.bf16 %v1679, %v1678
    %v1697 = vpack.c.bf16 %v1681, %v1680
    %v1714 = vunpack.c.l.b16 %v1682
    %v1715 = vunpack.c.h.b16 %v1682
    %v1716 = vunpack.c.l.b16 %v1683
    %v1717 = vunpack.c.h.b16 %v1683
    %v1718 = vunpack.c.l.b16 %v1684
    %v1719 = vunpack.c.h.b16 %v1684
    %v1720 = vunpack.c.l.b16 %v1685
    %v1721 = vunpack.c.h.b16 %v1685
    %v1722 = vunpack.c.l.b16 %v1686
    %v1723 = vunpack.c.h.b16 %v1686
    %v1724 = vunpack.c.l.b16 %v1687
    %v1725 = vunpack.c.h.b16 %v1687
    %v1726 = vunpack.c.l.b16 %v1688
    %v1727 = vunpack.c.h.b16 %v1688
    %v1728 = vunpack.c.l.b16 %v1689
    %v1729 = vunpack.c.h.b16 %v1689
    %v1730 = vunpack.c.l.b16 %v1690
    %v1731 = vunpack.c.h.b16 %v1690
    %v1732 = vunpack.c.l.b16 %v1691
    %v1733 = vunpack.c.h.b16 %v1691
    %v1734 = vunpack.c.l.b16 %v1692
    %v1735 = vunpack.c.h.b16 %v1692
    %v1736 = vunpack.c.l.b16 %v1693
    %v1737 = vunpack.c.h.b16 %v1693
    %v1738 = vunpack.c.l.b16 %v1694
    %v1739 = vunpack.c.h.b16 %v1694
    %v1740 = vunpack.c.l.b16 %v1695
    %v1741 = vunpack.c.h.b16 %v1695
    %v1742 = vunpack.c.l.b16 %v1696
    %v1743 = vunpack.c.h.b16 %v1696
    %v1744 = vunpack.c.l.b16 %v1697
    %v1745 = vunpack.c.h.b16 %v1697
    %1746 = vset.pattern.permute.xlu0 0
    %1747 = vperm.xlu0 %1746, %v1714
    %v1748 = vpop.permute.xlu0 %1747
    %1749 = vset.pattern.permute.xlu0 0
    %1750 = vperm.xlu0 %1749, %v1715
    %v1751 = vpop.permute.xlu0 %1750
    %1752 = vset.pattern.permute.xlu0 0
    %1753 = vperm.xlu0 %1752, %v1716
    %v1754 = vpop.permute.xlu0 %1753
    %1755 = vset.pattern.permute.xlu0 0
    %1756 = vperm.xlu0 %1755, %v1717
    %v1757 = vpop.permute.xlu0 %1756
    %1758 = vset.pattern.permute.xlu0 0
    %1759 = vperm.xlu0 %1758, %v1718
    %v1760 = vpop.permute.xlu0 %1759
    %1761 = vset.pattern.permute.xlu0 0
    %1762 = vperm.xlu0 %1761, %v1719
    %v1763 = vpop.permute.xlu0 %1762
    %1764 = vset.pattern.permute.xlu0 0
    %1765 = vperm.xlu0 %1764, %v1720
    %v1766 = vpop.permute.xlu0 %1765
    %1767 = vset.pattern.permute.xlu0 0
    %1768 = vperm.xlu0 %1767, %v1721
    %v1769 = vpop.permute.xlu0 %1768
    %1770 = vset.pattern.permute.xlu0 0
    %1771 = vperm.xlu0 %1770, %v1722
    %v1772 = vpop.permute.xlu0 %1771
    %1773 = vset.pattern.permute.xlu0 0
    %1774 = vperm.xlu0 %1773, %v1723
    %v1775 = vpop.permute.xlu0 %1774
    %1776 = vset.pattern.permute.xlu0 0
    %1777 = vperm.xlu0 %1776, %v1724
    %v1778 = vpop.permute.xlu0 %1777
    %1779 = vset.pattern.permute.xlu0 0
    %1780 = vperm.xlu0 %1779, %v1725
    %v1781 = vpop.permute.xlu0 %1780
    %1782 = vset.pattern.permute.xlu0 0
    %1783 = vperm.xlu0 %1782, %v1726
    %v1784 = vpop.permute.xlu0 %1783
    %1785 = vset.pattern.permute.xlu0 0
    %1786 = vperm.xlu0 %1785, %v1727
    %v1787 = vpop.permute.xlu0 %1786
    %1788 = vset.pattern.permute.xlu0 0
    %1789 = vperm.xlu0 %1788, %v1728
    %v1790 = vpop.permute.xlu0 %1789
    %1791 = vset.pattern.permute.xlu0 0
    %1792 = vperm.xlu0 %1791, %v1729
    %v1793 = vpop.permute.xlu0 %1792
    %1794 = vset.pattern.permute.xlu0 0
    %1795 = vperm.xlu0 %1794, %v1730
    %v1796 = vpop.permute.xlu0 %1795
    %1797 = vset.pattern.permute.xlu0 0
    %1798 = vperm.xlu0 %1797, %v1731
    %v1799 = vpop.permute.xlu0 %1798
    %1800 = vset.pattern.permute.xlu0 0
    %1801 = vperm.xlu0 %1800, %v1732
    %v1802 = vpop.permute.xlu0 %1801
    %1803 = vset.pattern.permute.xlu0 0
    %1804 = vperm.xlu0 %1803, %v1733
    %v1805 = vpop.permute.xlu0 %1804
    %1806 = vset.pattern.permute.xlu0 0
    %1807 = vperm.xlu0 %1806, %v1734
    %v1808 = vpop.permute.xlu0 %1807
    %1809 = vset.pattern.permute.xlu0 0
    %1810 = vperm.xlu0 %1809, %v1735
    %v1811 = vpop.permute.xlu0 %1810
    %1812 = vset.pattern.permute.xlu0 0
    %1813 = vperm.xlu0 %1812, %v1736
    %v1814 = vpop.permute.xlu0 %1813
    %1815 = vset.pattern.permute.xlu0 0
    %1816 = vperm.xlu0 %1815, %v1737
    %v1817 = vpop.permute.xlu0 %1816
    %1818 = vset.pattern.permute.xlu0 0
    %1819 = vperm.xlu0 %1818, %v1738
    %v1820 = vpop.permute.xlu0 %1819
    %1821 = vset.pattern.permute.xlu0 0
    %1822 = vperm.xlu0 %1821, %v1739
    %v1823 = vpop.permute.xlu0 %1822
    %1824 = vset.pattern.permute.xlu0 0
    %1825 = vperm.xlu0 %1824, %v1740
    %v1826 = vpop.permute.xlu0 %1825
    %1827 = vset.pattern.permute.xlu0 0
    %1828 = vperm.xlu0 %1827, %v1741
    %v1829 = vpop.permute.xlu0 %1828
    %1830 = vset.pattern.permute.xlu0 0
    %1831 = vperm.xlu0 %1830, %v1742
    %v1832 = vpop.permute.xlu0 %1831
    %1833 = vset.pattern.permute.xlu0 0
    %1834 = vperm.xlu0 %1833, %v1743
    %v1835 = vpop.permute.xlu0 %1834
    %1836 = vset.pattern.permute.xlu0 0
    %1837 = vperm.xlu0 %1836, %v1744
    %v1838 = vpop.permute.xlu0 %1837
    %1839 = vset.pattern.permute.xlu0 0
    %1840 = vperm.xlu0 %1839, %v1745
    %v1841 = vpop.permute.xlu0 %1840
    %v1842 = vlaneseq
    %v1843 = vshrl.u32 %v1842, 7
    %v1844 = vsub.s32 %v917, %v1843
    %v1845 = vrot.slane %v1748, %v1844
    %v1846 = vlaneseq
    %v1847 = vshrl.u32 %v1846, 7
    %v1848 = vsub.s32 %v922, %v1847
    %v1849 = vrot.slane %v1751, %v1848
    %v1850 = vsel %vm927, %v1849, %v1845
    %v1851 = vlaneseq
    %v1852 = vshrl.u32 %v1851, 7
    %v1853 = vsub.s32 %v917, %v1852
    %v1854 = vrot.slane %v1754, %v1853
    %v1855 = vlaneseq
    %v1856 = vshrl.u32 %v1855, 7
    %v1857 = vsub.s32 %v922, %v1856
    %v1858 = vrot.slane %v1757, %v1857
    %v1859 = vsel %vm927, %v1858, %v1854
    %v1860 = vlaneseq
    %v1861 = vshrl.u32 %v1860, 7
    %v1862 = vsub.s32 %v917, %v1861
    %v1863 = vrot.slane %v1760, %v1862
    %v1864 = vlaneseq
    %v1865 = vshrl.u32 %v1864, 7
    %v1866 = vsub.s32 %v922, %v1865
    %v1867 = vrot.slane %v1763, %v1866
    %v1868 = vsel %vm927, %v1867, %v1863
    %v1869 = vlaneseq
    %v1870 = vshrl.u32 %v1869, 7
    %v1871 = vsub.s32 %v917, %v1870
    %v1872 = vrot.slane %v1766, %v1871
    %v1873 = vlaneseq
    %v1874 = vshrl.u32 %v1873, 7
    %v1875 = vsub.s32 %v922, %v1874
    %v1876 = vrot.slane %v1769, %v1875
    %v1877 = vsel %vm927, %v1876, %v1872
    %v1878 = vlaneseq
    %v1879 = vshrl.u32 %v1878, 7
    %v1880 = vsub.s32 %v917, %v1879
    %v1881 = vrot.slane %v1772, %v1880
    %v1882 = vlaneseq
    %v1883 = vshrl.u32 %v1882, 7
    %v1884 = vsub.s32 %v922, %v1883
    %v1885 = vrot.slane %v1775, %v1884
    %v1886 = vsel %vm927, %v1885, %v1881
    %v1887 = vlaneseq
    %v1888 = vshrl.u32 %v1887, 7
    %v1889 = vsub.s32 %v917, %v1888
    %v1890 = vrot.slane %v1778, %v1889
    %v1891 = vlaneseq
    %v1892 = vshrl.u32 %v1891, 7
    %v1893 = vsub.s32 %v922, %v1892
    %v1894 = vrot.slane %v1781, %v1893
    %v1895 = vsel %vm927, %v1894, %v1890
    %v1896 = vlaneseq
    %v1897 = vshrl.u32 %v1896, 7
    %v1898 = vsub.s32 %v917, %v1897
    %v1899 = vrot.slane %v1784, %v1898
    %v1900 = vlaneseq
    %v1901 = vshrl.u32 %v1900, 7
    %v1902 = vsub.s32 %v922, %v1901
    %v1903 = vrot.slane %v1787, %v1902
    %v1904 = vsel %vm927, %v1903, %v1899
    %v1905 = vlaneseq
    %v1906 = vshrl.u32 %v1905, 7
    %v1907 = vsub.s32 %v917, %v1906
    %v1908 = vrot.slane %v1790, %v1907
    %v1909 = vlaneseq
    %v1910 = vshrl.u32 %v1909, 7
    %v1911 = vsub.s32 %v922, %v1910
    %v1912 = vrot.slane %v1793, %v1911
    %v1913 = vsel %vm927, %v1912, %v1908
    %v1914 = vlaneseq
    %v1915 = vshrl.u32 %v1914, 7
    %v1916 = vsub.s32 %v917, %v1915
    %v1917 = vrot.slane %v1796, %v1916
    %v1918 = vlaneseq
    %v1919 = vshrl.u32 %v1918, 7
    %v1920 = vsub.s32 %v922, %v1919
    %v1921 = vrot.slane %v1799, %v1920
    %v1922 = vsel %vm927, %v1921, %v1917
    %v1923 = vlaneseq
    %v1924 = vshrl.u32 %v1923, 7
    %v1925 = vsub.s32 %v917, %v1924
    %v1926 = vrot.slane %v1802, %v1925
    %v1927 = vlaneseq
    %v1928 = vshrl.u32 %v1927, 7
    %v1929 = vsub.s32 %v922, %v1928
    %v1930 = vrot.slane %v1805, %v1929
    %v1931 = vsel %vm927, %v1930, %v1926
    %v1932 = vlaneseq
    %v1933 = vshrl.u32 %v1932, 7
    %v1934 = vsub.s32 %v917, %v1933
    %v1935 = vrot.slane %v1808, %v1934
    %v1936 = vlaneseq
    %v1937 = vshrl.u32 %v1936, 7
    %v1938 = vsub.s32 %v922, %v1937
    %v1939 = vrot.slane %v1811, %v1938
    %v1940 = vsel %vm927, %v1939, %v1935
    %v1941 = vlaneseq
    %v1942 = vshrl.u32 %v1941, 7
    %v1943 = vsub.s32 %v917, %v1942
    %v1944 = vrot.slane %v1814, %v1943
    %v1945 = vlaneseq
    %v1946 = vshrl.u32 %v1945, 7
    %v1947 = vsub.s32 %v922, %v1946
    %v1948 = vrot.slane %v1817, %v1947
    %v1949 = vsel %vm927, %v1948, %v1944
    %v1950 = vlaneseq
    %v1951 = vshrl.u32 %v1950, 7
    %v1952 = vsub.s32 %v917, %v1951
    %v1953 = vrot.slane %v1820, %v1952
    %v1954 = vlaneseq
    %v1955 = vshrl.u32 %v1954, 7
    %v1956 = vsub.s32 %v922, %v1955
    %v1957 = vrot.slane %v1823, %v1956
    %v1958 = vsel %vm927, %v1957, %v1953
    %v1959 = vlaneseq
    %v1960 = vshrl.u32 %v1959, 7
    %v1961 = vsub.s32 %v917, %v1960
    %v1962 = vrot.slane %v1826, %v1961
    %v1963 = vlaneseq
    %v1964 = vshrl.u32 %v1963, 7
    %v1965 = vsub.s32 %v922, %v1964
    %v1966 = vrot.slane %v1829, %v1965
    %v1967 = vsel %vm927, %v1966, %v1962
    %v1968 = vlaneseq
    %v1969 = vshrl.u32 %v1968, 7
    %v1970 = vsub.s32 %v917, %v1969
    %v1971 = vrot.slane %v1832, %v1970
    %v1972 = vlaneseq
    %v1973 = vshrl.u32 %v1972, 7
    %v1974 = vsub.s32 %v922, %v1973
    %v1975 = vrot.slane %v1835, %v1974
    %v1976 = vsel %vm927, %v1975, %v1971
    %v1977 = vlaneseq
    %v1978 = vshrl.u32 %v1977, 7
    %v1979 = vsub.s32 %v917, %v1978
    %v1980 = vrot.slane %v1838, %v1979
    %v1981 = vlaneseq
    %v1982 = vshrl.u32 %v1981, 7
    %v1983 = vsub.s32 %v922, %v1982
    %v1984 = vrot.slane %v1841, %v1983
    %v1985 = vsel %vm927, %v1984, %v1980
    %v1986 = vsel %vm1064, %v1859, %v1850
    %v1987 = vsel %vm1066, %v1868, %v1986
    %v1988 = vsel %vm1068, %v1877, %v1987
    %v1989 = vsel %vm1070, %v1886, %v1988
    %v1990 = vsel %vm1072, %v1895, %v1989
    %v1991 = vsel %vm1074, %v1904, %v1990
    %v1992 = vsel %vm1076, %v1913, %v1991
    %v1993 = vsel %vm1064, %v1931, %v1922
    %v1994 = vsel %vm1066, %v1940, %v1993
    %v1995 = vsel %vm1068, %v1949, %v1994
    %v1996 = vsel %vm1070, %v1958, %v1995
    %v1997 = vsel %vm1072, %v1967, %v1996
    %v1998 = vsel %vm1074, %v1976, %v1997
    %v1999 = vsel %vm1076, %v1985, %v1998
    %v2000 = vpack.c.b16 %v1999, %v1992
    %v2002 = vsel %vm1087, %v2000, 0
    %2004 = vmatprep.subr.bf16.mxu0 0
    %2005 = vmatpush1.bf16.msra.mxu0 %v110
    %2006 = vmatprep.subr.bf16.mxu0 0
    %2007 = vmatpush1.bf16.msra.mxu0 0
    %2008 = vmatprep.subr.bf16.mxu0 0
    %2009 = vmatpush1.bf16.msra.mxu0 0
    %2010 = vmatprep.subr.bf16.mxu0 0
    %2011 = vmatpush1.bf16.msra.mxu0 0
    %2012 = vmatprep.subr.bf16.mxu0 0
    %2013 = vmatpush1.bf16.msra.mxu0 0
    %2014 = vmatprep.subr.bf16.mxu0 0
    %2015 = vmatpush1.bf16.msra.mxu0 0
    %2016 = vmatprep.subr.bf16.mxu0 0
    %2017 = vmatpush1.bf16.msra.mxu0 0
    %2018 = vmatprep.subr.bf16.mxu0 0
    %2019 = vmatpush1.bf16.msra.mxu0 0
    %2020 = vmatprep.subr.bf16.mxu0 0
    %2021 = vmatpush1.bf16.msra.mxu0 0
    %2022 = vmatprep.subr.bf16.mxu0 0
    %2023 = vmatpush1.bf16.msra.mxu0 0
    %2024 = vmatprep.subr.bf16.mxu0 0
    %2025 = vmatpush1.bf16.msra.mxu0 0
    %2026 = vmatprep.subr.bf16.mxu0 0
    %2027 = vmatpush1.bf16.msra.mxu0 0
    %2028 = vmatprep.subr.bf16.mxu0 0
    %2029 = vmatpush1.bf16.msra.mxu0 0
    %2030 = vmatprep.subr.bf16.mxu0 0
    %2031 = vmatpush1.bf16.msra.mxu0 0
    %2032 = vmatprep.subr.bf16.mxu0 0
    %2033 = vmatpush1.bf16.msra.mxu0 0
    %2034 = vmatprep.subr.bf16.mxu0 0
    %2035 = vmatpush1.bf16.msra.mxu0 0
    %2036 = vmatprep.mubr.bf16.mxu0 0
    %2037 = vmatmul.mubr.bf16.gmra.mrb[0].mxu0 %v2002
    %v2038 = vpop.f32.mrb[0].mxu0
    %v2039 = vadd.f32 %v134, %v2038
    %v2040 = vpop.f32.mrb[0].mxu0
    %v2041 = vpop.f32.mrb[0].mxu0
    %v2042 = vadd.f32 %v134, %v2041
    %v2043 = vpop.f32.mrb[0].mxu0
    %2044 = vdwg.mxu0
    %2045 = vst.msk [vmem:[#allocation3] sm:$0xff] %vm119, %v2039
    %2046 = vst.msk [vmem:[#allocation3 + $0x8] sm:$0xff] %vm119, %v2042
    %v2047 = vld [vmem:[#allocation3] sm:$0xff]
    %v2048 = vld [vmem:[#allocation3 + $0x8] sm:$0xff]
    %v2049 = vpack.c.bf16 %v2048, %v2047
    %v2050 = vld [vmem:[%s7] sm:$0xf]
    %v2051 = vld [vmem:[%s7 + $0x4] sm:$0xf]
    %v2052 = vld [vmem:[%s7 + $0x8] sm:$0xf]
    %v2053 = vld [vmem:[%s7 + $0xc] sm:$0xf]
    %v2054 = vld [vmem:[%s7 + $0x10] sm:$0xf]
    %v2055 = vld [vmem:[%s7 + $0x14] sm:$0xf]
    %v2056 = vld [vmem:[%s7 + $0x18] sm:$0xf]
    %v2057 = vld [vmem:[%s7 + $0x1c] sm:$0xf]
    %v2058 = vld [vmem:[%s8] sm:$0x1]
    %v2060 = vlaneseq
    %v2061 = vshrl.u32 %v2060, 7
    %v2062 = vsub.s32 0, %v2061
    %v2063 = vrot.slane %v2058, %v2062
    %v2073 = vunpack.c.l.b16 %v2050
    %v2074 = vunpack.c.l.b16 %v2051
    %v2075 = vunpack.c.l.b16 %v2052
    %v2076 = vunpack.c.l.b16 %v2053
    %v2077 = vunpack.c.l.b16 %v2054
    %v2078 = vunpack.c.l.b16 %v2055
    %v2079 = vunpack.c.l.b16 %v2056
    %v2080 = vunpack.c.l.b16 %v2057
    %v2081 = vpack.c.b16 %v2074, %v2073
    %v2082 = vpack.c.b16 %v2076, %v2075
    %v2083 = vpack.c.b16 %v2078, %v2077
    %v2084 = vpack.c.b16 %v2080, %v2079
    %v2090 = vsel %vm119, %v2049, 0
    %2092 = vmatprep.subr.bf16.mxu0 0
    %2093 = vmatpush1.bf16.msra.mxu0 %v2081
    %2094 = vmatprep.subr.bf16.mxu0 0
    %2095 = vmatpush1.bf16.msra.mxu0 %v2082
    %2096 = vmatprep.subr.bf16.mxu0 0
    %2097 = vmatpush1.bf16.msra.mxu0 %v2083
    %2098 = vmatprep.subr.bf16.mxu0 0
    %2099 = vmatpush1.bf16.msra.mxu0 %v2084
    %2100 = vmatprep.subr.bf16.mxu0 0
    %2101 = vmatpush1.bf16.msra.mxu0 0
    %2102 = vmatprep.subr.bf16.mxu0 0
    %2103 = vmatpush1.bf16.msra.mxu0 0
    %2104 = vmatprep.subr.bf16.mxu0 0
    %2105 = vmatpush1.bf16.msra.mxu0 0
    %2106 = vmatprep.subr.bf16.mxu0 0
    %2107 = vmatpush1.bf16.msra.mxu0 0
    %2108 = vmatprep.subr.bf16.mxu0 0
    %2109 = vmatpush1.bf16.msra.mxu0 0
    %2110 = vmatprep.subr.bf16.mxu0 0
    %2111 = vmatpush1.bf16.msra.mxu0 0
    %2112 = vmatprep.subr.bf16.mxu0 0
    %2113 = vmatpush1.bf16.msra.mxu0 0
    %2114 = vmatprep.subr.bf16.mxu0 0
    %2115 = vmatpush1.bf16.msra.mxu0 0
    %2116 = vmatprep.subr.bf16.mxu0 0
    %2117 = vmatpush1.bf16.msra.mxu0 0
    %2118 = vmatprep.subr.bf16.mxu0 0
    %2119 = vmatpush1.bf16.msra.mxu0 0
    %2120 = vmatprep.subr.bf16.mxu0 0
    %2121 = vmatpush1.bf16.msra.mxu0 0
    %2122 = vmatprep.subr.bf16.mxu0 0
    %2123 = vmatpush1.bf16.msra.mxu0 0
    %2124 = vmatprep.mubr.bf16.mxu0 0
    %2125 = vmatmul.mubr.bf16.gmra.mrb[0].mxu0 %v2090
    %v2126 = vpop.f32.mrb[0].mxu0
    %v2127 = vadd.f32 %v2063, %v2126
    %v2128 = vpop.f32.mrb[0].mxu0
    %v2129 = vpop.f32.mrb[0].mxu0
    %v2130 = vadd.f32 %v2063, %v2129
    %v2131 = vpop.f32.mrb[0].mxu0
    %2132 = vdwg.mxu0
    %v2133 = vpack.c.bf16 %v2130, %v2127
    %2136 = vrot.lane.b32.xlu0 %v2127, 64
    %v2137 = vpop.permute.xlu0 %2136
    %2138 = vrot.lane.b32.xlu0 %v2130, 64
    %v2139 = vpop.permute.xlu0 %2138
    %2142 = vst.msk [vmem:[#allocation2] sm:$0xff] %vm119, %v2137
    %2143 = vst.msk [vmem:[#allocation2 + $0x8] sm:$0xff] %vm119, %v2139
    %v2144 = vld [vmem:[%s9] sm:$0x1]
    %v2146 = vlaneseq
    %v2147 = vshrl.u32 %v2146, 7
    %v2148 = vsub.s32 0, %v2147
    %v2149 = vrot.slane %v2144, %v2148
    %v2151 = vld [vmem:[%s10] sm:$0x1]
    %v2153 = vlaneseq
    %v2154 = vshrl.u32 %v2153, 7
    %v2155 = vsub.s32 0, %v2154
    %v2156 = vrot.slane %v2151, %v2155
    %v2158 = vld [vmem:[#allocation2] sm:$0xff]
    %v2159 = vld [vmem:[#allocation2 + $0x8] sm:$0xff]
    %v2160 = vld [vmem:[%s1] sm:$0xf]
    %v2161 = vld [vmem:[%s1 + $0x4] sm:$0xf]
    %v2162 = vunpack.c.l.bf16 %v2160
    %v2163 = vunpack.c.l.bf16 %v2161
    %v2166 = vcombine.high %v2158, %v2158
    %v2168 = vunpack.c.l.s4 1966171168
    %v2169 = vunpack.c.0.s8 %v2168
    %v2170 = vlaneseq
    %v2171 = vshrl.u32 %v2170, 7
    %v2172 = vsub.s32 %v2169, %v2171
    %v2173 = vrot.slane %v2158, %v2172
    %v2175 = vunpack.c.l.s4 1966171168
    %v2176 = vunpack.c.0.s8 %v2175
    %v2177 = vlaneseq
    %v2178 = vshrl.u32 %v2177, 7
    %v2179 = vsub.s32 %v2176, %v2178
    %v2180 = vrot.slane %v2166, %v2179
    %v2181 = vcombine.high %v2173, %v2173
    %v2182 = vcombine.high %v2180, %v2180
    %v2184 = vunpack.c.l.s4 1966171168
    %v2185 = vunpack.c.0.s8 %v2184
    %v2186 = vlaneseq
    %v2187 = vshrl.u32 %v2186, 7
    %v2188 = vsub.s32 %v2185, %v2187
    %v2189 = vrot.slane %v2173, %v2188
    %v2191 = vunpack.c.l.s4 1966171168
    %v2192 = vunpack.c.0.s8 %v2191
    %v2193 = vlaneseq
    %v2194 = vshrl.u32 %v2193, 7
    %v2195 = vsub.s32 %v2192, %v2194
    %v2196 = vrot.slane %v2180, %v2195
    %v2198 = vunpack.c.l.s4 1966171168
    %v2199 = vunpack.c.0.s8 %v2198
    %v2200 = vlaneseq
    %v2201 = vshrl.u32 %v2200, 7
    %v2202 = vsub.s32 %v2199, %v2201
    %v2203 = vrot.slane %v2181, %v2202
    %v2205 = vunpack.c.l.s4 1966171168
    %v2206 = vunpack.c.0.s8 %v2205
    %v2207 = vlaneseq
    %v2208 = vshrl.u32 %v2207, 7
    %v2209 = vsub.s32 %v2206, %v2208
    %v2210 = vrot.slane %v2182, %v2209
    %v2211 = vcombine.high %v2189, %v2189
    %v2212 = vcombine.high %v2196, %v2196
    %v2213 = vcombine.high %v2203, %v2203
    %v2214 = vcombine.high %v2210, %v2210
    %v2215 = vcombine.high %v2159, %v2159
    %v2217 = vunpack.c.l.s4 1966171168
    %v2218 = vunpack.c.0.s8 %v2217
    %v2219 = vlaneseq
    %v2220 = vshrl.u32 %v2219, 7
    %v2221 = vsub.s32 %v2218, %v2220
    %v2222 = vrot.slane %v2159, %v2221
    %v2224 = vunpack.c.l.s4 1966171168
    %v2225 = vunpack.c.0.s8 %v2224
    %v2226 = vlaneseq
    %v2227 = vshrl.u32 %v2226, 7
    %v2228 = vsub.s32 %v2225, %v2227
    %v2229 = vrot.slane %v2215, %v2228
    %v2230 = vcombine.high %v2222, %v2222
    %v2231 = vcombine.high %v2229, %v2229
    %v2233 = vunpack.c.l.s4 1966171168
    %v2234 = vunpack.c.0.s8 %v2233
    %v2235 = vlaneseq
    %v2236 = vshrl.u32 %v2235, 7
    %v2237 = vsub.s32 %v2234, %v2236
    %v2238 = vrot.slane %v2222, %v2237
    %v2240 = vunpack.c.l.s4 1966171168
    %v2241 = vunpack.c.0.s8 %v2240
    %v2242 = vlaneseq
    %v2243 = vshrl.u32 %v2242, 7
    %v2244 = vsub.s32 %v2241, %v2243
    %v2245 = vrot.slane %v2229, %v2244
    %v2247 = vunpack.c.l.s4 1966171168
    %v2248 = vunpack.c.0.s8 %v2247
    %v2249 = vlaneseq
    %v2250 = vshrl.u32 %v2249, 7
    %v2251 = vsub.s32 %v2248, %v2250
    %v2252 = vrot.slane %v2230, %v2251
    %v2254 = vunpack.c.l.s4 1966171168
    %v2255 = vunpack.c.0.s8 %v2254
    %v2256 = vlaneseq
    %v2257 = vshrl.u32 %v2256, 7
    %v2258 = vsub.s32 %v2255, %v2257
    %v2259 = vrot.slane %v2231, %v2258
    %v2260 = vcombine.high %v2238, %v2238
    %v2261 = vcombine.high %v2245, %v2245
    %v2262 = vcombine.high %v2252, %v2252
    %v2263 = vcombine.high %v2259, %v2259
    %v2264 = vlaneseq
    %v2265 = vshrl.u32 %v2264, 7
    %v2266 = vsub.s32 0, %v2265
    %v2267 = vrot.slane %v2189, %v2266
    %v2268 = vlaneseq
    %v2269 = vshrl.u32 %v2268, 7
    %v2270 = vsub.s32 0, %v2269
    %v2271 = vrot.slane %v2203, %v2270
    %v2272 = vlaneseq
    %v2273 = vshrl.u32 %v2272, 7
    %v2274 = vsub.s32 0, %v2273
    %v2275 = vrot.slane %v2211, %v2274
    %v2276 = vlaneseq
    %v2277 = vshrl.u32 %v2276, 7
    %v2278 = vsub.s32 0, %v2277
    %v2279 = vrot.slane %v2213, %v2278
    %v2280 = vlaneseq
    %v2281 = vshrl.u32 %v2280, 7
    %v2282 = vsub.s32 0, %v2281
    %v2283 = vrot.slane %v2196, %v2282
    %v2284 = vlaneseq
    %v2285 = vshrl.u32 %v2284, 7
    %v2286 = vsub.s32 0, %v2285
    %v2287 = vrot.slane %v2210, %v2286
    %v2288 = vlaneseq
    %v2289 = vshrl.u32 %v2288, 7
    %v2290 = vsub.s32 0, %v2289
    %v2291 = vrot.slane %v2212, %v2290
    %v2292 = vlaneseq
    %v2293 = vshrl.u32 %v2292, 7
    %v2294 = vsub.s32 0, %v2293
    %v2295 = vrot.slane %v2214, %v2294
    %v2296 = vlaneseq
    %v2297 = vshrl.u32 %v2296, 7
    %v2298 = vsub.s32 0, %v2297
    %v2299 = vrot.slane %v2238, %v2298
    %v2300 = vlaneseq
    %v2301 = vshrl.u32 %v2300, 7
    %v2302 = vsub.s32 0, %v2301
    %v2303 = vrot.slane %v2252, %v2302
    %v2304 = vlaneseq
    %v2305 = vshrl.u32 %v2304, 7
    %v2306 = vsub.s32 0, %v2305
    %v2307 = vrot.slane %v2260, %v2306
    %v2308 = vlaneseq
    %v2309 = vshrl.u32 %v2308, 7
    %v2310 = vsub.s32 0, %v2309
    %v2311 = vrot.slane %v2262, %v2310
    %v2312 = vlaneseq
    %v2313 = vshrl.u32 %v2312, 7
    %v2314 = vsub.s32 0, %v2313
    %v2315 = vrot.slane %v2245, %v2314
    %v2316 = vlaneseq
    %v2317 = vshrl.u32 %v2316, 7
    %v2318 = vsub.s32 0, %v2317
    %v2319 = vrot.slane %v2259, %v2318
    %v2320 = vlaneseq
    %v2321 = vshrl.u32 %v2320, 7
    %v2322 = vsub.s32 0, %v2321
    %v2323 = vrot.slane %v2261, %v2322
    %v2324 = vlaneseq
    %v2325 = vshrl.u32 %v2324, 7
    %v2326 = vsub.s32 0, %v2325
    %v2327 = vrot.slane %v2263, %v2326
    %v2344 = vadd.f32 %v2267, %v2127
    %v2345 = vadd.f32 %v2267, %v2130
    %v2346 = vadd.f32 %v2271, %v2127
    %v2347 = vadd.f32 %v2271, %v2130
    %v2348 = vadd.f32 %v2275, %v2127
    %v2349 = vadd.f32 %v2275, %v2130
    %v2350 = vadd.f32 %v2279, %v2127
    %v2351 = vadd.f32 %v2279, %v2130
    %v2352 = vadd.f32 %v2283, %v2127
    %v2353 = vadd.f32 %v2283, %v2130
    %v2354 = vadd.f32 %v2287, %v2127
    %v2355 = vadd.f32 %v2287, %v2130
    %v2356 = vadd.f32 %v2291, %v2127
    %v2357 = vadd.f32 %v2291, %v2130
    %v2358 = vadd.f32 %v2295, %v2127
    %v2359 = vadd.f32 %v2295, %v2130
    %v2360 = vadd.f32 %v2299, %v2127
    %v2361 = vadd.f32 %v2299, %v2130
    %v2362 = vadd.f32 %v2303, %v2127
    %v2363 = vadd.f32 %v2303, %v2130
    %v2364 = vadd.f32 %v2307, %v2127
    %v2365 = vadd.f32 %v2307, %v2130
    %v2366 = vadd.f32 %v2311, %v2127
    %v2367 = vadd.f32 %v2311, %v2130
    %v2368 = vadd.f32 %v2315, %v2127
    %v2369 = vadd.f32 %v2315, %v2130
    %v2370 = vadd.f32 %v2319, %v2127
    %v2371 = vadd.f32 %v2319, %v2130
    %v2372 = vadd.f32 %v2323, %v2127
    %v2373 = vadd.f32 %v2323, %v2130
    %v2374 = vadd.f32 %v2327, %v2127
    %v2375 = vadd.f32 %v2327, %v2130
    %v2376 = vmul.f32 %v2344, 0.2
    %v2377 = vmul.f32 %v2345, 0.2
    %v2378 = vmul.f32 %v2346, 0.2
    %v2379 = vmul.f32 %v2347, 0.2
    %v2380 = vmul.f32 %v2348, 0.2
    %v2381 = vmul.f32 %v2349, 0.2
    %v2382 = vmul.f32 %v2350, 0.2
    %v2383 = vmul.f32 %v2351, 0.2
    %v2384 = vmul.f32 %v2352, 0.2
    %v2385 = vmul.f32 %v2353, 0.2
    %v2386 = vmul.f32 %v2354, 0.2
    %v2387 = vmul.f32 %v2355, 0.2
    %v2388 = vmul.f32 %v2356, 0.2
    %v2389 = vmul.f32 %v2357, 0.2
    %v2390 = vmul.f32 %v2358, 0.2
    %v2391 = vmul.f32 %v2359, 0.2
    %v2392 = vmul.f32 %v2360, 0.2
    %v2393 = vmul.f32 %v2361, 0.2
    %v2394 = vmul.f32 %v2362, 0.2
    %v2395 = vmul.f32 %v2363, 0.2
    %v2396 = vmul.f32 %v2364, 0.2
    %v2397 = vmul.f32 %v2365, 0.2
    %v2398 = vmul.f32 %v2366, 0.2
    %v2399 = vmul.f32 %v2367, 0.2
    %v2400 = vmul.f32 %v2368, 0.2
    %v2401 = vmul.f32 %v2369, 0.2
    %v2402 = vmul.f32 %v2370, 0.2
    %v2403 = vmul.f32 %v2371, 0.2
    %v2404 = vmul.f32 %v2372, 0.2
    %v2405 = vmul.f32 %v2373, 0.2
    %v2406 = vmul.f32 %v2374, 0.2
    %v2407 = vmul.f32 %v2375, 0.2
    %v2408 = vmax.f32 %v2344, %v2376
    %v2409 = vmax.f32 %v2345, %v2377
    %v2410 = vmax.f32 %v2346, %v2378
    %v2411 = vmax.f32 %v2347, %v2379
    %v2412 = vmax.f32 %v2348, %v2380
    %v2413 = vmax.f32 %v2349, %v2381
    %v2414 = vmax.f32 %v2350, %v2382
    %v2415 = vmax.f32 %v2351, %v2383
    %v2416 = vmax.f32 %v2352, %v2384
    %v2417 = vmax.f32 %v2353, %v2385
    %v2418 = vmax.f32 %v2354, %v2386
    %v2419 = vmax.f32 %v2355, %v2387
    %v2420 = vmax.f32 %v2356, %v2388
    %v2421 = vmax.f32 %v2357, %v2389
    %v2422 = vmax.f32 %v2358, %v2390
    %v2423 = vmax.f32 %v2359, %v2391
    %v2424 = vmax.f32 %v2360, %v2392
    %v2425 = vmax.f32 %v2361, %v2393
    %v2426 = vmax.f32 %v2362, %v2394
    %v2427 = vmax.f32 %v2363, %v2395
    %v2428 = vmax.f32 %v2364, %v2396
    %v2429 = vmax.f32 %v2365, %v2397
    %v2430 = vmax.f32 %v2366, %v2398
    %v2431 = vmax.f32 %v2367, %v2399
    %v2432 = vmax.f32 %v2368, %v2400
    %v2433 = vmax.f32 %v2369, %v2401
    %v2434 = vmax.f32 %v2370, %v2402
    %v2435 = vmax.f32 %v2371, %v2403
    %v2436 = vmax.f32 %v2372, %v2404
    %v2437 = vmax.f32 %v2373, %v2405
    %v2438 = vmax.f32 %v2374, %v2406
    %v2439 = vmax.f32 %v2375, %v2407
    %v2440 = vmul.f32 %v2408, %v2149
    %v2441 = vmul.f32 %v2409, %v2149
    %v2442 = vmul.f32 %v2410, %v2149
    %v2443 = vmul.f32 %v2411, %v2149
    %v2444 = vmul.f32 %v2412, %v2149
    %v2445 = vmul.f32 %v2413, %v2149
    %v2446 = vmul.f32 %v2414, %v2149
    %v2447 = vmul.f32 %v2415, %v2149
    %v2448 = vmul.f32 %v2416, %v2149
    %v2449 = vmul.f32 %v2417, %v2149
    %v2450 = vmul.f32 %v2418, %v2149
    %v2451 = vmul.f32 %v2419, %v2149
    %v2452 = vmul.f32 %v2420, %v2149
    %v2453 = vmul.f32 %v2421, %v2149
    %v2454 = vmul.f32 %v2422, %v2149
    %v2455 = vmul.f32 %v2423, %v2149
    %v2456 = vmul.f32 %v2424, %v2149
    %v2457 = vmul.f32 %v2425, %v2149
    %v2458 = vmul.f32 %v2426, %v2149
    %v2459 = vmul.f32 %v2427, %v2149
    %v2460 = vmul.f32 %v2428, %v2149
    %v2461 = vmul.f32 %v2429, %v2149
    %v2462 = vmul.f32 %v2430, %v2149
    %v2463 = vmul.f32 %v2431, %v2149
    %v2464 = vmul.f32 %v2432, %v2149
    %v2465 = vmul.f32 %v2433, %v2149
    %v2466 = vmul.f32 %v2434, %v2149
    %v2467 = vmul.f32 %v2435, %v2149
    %v2468 = vmul.f32 %v2436, %v2149
    %v2469 = vmul.f32 %v2437, %v2149
    %v2470 = vmul.f32 %v2438, %v2149
    %v2471 = vmul.f32 %v2439, %v2149
    %v2472 = vsel %vm119, %v2440, 0.0
    %2473 = vadd.xlane.f32.xlu0 %v2472
    %v2474 = vpop.xlane.xlu0 %2473
    %v2475 = vsel %vm119, %v2441, 0.0
    %2476 = vadd.xlane.f32.xlu0 %v2475
    %v2477 = vpop.xlane.xlu0 %2476
    %v2478 = vsel %vm119, %v2442, 0.0
    %2479 = vadd.xlane.f32.xlu0 %v2478
    %v2480 = vpop.xlane.xlu0 %2479
    %v2481 = vsel %vm119, %v2443, 0.0
    %2482 = vadd.xlane.f32.xlu0 %v2481
    %v2483 = vpop.xlane.xlu0 %2482
    %v2484 = vsel %vm119, %v2444, 0.0
    %2485 = vadd.xlane.f32.xlu0 %v2484
    %v2486 = vpop.xlane.xlu0 %2485
    %v2487 = vsel %vm119, %v2445, 0.0
    %2488 = vadd.xlane.f32.xlu0 %v2487
    %v2489 = vpop.xlane.xlu0 %2488
    %v2490 = vsel %vm119, %v2446, 0.0
    %2491 = vadd.xlane.f32.xlu0 %v2490
    %v2492 = vpop.xlane.xlu0 %2491
    %v2493 = vsel %vm119, %v2447, 0.0
    %2494 = vadd.xlane.f32.xlu0 %v2493
    %v2495 = vpop.xlane.xlu0 %2494
    %v2496 = vsel %vm119, %v2448, 0.0
    %2497 = vadd.xlane.f32.xlu0 %v2496
    %v2498 = vpop.xlane.xlu0 %2497
    %v2499 = vsel %vm119, %v2449, 0.0
    %2500 = vadd.xlane.f32.xlu0 %v2499
    %v2501 = vpop.xlane.xlu0 %2500
    %v2502 = vsel %vm119, %v2450, 0.0
    %2503 = vadd.xlane.f32.xlu0 %v2502
    %v2504 = vpop.xlane.xlu0 %2503
    %v2505 = vsel %vm119, %v2451, 0.0
    %2506 = vadd.xlane.f32.xlu0 %v2505
    %v2507 = vpop.xlane.xlu0 %2506
    %v2508 = vsel %vm119, %v2452, 0.0
    %2509 = vadd.xlane.f32.xlu0 %v2508
    %v2510 = vpop.xlane.xlu0 %2509
    %v2511 = vsel %vm119, %v2453, 0.0
    %2512 = vadd.xlane.f32.xlu0 %v2511
    %v2513 = vpop.xlane.xlu0 %2512
    %v2514 = vsel %vm119, %v2454, 0.0
    %2515 = vadd.xlane.f32.xlu0 %v2514
    %v2516 = vpop.xlane.xlu0 %2515
    %v2517 = vsel %vm119, %v2455, 0.0
    %2518 = vadd.xlane.f32.xlu0 %v2517
    %v2519 = vpop.xlane.xlu0 %2518
    %v2520 = vsel %vm119, %v2456, 0.0
    %2521 = vadd.xlane.f32.xlu0 %v2520
    %v2522 = vpop.xlane.xlu0 %2521
    %v2523 = vsel %vm119, %v2457, 0.0
    %2524 = vadd.xlane.f32.xlu0 %v2523
    %v2525 = vpop.xlane.xlu0 %2524
    %v2526 = vsel %vm119, %v2458, 0.0
    %2527 = vadd.xlane.f32.xlu0 %v2526
    %v2528 = vpop.xlane.xlu0 %2527
    %v2529 = vsel %vm119, %v2459, 0.0
    %2530 = vadd.xlane.f32.xlu0 %v2529
    %v2531 = vpop.xlane.xlu0 %2530
    %v2532 = vsel %vm119, %v2460, 0.0
    %2533 = vadd.xlane.f32.xlu0 %v2532
    %v2534 = vpop.xlane.xlu0 %2533
    %v2535 = vsel %vm119, %v2461, 0.0
    %2536 = vadd.xlane.f32.xlu0 %v2535
    %v2537 = vpop.xlane.xlu0 %2536
    %v2538 = vsel %vm119, %v2462, 0.0
    %2539 = vadd.xlane.f32.xlu0 %v2538
    %v2540 = vpop.xlane.xlu0 %2539
    %v2541 = vsel %vm119, %v2463, 0.0
    %2542 = vadd.xlane.f32.xlu0 %v2541
    %v2543 = vpop.xlane.xlu0 %2542
    %v2544 = vsel %vm119, %v2464, 0.0
    %2545 = vadd.xlane.f32.xlu0 %v2544
    %v2546 = vpop.xlane.xlu0 %2545
    %v2547 = vsel %vm119, %v2465, 0.0
    %2548 = vadd.xlane.f32.xlu0 %v2547
    %v2549 = vpop.xlane.xlu0 %2548
    %v2550 = vsel %vm119, %v2466, 0.0
    %2551 = vadd.xlane.f32.xlu0 %v2550
    %v2552 = vpop.xlane.xlu0 %2551
    %v2553 = vsel %vm119, %v2467, 0.0
    %2554 = vadd.xlane.f32.xlu0 %v2553
    %v2555 = vpop.xlane.xlu0 %2554
    %v2556 = vsel %vm119, %v2468, 0.0
    %2557 = vadd.xlane.f32.xlu0 %v2556
    %v2558 = vpop.xlane.xlu0 %2557
    %v2559 = vsel %vm119, %v2469, 0.0
    %2560 = vadd.xlane.f32.xlu0 %v2559
    %v2561 = vpop.xlane.xlu0 %2560
    %v2562 = vsel %vm119, %v2470, 0.0
    %2563 = vadd.xlane.f32.xlu0 %v2562
    %v2564 = vpop.xlane.xlu0 %2563
    %v2565 = vsel %vm119, %v2471, 0.0
    %2566 = vadd.xlane.f32.xlu0 %v2565
    %v2567 = vpop.xlane.xlu0 %2566
    %v2570 = vlaneseq
    %v2571 = vshrl.u32 %v2570, 7
    %v2572 = vsub.s32 0, %v2571
    %v2573 = vrot.slane %v2162, %v2572
    %2575 = vbcast.lane.b32.xlu0 %v2573, 256
    %v2576 = vpop.permute.xlu0 %2575
    %s2578 = sor.u32 256, 8
    %2579 = vbcast.lane.b32.xlu0 %v2573, %s2578
    %v2580 = vpop.permute.xlu0 %2579
    %v2581 = vlaneseq
    %v2582 = vshrl.u32 %v2581, 7
    %v2583 = vsub.s32 1, %v2582
    %v2584 = vrot.slane %v2162, %v2583
    %2586 = vbcast.lane.b32.xlu0 %v2584, 256
    %v2587 = vpop.permute.xlu0 %2586
    %s2589 = sor.u32 256, 8
    %2590 = vbcast.lane.b32.xlu0 %v2584, %s2589
    %v2591 = vpop.permute.xlu0 %2590
    %v2592 = vlaneseq
    %v2593 = vshrl.u32 %v2592, 7
    %v2594 = vsub.s32 2, %v2593
    %v2595 = vrot.slane %v2162, %v2594
    %2597 = vbcast.lane.b32.xlu0 %v2595, 256
    %v2598 = vpop.permute.xlu0 %2597
    %s2600 = sor.u32 256, 8
    %2601 = vbcast.lane.b32.xlu0 %v2595, %s2600
    %v2602 = vpop.permute.xlu0 %2601
    %v2603 = vlaneseq
    %v2604 = vshrl.u32 %v2603, 7
    %v2605 = vsub.s32 3, %v2604
    %v2606 = vrot.slane %v2162, %v2605
    %2608 = vbcast.lane.b32.xlu0 %v2606, 256
    %v2609 = vpop.permute.xlu0 %2608
    %s2611 = sor.u32 256, 8
    %2612 = vbcast.lane.b32.xlu0 %v2606, %s2611
    %v2613 = vpop.permute.xlu0 %2612
    %v2614 = vlaneseq
    %v2615 = vshrl.u32 %v2614, 7
    %v2616 = vsub.s32 4, %v2615
    %v2617 = vrot.slane %v2162, %v2616
    %2619 = vbcast.lane.b32.xlu0 %v2617, 256
    %v2620 = vpop.permute.xlu0 %2619
    %s2622 = sor.u32 256, 8
    %2623 = vbcast.lane.b32.xlu0 %v2617, %s2622
    %v2624 = vpop.permute.xlu0 %2623
    %v2625 = vlaneseq
    %v2626 = vshrl.u32 %v2625, 7
    %v2627 = vsub.s32 5, %v2626
    %v2628 = vrot.slane %v2162, %v2627
    %2630 = vbcast.lane.b32.xlu0 %v2628, 256
    %v2631 = vpop.permute.xlu0 %2630
    %s2633 = sor.u32 256, 8
    %2634 = vbcast.lane.b32.xlu0 %v2628, %s2633
    %v2635 = vpop.permute.xlu0 %2634
    %v2636 = vlaneseq
    %v2637 = vshrl.u32 %v2636, 7
    %v2638 = vsub.s32 6, %v2637
    %v2639 = vrot.slane %v2162, %v2638
    %2641 = vbcast.lane.b32.xlu0 %v2639, 256
    %v2642 = vpop.permute.xlu0 %2641
    %s2644 = sor.u32 256, 8
    %2645 = vbcast.lane.b32.xlu0 %v2639, %s2644
    %v2646 = vpop.permute.xlu0 %2645
    %v2647 = vlaneseq
    %v2648 = vshrl.u32 %v2647, 7
    %v2649 = vsub.s32 7, %v2648
    %v2650 = vrot.slane %v2162, %v2649
    %2652 = vbcast.lane.b32.xlu0 %v2650, 256
    %v2653 = vpop.permute.xlu0 %2652
    %s2655 = sor.u32 256, 8
    %2656 = vbcast.lane.b32.xlu0 %v2650, %s2655
    %v2657 = vpop.permute.xlu0 %2656
    %v2658 = vlaneseq
    %v2659 = vshrl.u32 %v2658, 7
    %v2660 = vsub.s32 0, %v2659
    %v2661 = vrot.slane %v2163, %v2660
    %2663 = vbcast.lane.b32.xlu0 %v2661, 256
    %v2664 = vpop.permute.xlu0 %2663
    %s2666 = sor.u32 256, 8
    %2667 = vbcast.lane.b32.xlu0 %v2661, %s2666
    %v2668 = vpop.permute.xlu0 %2667
    %v2669 = vlaneseq
    %v2670 = vshrl.u32 %v2669, 7
    %v2671 = vsub.s32 1, %v2670
    %v2672 = vrot.slane %v2163, %v2671
    %2674 = vbcast.lane.b32.xlu0 %v2672, 256
    %v2675 = vpop.permute.xlu0 %2674
    %s2677 = sor.u32 256, 8
    %2678 = vbcast.lane.b32.xlu0 %v2672, %s2677
    %v2679 = vpop.permute.xlu0 %2678
    %v2680 = vlaneseq
    %v2681 = vshrl.u32 %v2680, 7
    %v2682 = vsub.s32 2, %v2681
    %v2683 = vrot.slane %v2163, %v2682
    %2685 = vbcast.lane.b32.xlu0 %v2683, 256
    %v2686 = vpop.permute.xlu0 %2685
    %s2688 = sor.u32 256, 8
    %2689 = vbcast.lane.b32.xlu0 %v2683, %s2688
    %v2690 = vpop.permute.xlu0 %2689
    %v2691 = vlaneseq
    %v2692 = vshrl.u32 %v2691, 7
    %v2693 = vsub.s32 3, %v2692
    %v2694 = vrot.slane %v2163, %v2693
    %2696 = vbcast.lane.b32.xlu0 %v2694, 256
    %v2697 = vpop.permute.xlu0 %2696
    %s2699 = sor.u32 256, 8
    %2700 = vbcast.lane.b32.xlu0 %v2694, %s2699
    %v2701 = vpop.permute.xlu0 %2700
    %v2702 = vlaneseq
    %v2703 = vshrl.u32 %v2702, 7
    %v2704 = vsub.s32 4, %v2703
    %v2705 = vrot.slane %v2163, %v2704
    %2707 = vbcast.lane.b32.xlu0 %v2705, 256
    %v2708 = vpop.permute.xlu0 %2707
    %s2710 = sor.u32 256, 8
    %2711 = vbcast.lane.b32.xlu0 %v2705, %s2710
    %v2712 = vpop.permute.xlu0 %2711
    %v2713 = vlaneseq
    %v2714 = vshrl.u32 %v2713, 7
    %v2715 = vsub.s32 5, %v2714
    %v2716 = vrot.slane %v2163, %v2715
    %2718 = vbcast.lane.b32.xlu0 %v2716, 256
    %v2719 = vpop.permute.xlu0 %2718
    %s2721 = sor.u32 256, 8
    %2722 = vbcast.lane.b32.xlu0 %v2716, %s2721
    %v2723 = vpop.permute.xlu0 %2722
    %v2724 = vlaneseq
    %v2725 = vshrl.u32 %v2724, 7
    %v2726 = vsub.s32 6, %v2725
    %v2727 = vrot.slane %v2163, %v2726
    %2729 = vbcast.lane.b32.xlu0 %v2727, 256
    %v2730 = vpop.permute.xlu0 %2729
    %s2732 = sor.u32 256, 8
    %2733 = vbcast.lane.b32.xlu0 %v2727, %s2732
    %v2734 = vpop.permute.xlu0 %2733
    %v2735 = vlaneseq
    %v2736 = vshrl.u32 %v2735, 7
    %v2737 = vsub.s32 7, %v2736
    %v2738 = vrot.slane %v2163, %v2737
    %2740 = vbcast.lane.b32.xlu0 %v2738, 256
    %v2741 = vpop.permute.xlu0 %2740
    %s2743 = sor.u32 256, 8
    %2744 = vbcast.lane.b32.xlu0 %v2738, %s2743
    %v2745 = vpop.permute.xlu0 %2744
    %v2778 = vadd.f32 %v2474, %v2576
    %v2779 = vadd.f32 %v2477, %v2580
    %v2780 = vadd.f32 %v2480, %v2587
    %v2781 = vadd.f32 %v2483, %v2591
    %v2782 = vadd.f32 %v2486, %v2598
    %v2783 = vadd.f32 %v2489, %v2602
    %v2784 = vadd.f32 %v2492, %v2609
    %v2785 = vadd.f32 %v2495, %v2613
    %v2786 = vadd.f32 %v2498, %v2620
    %v2787 = vadd.f32 %v2501, %v2624
    %v2788 = vadd.f32 %v2504, %v2631
    %v2789 = vadd.f32 %v2507, %v2635
    %v2790 = vadd.f32 %v2510, %v2642
    %v2791 = vadd.f32 %v2513, %v2646
    %v2792 = vadd.f32 %v2516, %v2653
    %v2793 = vadd.f32 %v2519, %v2657
    %v2794 = vadd.f32 %v2522, %v2664
    %v2795 = vadd.f32 %v2525, %v2668
    %v2796 = vadd.f32 %v2528, %v2675
    %v2797 = vadd.f32 %v2531, %v2679
    %v2798 = vadd.f32 %v2534, %v2686
    %v2799 = vadd.f32 %v2537, %v2690
    %v2800 = vadd.f32 %v2540, %v2697
    %v2801 = vadd.f32 %v2543, %v2701
    %v2802 = vadd.f32 %v2546, %v2708
    %v2803 = vadd.f32 %v2549, %v2712
    %v2804 = vadd.f32 %v2552, %v2719
    %v2805 = vadd.f32 %v2555, %v2723
    %v2806 = vadd.f32 %v2558, %v2730
    %v2807 = vadd.f32 %v2561, %v2734
    %v2808 = vadd.f32 %v2564, %v2741
    %v2809 = vadd.f32 %v2567, %v2745
    %2842 = vset.pattern.permute.xlu0 0
    %2843 = vperm.xlu0 %2842, %v2778
    %v2844 = vpop.permute.xlu0 %2843
    %2845 = vset.pattern.permute.xlu0 0
    %2846 = vperm.xlu0 %2845, %v2779
    %v2847 = vpop.permute.xlu0 %2846
    %2848 = vset.pattern.permute.xlu0 0
    %2849 = vperm.xlu0 %2848, %v2780
    %v2850 = vpop.permute.xlu0 %2849
    %2851 = vset.pattern.permute.xlu0 0
    %2852 = vperm.xlu0 %2851, %v2781
    %v2853 = vpop.permute.xlu0 %2852
    %2854 = vset.pattern.permute.xlu0 0
    %2855 = vperm.xlu0 %2854, %v2782
    %v2856 = vpop.permute.xlu0 %2855
    %2857 = vset.pattern.permute.xlu0 0
    %2858 = vperm.xlu0 %2857, %v2783
    %v2859 = vpop.permute.xlu0 %2858
    %2860 = vset.pattern.permute.xlu0 0
    %2861 = vperm.xlu0 %2860, %v2784
    %v2862 = vpop.permute.xlu0 %2861
    %2863 = vset.pattern.permute.xlu0 0
    %2864 = vperm.xlu0 %2863, %v2785
    %v2865 = vpop.permute.xlu0 %2864
    %2866 = vset.pattern.permute.xlu0 0
    %2867 = vperm.xlu0 %2866, %v2786
    %v2868 = vpop.permute.xlu0 %2867
    %2869 = vset.pattern.permute.xlu0 0
    %2870 = vperm.xlu0 %2869, %v2787
    %v2871 = vpop.permute.xlu0 %2870
    %2872 = vset.pattern.permute.xlu0 0
    %2873 = vperm.xlu0 %2872, %v2788
    %v2874 = vpop.permute.xlu0 %2873
    %2875 = vset.pattern.permute.xlu0 0
    %2876 = vperm.xlu0 %2875, %v2789
    %v2877 = vpop.permute.xlu0 %2876
    %2878 = vset.pattern.permute.xlu0 0
    %2879 = vperm.xlu0 %2878, %v2790
    %v2880 = vpop.permute.xlu0 %2879
    %2881 = vset.pattern.permute.xlu0 0
    %2882 = vperm.xlu0 %2881, %v2791
    %v2883 = vpop.permute.xlu0 %2882
    %2884 = vset.pattern.permute.xlu0 0
    %2885 = vperm.xlu0 %2884, %v2792
    %v2886 = vpop.permute.xlu0 %2885
    %2887 = vset.pattern.permute.xlu0 0
    %2888 = vperm.xlu0 %2887, %v2793
    %v2889 = vpop.permute.xlu0 %2888
    %2890 = vset.pattern.permute.xlu0 0
    %2891 = vperm.xlu0 %2890, %v2794
    %v2892 = vpop.permute.xlu0 %2891
    %2893 = vset.pattern.permute.xlu0 0
    %2894 = vperm.xlu0 %2893, %v2795
    %v2895 = vpop.permute.xlu0 %2894
    %2896 = vset.pattern.permute.xlu0 0
    %2897 = vperm.xlu0 %2896, %v2796
    %v2898 = vpop.permute.xlu0 %2897
    %2899 = vset.pattern.permute.xlu0 0
    %2900 = vperm.xlu0 %2899, %v2797
    %v2901 = vpop.permute.xlu0 %2900
    %2902 = vset.pattern.permute.xlu0 0
    %2903 = vperm.xlu0 %2902, %v2798
    %v2904 = vpop.permute.xlu0 %2903
    %2905 = vset.pattern.permute.xlu0 0
    %2906 = vperm.xlu0 %2905, %v2799
    %v2907 = vpop.permute.xlu0 %2906
    %2908 = vset.pattern.permute.xlu0 0
    %2909 = vperm.xlu0 %2908, %v2800
    %v2910 = vpop.permute.xlu0 %2909
    %2911 = vset.pattern.permute.xlu0 0
    %2912 = vperm.xlu0 %2911, %v2801
    %v2913 = vpop.permute.xlu0 %2912
    %2914 = vset.pattern.permute.xlu0 0
    %2915 = vperm.xlu0 %2914, %v2802
    %v2916 = vpop.permute.xlu0 %2915
    %2917 = vset.pattern.permute.xlu0 0
    %2918 = vperm.xlu0 %2917, %v2803
    %v2919 = vpop.permute.xlu0 %2918
    %2920 = vset.pattern.permute.xlu0 0
    %2921 = vperm.xlu0 %2920, %v2804
    %v2922 = vpop.permute.xlu0 %2921
    %2923 = vset.pattern.permute.xlu0 0
    %2924 = vperm.xlu0 %2923, %v2805
    %v2925 = vpop.permute.xlu0 %2924
    %2926 = vset.pattern.permute.xlu0 0
    %2927 = vperm.xlu0 %2926, %v2806
    %v2928 = vpop.permute.xlu0 %2927
    %2929 = vset.pattern.permute.xlu0 0
    %2930 = vperm.xlu0 %2929, %v2807
    %v2931 = vpop.permute.xlu0 %2930
    %2932 = vset.pattern.permute.xlu0 0
    %2933 = vperm.xlu0 %2932, %v2808
    %v2934 = vpop.permute.xlu0 %2933
    %2935 = vset.pattern.permute.xlu0 0
    %2936 = vperm.xlu0 %2935, %v2809
    %v2937 = vpop.permute.xlu0 %2936
    %v2938 = vlaneseq
    %v2939 = vshrl.u32 %v2938, 7
    %v2940 = vsub.s32 %v917, %v2939
    %v2941 = vrot.slane %v2844, %v2940
    %v2942 = vlaneseq
    %v2943 = vshrl.u32 %v2942, 7
    %v2944 = vsub.s32 %v922, %v2943
    %v2945 = vrot.slane %v2847, %v2944
    %v2946 = vsel %vm927, %v2945, %v2941
    %v2947 = vlaneseq
    %v2948 = vshrl.u32 %v2947, 7
    %v2949 = vsub.s32 %v917, %v2948
    %v2950 = vrot.slane %v2850, %v2949
    %v2951 = vlaneseq
    %v2952 = vshrl.u32 %v2951, 7
    %v2953 = vsub.s32 %v922, %v2952
    %v2954 = vrot.slane %v2853, %v2953
    %v2955 = vsel %vm927, %v2954, %v2950
    %v2956 = vlaneseq
    %v2957 = vshrl.u32 %v2956, 7
    %v2958 = vsub.s32 %v917, %v2957
    %v2959 = vrot.slane %v2856, %v2958
    %v2960 = vlaneseq
    %v2961 = vshrl.u32 %v2960, 7
    %v2962 = vsub.s32 %v922, %v2961
    %v2963 = vrot.slane %v2859, %v2962
    %v2964 = vsel %vm927, %v2963, %v2959
    %v2965 = vlaneseq
    %v2966 = vshrl.u32 %v2965, 7
    %v2967 = vsub.s32 %v917, %v2966
    %v2968 = vrot.slane %v2862, %v2967
    %v2969 = vlaneseq
    %v2970 = vshrl.u32 %v2969, 7
    %v2971 = vsub.s32 %v922, %v2970
    %v2972 = vrot.slane %v2865, %v2971
    %v2973 = vsel %vm927, %v2972, %v2968
    %v2974 = vlaneseq
    %v2975 = vshrl.u32 %v2974, 7
    %v2976 = vsub.s32 %v917, %v2975
    %v2977 = vrot.slane %v2868, %v2976
    %v2978 = vlaneseq
    %v2979 = vshrl.u32 %v2978, 7
    %v2980 = vsub.s32 %v922, %v2979
    %v2981 = vrot.slane %v2871, %v2980
    %v2982 = vsel %vm927, %v2981, %v2977
    %v2983 = vlaneseq
    %v2984 = vshrl.u32 %v2983, 7
    %v2985 = vsub.s32 %v917, %v2984
    %v2986 = vrot.slane %v2874, %v2985
    %v2987 = vlaneseq
    %v2988 = vshrl.u32 %v2987, 7
    %v2989 = vsub.s32 %v922, %v2988
    %v2990 = vrot.slane %v2877, %v2989
    %v2991 = vsel %vm927, %v2990, %v2986
    %v2992 = vlaneseq
    %v2993 = vshrl.u32 %v2992, 7
    %v2994 = vsub.s32 %v917, %v2993
    %v2995 = vrot.slane %v2880, %v2994
    %v2996 = vlaneseq
    %v2997 = vshrl.u32 %v2996, 7
    %v2998 = vsub.s32 %v922, %v2997
    %v2999 = vrot.slane %v2883, %v2998
    %v3000 = vsel %vm927, %v2999, %v2995
    %v3001 = vlaneseq
    %v3002 = vshrl.u32 %v3001, 7
    %v3003 = vsub.s32 %v917, %v3002
    %v3004 = vrot.slane %v2886, %v3003
    %v3005 = vlaneseq
    %v3006 = vshrl.u32 %v3005, 7
    %v3007 = vsub.s32 %v922, %v3006
    %v3008 = vrot.slane %v2889, %v3007
    %v3009 = vsel %vm927, %v3008, %v3004
    %v3010 = vlaneseq
    %v3011 = vshrl.u32 %v3010, 7
    %v3012 = vsub.s32 %v917, %v3011
    %v3013 = vrot.slane %v2892, %v3012
    %v3014 = vlaneseq
    %v3015 = vshrl.u32 %v3014, 7
    %v3016 = vsub.s32 %v922, %v3015
    %v3017 = vrot.slane %v2895, %v3016
    %v3018 = vsel %vm927, %v3017, %v3013
    %v3019 = vlaneseq
    %v3020 = vshrl.u32 %v3019, 7
    %v3021 = vsub.s32 %v917, %v3020
    %v3022 = vrot.slane %v2898, %v3021
    %v3023 = vlaneseq
    %v3024 = vshrl.u32 %v3023, 7
    %v3025 = vsub.s32 %v922, %v3024
    %v3026 = vrot.slane %v2901, %v3025
    %v3027 = vsel %vm927, %v3026, %v3022
    %v3028 = vlaneseq
    %v3029 = vshrl.u32 %v3028, 7
    %v3030 = vsub.s32 %v917, %v3029
    %v3031 = vrot.slane %v2904, %v3030
    %v3032 = vlaneseq
    %v3033 = vshrl.u32 %v3032, 7
    %v3034 = vsub.s32 %v922, %v3033
    %v3035 = vrot.slane %v2907, %v3034
    %v3036 = vsel %vm927, %v3035, %v3031
    %v3037 = vlaneseq
    %v3038 = vshrl.u32 %v3037, 7
    %v3039 = vsub.s32 %v917, %v3038
    %v3040 = vrot.slane %v2910, %v3039
    %v3041 = vlaneseq
    %v3042 = vshrl.u32 %v3041, 7
    %v3043 = vsub.s32 %v922, %v3042
    %v3044 = vrot.slane %v2913, %v3043
    %v3045 = vsel %vm927, %v3044, %v3040
    %v3046 = vlaneseq
    %v3047 = vshrl.u32 %v3046, 7
    %v3048 = vsub.s32 %v917, %v3047
    %v3049 = vrot.slane %v2916, %v3048
    %v3050 = vlaneseq
    %v3051 = vshrl.u32 %v3050, 7
    %v3052 = vsub.s32 %v922, %v3051
    %v3053 = vrot.slane %v2919, %v3052
    %v3054 = vsel %vm927, %v3053, %v3049
    %v3055 = vlaneseq
    %v3056 = vshrl.u32 %v3055, 7
    %v3057 = vsub.s32 %v917, %v3056
    %v3058 = vrot.slane %v2922, %v3057
    %v3059 = vlaneseq
    %v3060 = vshrl.u32 %v3059, 7
    %v3061 = vsub.s32 %v922, %v3060
    %v3062 = vrot.slane %v2925, %v3061
    %v3063 = vsel %vm927, %v3062, %v3058
    %v3064 = vlaneseq
    %v3065 = vshrl.u32 %v3064, 7
    %v3066 = vsub.s32 %v917, %v3065
    %v3067 = vrot.slane %v2928, %v3066
    %v3068 = vlaneseq
    %v3069 = vshrl.u32 %v3068, 7
    %v3070 = vsub.s32 %v922, %v3069
    %v3071 = vrot.slane %v2931, %v3070
    %v3072 = vsel %vm927, %v3071, %v3067
    %v3073 = vlaneseq
    %v3074 = vshrl.u32 %v3073, 7
    %v3075 = vsub.s32 %v917, %v3074
    %v3076 = vrot.slane %v2934, %v3075
    %v3077 = vlaneseq
    %v3078 = vshrl.u32 %v3077, 7
    %v3079 = vsub.s32 %v922, %v3078
    %v3080 = vrot.slane %v2937, %v3079
    %v3081 = vsel %vm927, %v3080, %v3076
    %v3082 = vsel %vm1064, %v2955, %v2946
    %v3083 = vsel %vm1066, %v2964, %v3082
    %v3084 = vsel %vm1068, %v2973, %v3083
    %v3085 = vsel %vm1070, %v2982, %v3084
    %v3086 = vsel %vm1072, %v2991, %v3085
    %v3087 = vsel %vm1074, %v3000, %v3086
    %v3088 = vsel %vm1076, %v3009, %v3087
    %v3089 = vsel %vm1064, %v3027, %v3018
    %v3090 = vsel %vm1066, %v3036, %v3089
    %v3091 = vsel %vm1068, %v3045, %v3090
    %v3092 = vsel %vm1070, %v3054, %v3091
    %v3093 = vsel %vm1072, %v3063, %v3092
    %v3094 = vsel %vm1074, %v3072, %v3093
    %v3095 = vsel %vm1076, %v3081, %v3094
    %v3098 = vsel %vm1087, %v3088, -inf
    %3099 = vmax.xlane.f32.xlu0 %v3098
    %v3100 = vpop.xlane.xlu0 %3099
    %v3101 = vsel %vm1087, %v3095, -inf
    %3102 = vmax.xlane.f32.xlu0 %v3101
    %v3103 = vpop.xlane.xlu0 %3102
    %v3106 = vlaneseq
    %v3107 = vshrl.u32 %v3106, 7
    %v3108 = vsub.s32 0, %v3107
    %v3109 = vrot.slane %v3100, %v3108
    %v3110 = vlaneseq
    %v3111 = vshrl.u32 %v3110, 7
    %v3112 = vsub.s32 1, %v3111
    %v3113 = vrot.slane %v3100, %v3112
    %v3114 = vlaneseq
    %v3115 = vshrl.u32 %v3114, 7
    %v3116 = vsub.s32 2, %v3115
    %v3117 = vrot.slane %v3100, %v3116
    %v3118 = vlaneseq
    %v3119 = vshrl.u32 %v3118, 7
    %v3120 = vsub.s32 3, %v3119
    %v3121 = vrot.slane %v3100, %v3120
    %v3122 = vlaneseq
    %v3123 = vshrl.u32 %v3122, 7
    %v3124 = vsub.s32 4, %v3123
    %v3125 = vrot.slane %v3100, %v3124
    %v3126 = vlaneseq
    %v3127 = vshrl.u32 %v3126, 7
    %v3128 = vsub.s32 5, %v3127
    %v3129 = vrot.slane %v3100, %v3128
    %v3130 = vlaneseq
    %v3131 = vshrl.u32 %v3130, 7
    %v3132 = vsub.s32 6, %v3131
    %v3133 = vrot.slane %v3100, %v3132
    %v3134 = vlaneseq
    %v3135 = vshrl.u32 %v3134, 7
    %v3136 = vsub.s32 7, %v3135
    %v3137 = vrot.slane %v3100, %v3136
    %v3138 = vlaneseq
    %v3139 = vshrl.u32 %v3138, 7
    %v3140 = vsub.s32 0, %v3139
    %v3141 = vrot.slane %v3103, %v3140
    %v3142 = vlaneseq
    %v3143 = vshrl.u32 %v3142, 7
    %v3144 = vsub.s32 1, %v3143
    %v3145 = vrot.slane %v3103, %v3144
    %v3146 = vlaneseq
    %v3147 = vshrl.u32 %v3146, 7
    %v3148 = vsub.s32 2, %v3147
    %v3149 = vrot.slane %v3103, %v3148
    %v3150 = vlaneseq
    %v3151 = vshrl.u32 %v3150, 7
    %v3152 = vsub.s32 3, %v3151
    %v3153 = vrot.slane %v3103, %v3152
    %v3154 = vlaneseq
    %v3155 = vshrl.u32 %v3154, 7
    %v3156 = vsub.s32 4, %v3155
    %v3157 = vrot.slane %v3103, %v3156
    %v3158 = vlaneseq
    %v3159 = vshrl.u32 %v3158, 7
    %v3160 = vsub.s32 5, %v3159
    %v3161 = vrot.slane %v3103, %v3160
    %v3162 = vlaneseq
    %v3163 = vshrl.u32 %v3162, 7
    %v3164 = vsub.s32 6, %v3163
    %v3165 = vrot.slane %v3103, %v3164
    %v3166 = vlaneseq
    %v3167 = vshrl.u32 %v3166, 7
    %v3168 = vsub.s32 7, %v3167
    %v3169 = vrot.slane %v3103, %v3168
    %v3186 = vsub.f32 %v2778, %v3109
    %v3187 = vsub.f32 %v2779, %v3109
    %v3188 = vsub.f32 %v2780, %v3113
    %v3189 = vsub.f32 %v2781, %v3113
    %v3190 = vsub.f32 %v2782, %v3117
    %v3191 = vsub.f32 %v2783, %v3117
    %v3192 = vsub.f32 %v2784, %v3121
    %v3193 = vsub.f32 %v2785, %v3121
    %v3194 = vsub.f32 %v2786, %v3125
    %v3195 = vsub.f32 %v2787, %v3125
    %v3196 = vsub.f32 %v2788, %v3129
    %v3197 = vsub.f32 %v2789, %v3129
    %v3198 = vsub.f32 %v2790, %v3133
    %v3199 = vsub.f32 %v2791, %v3133
    %v3200 = vsub.f32 %v2792, %v3137
    %v3201 = vsub.f32 %v2793, %v3137
    %v3202 = vsub.f32 %v2794, %v3141
    %v3203 = vsub.f32 %v2795, %v3141
    %v3204 = vsub.f32 %v2796, %v3145
    %v3205 = vsub.f32 %v2797, %v3145
    %v3206 = vsub.f32 %v2798, %v3149
    %v3207 = vsub.f32 %v2799, %v3149
    %v3208 = vsub.f32 %v2800, %v3153
    %v3209 = vsub.f32 %v2801, %v3153
    %v3210 = vsub.f32 %v2802, %v3157
    %v3211 = vsub.f32 %v2803, %v3157
    %v3212 = vsub.f32 %v2804, %v3161
    %v3213 = vsub.f32 %v2805, %v3161
    %v3214 = vsub.f32 %v2806, %v3165
    %v3215 = vsub.f32 %v2807, %v3165
    %v3216 = vsub.f32 %v2808, %v3169
    %v3217 = vsub.f32 %v2809, %v3169
    %v3218 = vmul.f32 %v3186, 1.442695
    %v3219 = vpow.pop %v3218
    %v3220 = vmul.f32 %v3187, 1.442695
    %v3221 = vpow.pop %v3220
    %v3222 = vmul.f32 %v3188, 1.442695
    %v3223 = vpow.pop %v3222
    %v3224 = vmul.f32 %v3189, 1.442695
    %v3225 = vpow.pop %v3224
    %v3226 = vmul.f32 %v3190, 1.442695
    %v3227 = vpow.pop %v3226
    %v3228 = vmul.f32 %v3191, 1.442695
    %v3229 = vpow.pop %v3228
    %v3230 = vmul.f32 %v3192, 1.442695
    %v3231 = vpow.pop %v3230
    %v3232 = vmul.f32 %v3193, 1.442695
    %v3233 = vpow.pop %v3232
    %v3234 = vmul.f32 %v3194, 1.442695
    %v3235 = vpow.pop %v3234
    %v3236 = vmul.f32 %v3195, 1.442695
    %v3237 = vpow.pop %v3236
    %v3238 = vmul.f32 %v3196, 1.442695
    %v3239 = vpow.pop %v3238
    %v3240 = vmul.f32 %v3197, 1.442695
    %v3241 = vpow.pop %v3240
    %v3242 = vmul.f32 %v3198, 1.442695
    %v3243 = vpow.pop %v3242
    %v3244 = vmul.f32 %v3199, 1.442695
    %v3245 = vpow.pop %v3244
    %v3246 = vmul.f32 %v3200, 1.442695
    %v3247 = vpow.pop %v3246
    %v3248 = vmul.f32 %v3201, 1.442695
    %v3249 = vpow.pop %v3248
    %v3250 = vmul.f32 %v3202, 1.442695
    %v3251 = vpow.pop %v3250
    %v3252 = vmul.f32 %v3203, 1.442695
    %v3253 = vpow.pop %v3252
    %v3254 = vmul.f32 %v3204, 1.442695
    %v3255 = vpow.pop %v3254
    %v3256 = vmul.f32 %v3205, 1.442695
    %v3257 = vpow.pop %v3256
    %v3258 = vmul.f32 %v3206, 1.442695
    %v3259 = vpow.pop %v3258
    %v3260 = vmul.f32 %v3207, 1.442695
    %v3261 = vpow.pop %v3260
    %v3262 = vmul.f32 %v3208, 1.442695
    %v3263 = vpow.pop %v3262
    %v3264 = vmul.f32 %v3209, 1.442695
    %v3265 = vpow.pop %v3264
    %v3266 = vmul.f32 %v3210, 1.442695
    %v3267 = vpow.pop %v3266
    %v3268 = vmul.f32 %v3211, 1.442695
    %v3269 = vpow.pop %v3268
    %v3270 = vmul.f32 %v3212, 1.442695
    %v3271 = vpow.pop %v3270
    %v3272 = vmul.f32 %v3213, 1.442695
    %v3273 = vpow.pop %v3272
    %v3274 = vmul.f32 %v3214, 1.442695
    %v3275 = vpow.pop %v3274
    %v3276 = vmul.f32 %v3215, 1.442695
    %v3277 = vpow.pop %v3276
    %v3278 = vmul.f32 %v3216, 1.442695
    %v3279 = vpow.pop %v3278
    %v3280 = vmul.f32 %v3217, 1.442695
    %v3281 = vpow.pop %v3280
    %3314 = vset.pattern.permute.xlu0 0
    %3315 = vperm.xlu0 %3314, %v3219
    %v3316 = vpop.permute.xlu0 %3315
    %3317 = vset.pattern.permute.xlu0 0
    %3318 = vperm.xlu0 %3317, %v3221
    %v3319 = vpop.permute.xlu0 %3318
    %3320 = vset.pattern.permute.xlu0 0
    %3321 = vperm.xlu0 %3320, %v3223
    %v3322 = vpop.permute.xlu0 %3321
    %3323 = vset.pattern.permute.xlu0 0
    %3324 = vperm.xlu0 %3323, %v3225
    %v3325 = vpop.permute.xlu0 %3324
    %3326 = vset.pattern.permute.xlu0 0
    %3327 = vperm.xlu0 %3326, %v3227
    %v3328 = vpop.permute.xlu0 %3327
    %3329 = vset.pattern.permute.xlu0 0
    %3330 = vperm.xlu0 %3329, %v3229
    %v3331 = vpop.permute.xlu0 %3330
    %3332 = vset.pattern.permute.xlu0 0
    %3333 = vperm.xlu0 %3332, %v3231
    %v3334 = vpop.permute.xlu0 %3333
    %3335 = vset.pattern.permute.xlu0 0
    %3336 = vperm.xlu0 %3335, %v3233
    %v3337 = vpop.permute.xlu0 %3336
    %3338 = vset.pattern.permute.xlu0 0
    %3339 = vperm.xlu0 %3338, %v3235
    %v3340 = vpop.permute.xlu0 %3339
    %3341 = vset.pattern.permute.xlu0 0
    %3342 = vperm.xlu0 %3341, %v3237
    %v3343 = vpop.permute.xlu0 %3342
    %3344 = vset.pattern.permute.xlu0 0
    %3345 = vperm.xlu0 %3344, %v3239
    %v3346 = vpop.permute.xlu0 %3345
    %3347 = vset.pattern.permute.xlu0 0
    %3348 = vperm.xlu0 %3347, %v3241
    %v3349 = vpop.permute.xlu0 %3348
    %3350 = vset.pattern.permute.xlu0 0
    %3351 = vperm.xlu0 %3350, %v3243
    %v3352 = vpop.permute.xlu0 %3351
    %3353 = vset.pattern.permute.xlu0 0
    %3354 = vperm.xlu0 %3353, %v3245
    %v3355 = vpop.permute.xlu0 %3354
    %3356 = vset.pattern.permute.xlu0 0
    %3357 = vperm.xlu0 %3356, %v3247
    %v3358 = vpop.permute.xlu0 %3357
    %3359 = vset.pattern.permute.xlu0 0
    %3360 = vperm.xlu0 %3359, %v3249
    %v3361 = vpop.permute.xlu0 %3360
    %3362 = vset.pattern.permute.xlu0 0
    %3363 = vperm.xlu0 %3362, %v3251
    %v3364 = vpop.permute.xlu0 %3363
    %3365 = vset.pattern.permute.xlu0 0
    %3366 = vperm.xlu0 %3365, %v3253
    %v3367 = vpop.permute.xlu0 %3366
    %3368 = vset.pattern.permute.xlu0 0
    %3369 = vperm.xlu0 %3368, %v3255
    %v3370 = vpop.permute.xlu0 %3369
    %3371 = vset.pattern.permute.xlu0 0
    %3372 = vperm.xlu0 %3371, %v3257
    %v3373 = vpop.permute.xlu0 %3372
    %3374 = vset.pattern.permute.xlu0 0
    %3375 = vperm.xlu0 %3374, %v3259
    %v3376 = vpop.permute.xlu0 %3375
    %3377 = vset.pattern.permute.xlu0 0
    %3378 = vperm.xlu0 %3377, %v3261
    %v3379 = vpop.permute.xlu0 %3378
    %3380 = vset.pattern.permute.xlu0 0
    %3381 = vperm.xlu0 %3380, %v3263
    %v3382 = vpop.permute.xlu0 %3381
    %3383 = vset.pattern.permute.xlu0 0
    %3384 = vperm.xlu0 %3383, %v3265
    %v3385 = vpop.permute.xlu0 %3384
    %3386 = vset.pattern.permute.xlu0 0
    %3387 = vperm.xlu0 %3386, %v3267
    %v3388 = vpop.permute.xlu0 %3387
    %3389 = vset.pattern.permute.xlu0 0
    %3390 = vperm.xlu0 %3389, %v3269
    %v3391 = vpop.permute.xlu0 %3390
    %3392 = vset.pattern.permute.xlu0 0
    %3393 = vperm.xlu0 %3392, %v3271
    %v3394 = vpop.permute.xlu0 %3393
    %3395 = vset.pattern.permute.xlu0 0
    %3396 = vperm.xlu0 %3395, %v3273
    %v3397 = vpop.permute.xlu0 %3396
    %3398 = vset.pattern.permute.xlu0 0
    %3399 = vperm.xlu0 %3398, %v3275
    %v3400 = vpop.permute.xlu0 %3399
    %3401 = vset.pattern.permute.xlu0 0
    %3402 = vperm.xlu0 %3401, %v3277
    %v3403 = vpop.permute.xlu0 %3402
    %3404 = vset.pattern.permute.xlu0 0
    %3405 = vperm.xlu0 %3404, %v3279
    %v3406 = vpop.permute.xlu0 %3405
    %3407 = vset.pattern.permute.xlu0 0
    %3408 = vperm.xlu0 %3407, %v3281
    %v3409 = vpop.permute.xlu0 %3408
    %v3410 = vlaneseq
    %v3411 = vshrl.u32 %v3410, 7
    %v3412 = vsub.s32 %v917, %v3411
    %v3413 = vrot.slane %v3316, %v3412
    %v3414 = vlaneseq
    %v3415 = vshrl.u32 %v3414, 7
    %v3416 = vsub.s32 %v922, %v3415
    %v3417 = vrot.slane %v3319, %v3416
    %v3418 = vsel %vm927, %v3417, %v3413
    %v3419 = vlaneseq
    %v3420 = vshrl.u32 %v3419, 7
    %v3421 = vsub.s32 %v917, %v3420
    %v3422 = vrot.slane %v3322, %v3421
    %v3423 = vlaneseq
    %v3424 = vshrl.u32 %v3423, 7
    %v3425 = vsub.s32 %v922, %v3424
    %v3426 = vrot.slane %v3325, %v3425
    %v3427 = vsel %vm927, %v3426, %v3422
    %v3428 = vlaneseq
    %v3429 = vshrl.u32 %v3428, 7
    %v3430 = vsub.s32 %v917, %v3429
    %v3431 = vrot.slane %v3328, %v3430
    %v3432 = vlaneseq
    %v3433 = vshrl.u32 %v3432, 7
    %v3434 = vsub.s32 %v922, %v3433
    %v3435 = vrot.slane %v3331, %v3434
    %v3436 = vsel %vm927, %v3435, %v3431
    %v3437 = vlaneseq
    %v3438 = vshrl.u32 %v3437, 7
    %v3439 = vsub.s32 %v917, %v3438
    %v3440 = vrot.slane %v3334, %v3439
    %v3441 = vlaneseq
    %v3442 = vshrl.u32 %v3441, 7
    %v3443 = vsub.s32 %v922, %v3442
    %v3444 = vrot.slane %v3337, %v3443
    %v3445 = vsel %vm927, %v3444, %v3440
    %v3446 = vlaneseq
    %v3447 = vshrl.u32 %v3446, 7
    %v3448 = vsub.s32 %v917, %v3447
    %v3449 = vrot.slane %v3340, %v3448
    %v3450 = vlaneseq
    %v3451 = vshrl.u32 %v3450, 7
    %v3452 = vsub.s32 %v922, %v3451
    %v3453 = vrot.slane %v3343, %v3452
    %v3454 = vsel %vm927, %v3453, %v3449
    %v3455 = vlaneseq
    %v3456 = vshrl.u32 %v3455, 7
    %v3457 = vsub.s32 %v917, %v3456
    %v3458 = vrot.slane %v3346, %v3457
    %v3459 = vlaneseq
    %v3460 = vshrl.u32 %v3459, 7
    %v3461 = vsub.s32 %v922, %v3460
    %v3462 = vrot.slane %v3349, %v3461
    %v3463 = vsel %vm927, %v3462, %v3458
    %v3464 = vlaneseq
    %v3465 = vshrl.u32 %v3464, 7
    %v3466 = vsub.s32 %v917, %v3465
    %v3467 = vrot.slane %v3352, %v3466
    %v3468 = vlaneseq
    %v3469 = vshrl.u32 %v3468, 7
    %v3470 = vsub.s32 %v922, %v3469
    %v3471 = vrot.slane %v3355, %v3470
    %v3472 = vsel %vm927, %v3471, %v3467
    %v3473 = vlaneseq
    %v3474 = vshrl.u32 %v3473, 7
    %v3475 = vsub.s32 %v917, %v3474
    %v3476 = vrot.slane %v3358, %v3475
    %v3477 = vlaneseq
    %v3478 = vshrl.u32 %v3477, 7
    %v3479 = vsub.s32 %v922, %v3478
    %v3480 = vrot.slane %v3361, %v3479
    %v3481 = vsel %vm927, %v3480, %v3476
    %v3482 = vlaneseq
    %v3483 = vshrl.u32 %v3482, 7
    %v3484 = vsub.s32 %v917, %v3483
    %v3485 = vrot.slane %v3364, %v3484
    %v3486 = vlaneseq
    %v3487 = vshrl.u32 %v3486, 7
    %v3488 = vsub.s32 %v922, %v3487
    %v3489 = vrot.slane %v3367, %v3488
    %v3490 = vsel %vm927, %v3489, %v3485
    %v3491 = vlaneseq
    %v3492 = vshrl.u32 %v3491, 7
    %v3493 = vsub.s32 %v917, %v3492
    %v3494 = vrot.slane %v3370, %v3493
    %v3495 = vlaneseq
    %v3496 = vshrl.u32 %v3495, 7
    %v3497 = vsub.s32 %v922, %v3496
    %v3498 = vrot.slane %v3373, %v3497
    %v3499 = vsel %vm927, %v3498, %v3494
    %v3500 = vlaneseq
    %v3501 = vshrl.u32 %v3500, 7
    %v3502 = vsub.s32 %v917, %v3501
    %v3503 = vrot.slane %v3376, %v3502
    %v3504 = vlaneseq
    %v3505 = vshrl.u32 %v3504, 7
    %v3506 = vsub.s32 %v922, %v3505
    %v3507 = vrot.slane %v3379, %v3506
    %v3508 = vsel %vm927, %v3507, %v3503
    %v3509 = vlaneseq
    %v3510 = vshrl.u32 %v3509, 7
    %v3511 = vsub.s32 %v917, %v3510
    %v3512 = vrot.slane %v3382, %v3511
    %v3513 = vlaneseq
    %v3514 = vshrl.u32 %v3513, 7
    %v3515 = vsub.s32 %v922, %v3514
    %v3516 = vrot.slane %v3385, %v3515
    %v3517 = vsel %vm927, %v3516, %v3512
    %v3518 = vlaneseq
    %v3519 = vshrl.u32 %v3518, 7
    %v3520 = vsub.s32 %v917, %v3519
    %v3521 = vrot.slane %v3388, %v3520
    %v3522 = vlaneseq
    %v3523 = vshrl.u32 %v3522, 7
    %v3524 = vsub.s32 %v922, %v3523
    %v3525 = vrot.slane %v3391, %v3524
    %v3526 = vsel %vm927, %v3525, %v3521
    %v3527 = vlaneseq
    %v3528 = vshrl.u32 %v3527, 7
    %v3529 = vsub.s32 %v917, %v3528
    %v3530 = vrot.slane %v3394, %v3529
    %v3531 = vlaneseq
    %v3532 = vshrl.u32 %v3531, 7
    %v3533 = vsub.s32 %v922, %v3532
    %v3534 = vrot.slane %v3397, %v3533
    %v3535 = vsel %vm927, %v3534, %v3530
    %v3536 = vlaneseq
    %v3537 = vshrl.u32 %v3536, 7
    %v3538 = vsub.s32 %v917, %v3537
    %v3539 = vrot.slane %v3400, %v3538
    %v3540 = vlaneseq
    %v3541 = vshrl.u32 %v3540, 7
    %v3542 = vsub.s32 %v922, %v3541
    %v3543 = vrot.slane %v3403, %v3542
    %v3544 = vsel %vm927, %v3543, %v3539
    %v3545 = vlaneseq
    %v3546 = vshrl.u32 %v3545, 7
    %v3547 = vsub.s32 %v917, %v3546
    %v3548 = vrot.slane %v3406, %v3547
    %v3549 = vlaneseq
    %v3550 = vshrl.u32 %v3549, 7
    %v3551 = vsub.s32 %v922, %v3550
    %v3552 = vrot.slane %v3409, %v3551
    %v3553 = vsel %vm927, %v3552, %v3548
    %v3554 = vsel %vm1064, %v3427, %v3418
    %v3555 = vsel %vm1066, %v3436, %v3554
    %v3556 = vsel %vm1068, %v3445, %v3555
    %v3557 = vsel %vm1070, %v3454, %v3556
    %v3558 = vsel %vm1072, %v3463, %v3557
    %v3559 = vsel %vm1074, %v3472, %v3558
    %v3560 = vsel %vm1076, %v3481, %v3559
    %v3561 = vsel %vm1064, %v3499, %v3490
    %v3562 = vsel %vm1066, %v3508, %v3561
    %v3563 = vsel %vm1068, %v3517, %v3562
    %v3564 = vsel %vm1070, %v3526, %v3563
    %v3565 = vsel %vm1072, %v3535, %v3564
    %v3566 = vsel %vm1074, %v3544, %v3565
    %v3567 = vsel %vm1076, %v3553, %v3566
    %v3570 = vsel %vm1087, %v3560, 0.0
    %3571 = vadd.xlane.f32.xlu0 %v3570
    %v3572 = vpop.xlane.xlu0 %3571
    %v3573 = vsel %vm1087, %v3567, 0.0
    %3574 = vadd.xlane.f32.xlu0 %v3573
    %v3575 = vpop.xlane.xlu0 %3574
    %v3576 = vrcp.pop %v3572
    %v3577 = vrcp.pop %v3575
    %v3580 = vlaneseq
    %v3581 = vshrl.u32 %v3580, 7
    %v3582 = vsub.s32 0, %v3581
    %v3583 = vrot.slane %v3576, %v3582
    %v3584 = vlaneseq
    %v3585 = vshrl.u32 %v3584, 7
    %v3586 = vsub.s32 1, %v3585
    %v3587 = vrot.slane %v3576, %v3586
    %v3588 = vlaneseq
    %v3589 = vshrl.u32 %v3588, 7
    %v3590 = vsub.s32 2, %v3589
    %v3591 = vrot.slane %v3576, %v3590
    %v3592 = vlaneseq
    %v3593 = vshrl.u32 %v3592, 7
    %v3594 = vsub.s32 3, %v3593
    %v3595 = vrot.slane %v3576, %v3594
    %v3596 = vlaneseq
    %v3597 = vshrl.u32 %v3596, 7
    %v3598 = vsub.s32 4, %v3597
    %v3599 = vrot.slane %v3576, %v3598
    %v3600 = vlaneseq
    %v3601 = vshrl.u32 %v3600, 7
    %v3602 = vsub.s32 5, %v3601
    %v3603 = vrot.slane %v3576, %v3602
    %v3604 = vlaneseq
    %v3605 = vshrl.u32 %v3604, 7
    %v3606 = vsub.s32 6, %v3605
    %v3607 = vrot.slane %v3576, %v3606
    %v3608 = vlaneseq
    %v3609 = vshrl.u32 %v3608, 7
    %v3610 = vsub.s32 7, %v3609
    %v3611 = vrot.slane %v3576, %v3610
    %v3612 = vlaneseq
    %v3613 = vshrl.u32 %v3612, 7
    %v3614 = vsub.s32 0, %v3613
    %v3615 = vrot.slane %v3577, %v3614
    %v3616 = vlaneseq
    %v3617 = vshrl.u32 %v3616, 7
    %v3618 = vsub.s32 1, %v3617
    %v3619 = vrot.slane %v3577, %v3618
    %v3620 = vlaneseq
    %v3621 = vshrl.u32 %v3620, 7
    %v3622 = vsub.s32 2, %v3621
    %v3623 = vrot.slane %v3577, %v3622
    %v3624 = vlaneseq
    %v3625 = vshrl.u32 %v3624, 7
    %v3626 = vsub.s32 3, %v3625
    %v3627 = vrot.slane %v3577, %v3626
    %v3628 = vlaneseq
    %v3629 = vshrl.u32 %v3628, 7
    %v3630 = vsub.s32 4, %v3629
    %v3631 = vrot.slane %v3577, %v3630
    %v3632 = vlaneseq
    %v3633 = vshrl.u32 %v3632, 7
    %v3634 = vsub.s32 5, %v3633
    %v3635 = vrot.slane %v3577, %v3634
    %v3636 = vlaneseq
    %v3637 = vshrl.u32 %v3636, 7
    %v3638 = vsub.s32 6, %v3637
    %v3639 = vrot.slane %v3577, %v3638
    %v3640 = vlaneseq
    %v3641 = vshrl.u32 %v3640, 7
    %v3642 = vsub.s32 7, %v3641
    %v3643 = vrot.slane %v3577, %v3642
    %v3660 = vmul.f32 %v3219, %v3583
    %v3661 = vmul.f32 %v3221, %v3583
    %v3662 = vmul.f32 %v3223, %v3587
    %v3663 = vmul.f32 %v3225, %v3587
    %v3664 = vmul.f32 %v3227, %v3591
    %v3665 = vmul.f32 %v3229, %v3591
    %v3666 = vmul.f32 %v3231, %v3595
    %v3667 = vmul.f32 %v3233, %v3595
    %v3668 = vmul.f32 %v3235, %v3599
    %v3669 = vmul.f32 %v3237, %v3599
    %v3670 = vmul.f32 %v3239, %v3603
    %v3671 = vmul.f32 %v3241, %v3603
    %v3672 = vmul.f32 %v3243, %v3607
    %v3673 = vmul.f32 %v3245, %v3607
    %v3674 = vmul.f32 %v3247, %v3611
    %v3675 = vmul.f32 %v3249, %v3611
    %v3676 = vmul.f32 %v3251, %v3615
    %v3677 = vmul.f32 %v3253, %v3615
    %v3678 = vmul.f32 %v3255, %v3619
    %v3679 = vmul.f32 %v3257, %v3619
    %v3680 = vmul.f32 %v3259, %v3623
    %v3681 = vmul.f32 %v3261, %v3623
    %v3682 = vmul.f32 %v3263, %v3627
    %v3683 = vmul.f32 %v3265, %v3627
    %v3684 = vmul.f32 %v3267, %v3631
    %v3685 = vmul.f32 %v3269, %v3631
    %v3686 = vmul.f32 %v3271, %v3635
    %v3687 = vmul.f32 %v3273, %v3635
    %v3688 = vmul.f32 %v3275, %v3639
    %v3689 = vmul.f32 %v3277, %v3639
    %v3690 = vmul.f32 %v3279, %v3643
    %v3691 = vmul.f32 %v3281, %v3643
    %v3692 = vpack.c.bf16 %v3661, %v3660
    %v3693 = vpack.c.bf16 %v3663, %v3662
    %v3694 = vpack.c.bf16 %v3665, %v3664
    %v3695 = vpack.c.bf16 %v3667, %v3666
    %v3696 = vpack.c.bf16 %v3669, %v3668
    %v3697 = vpack.c.bf16 %v3671, %v3670
    %v3698 = vpack.c.bf16 %v3673, %v3672
    %v3699 = vpack.c.bf16 %v3675, %v3674
    %v3700 = vpack.c.bf16 %v3677, %v3676
    %v3701 = vpack.c.bf16 %v3679, %v3678
    %v3702 = vpack.c.bf16 %v3681, %v3680
    %v3703 = vpack.c.bf16 %v3683, %v3682
    %v3704 = vpack.c.bf16 %v3685, %v3684
    %v3705 = vpack.c.bf16 %v3687, %v3686
    %v3706 = vpack.c.bf16 %v3689, %v3688
    %v3707 = vpack.c.bf16 %v3691, %v3690
    %v3724 = vunpack.c.l.b16 %v3692
    %v3725 = vunpack.c.h.b16 %v3692
    %v3726 = vunpack.c.l.b16 %v3693
    %v3727 = vunpack.c.h.b16 %v3693
    %v3728 = vunpack.c.l.b16 %v3694
    %v3729 = vunpack.c.h.b16 %v3694
    %v3730 = vunpack.c.l.b16 %v3695
    %v3731 = vunpack.c.h.b16 %v3695
    %v3732 = vunpack.c.l.b16 %v3696
    %v3733 = vunpack.c.h.b16 %v3696
    %v3734 = vunpack.c.l.b16 %v3697
    %v3735 = vunpack.c.h.b16 %v3697
    %v3736 = vunpack.c.l.b16 %v3698
    %v3737 = vunpack.c.h.b16 %v3698
    %v3738 = vunpack.c.l.b16 %v3699
    %v3739 = vunpack.c.h.b16 %v3699
    %v3740 = vunpack.c.l.b16 %v3700
    %v3741 = vunpack.c.h.b16 %v3700
    %v3742 = vunpack.c.l.b16 %v3701
    %v3743 = vunpack.c.h.b16 %v3701
    %v3744 = vunpack.c.l.b16 %v3702
    %v3745 = vunpack.c.h.b16 %v3702
    %v3746 = vunpack.c.l.b16 %v3703
    %v3747 = vunpack.c.h.b16 %v3703
    %v3748 = vunpack.c.l.b16 %v3704
    %v3749 = vunpack.c.h.b16 %v3704
    %v3750 = vunpack.c.l.b16 %v3705
    %v3751 = vunpack.c.h.b16 %v3705
    %v3752 = vunpack.c.l.b16 %v3706
    %v3753 = vunpack.c.h.b16 %v3706
    %v3754 = vunpack.c.l.b16 %v3707
    %v3755 = vunpack.c.h.b16 %v3707
    %3756 = vset.pattern.permute.xlu0 0
    %3757 = vperm.xlu0 %3756, %v3724
    %v3758 = vpop.permute.xlu0 %3757
    %3759 = vset.pattern.permute.xlu0 0
    %3760 = vperm.xlu0 %3759, %v3725
    %v3761 = vpop.permute.xlu0 %3760
    %3762 = vset.pattern.permute.xlu0 0
    %3763 = vperm.xlu0 %3762, %v3726
    %v3764 = vpop.permute.xlu0 %3763
    %3765 = vset.pattern.permute.xlu0 0
    %3766 = vperm.xlu0 %3765, %v3727
    %v3767 = vpop.permute.xlu0 %3766
    %3768 = vset.pattern.permute.xlu0 0
    %3769 = vperm.xlu0 %3768, %v3728
    %v3770 = vpop.permute.xlu0 %3769
    %3771 = vset.pattern.permute.xlu0 0
    %3772 = vperm.xlu0 %3771, %v3729
    %v3773 = vpop.permute.xlu0 %3772
    %3774 = vset.pattern.permute.xlu0 0
    %3775 = vperm.xlu0 %3774, %v3730
    %v3776 = vpop.permute.xlu0 %3775
    %3777 = vset.pattern.permute.xlu0 0
    %3778 = vperm.xlu0 %3777, %v3731
    %v3779 = vpop.permute.xlu0 %3778
    %3780 = vset.pattern.permute.xlu0 0
    %3781 = vperm.xlu0 %3780, %v3732
    %v3782 = vpop.permute.xlu0 %3781
    %3783 = vset.pattern.permute.xlu0 0
    %3784 = vperm.xlu0 %3783, %v3733
    %v3785 = vpop.permute.xlu0 %3784
    %3786 = vset.pattern.permute.xlu0 0
    %3787 = vperm.xlu0 %3786, %v3734
    %v3788 = vpop.permute.xlu0 %3787
    %3789 = vset.pattern.permute.xlu0 0
    %3790 = vperm.xlu0 %3789, %v3735
    %v3791 = vpop.permute.xlu0 %3790
    %3792 = vset.pattern.permute.xlu0 0
    %3793 = vperm.xlu0 %3792, %v3736
    %v3794 = vpop.permute.xlu0 %3793
    %3795 = vset.pattern.permute.xlu0 0
    %3796 = vperm.xlu0 %3795, %v3737
    %v3797 = vpop.permute.xlu0 %3796
    %3798 = vset.pattern.permute.xlu0 0
    %3799 = vperm.xlu0 %3798, %v3738
    %v3800 = vpop.permute.xlu0 %3799
    %3801 = vset.pattern.permute.xlu0 0
    %3802 = vperm.xlu0 %3801, %v3739
    %v3803 = vpop.permute.xlu0 %3802
    %3804 = vset.pattern.permute.xlu0 0
    %3805 = vperm.xlu0 %3804, %v3740
    %v3806 = vpop.permute.xlu0 %3805
    %3807 = vset.pattern.permute.xlu0 0
    %3808 = vperm.xlu0 %3807, %v3741
    %v3809 = vpop.permute.xlu0 %3808
    %3810 = vset.pattern.permute.xlu0 0
    %3811 = vperm.xlu0 %3810, %v3742
    %v3812 = vpop.permute.xlu0 %3811
    %3813 = vset.pattern.permute.xlu0 0
    %3814 = vperm.xlu0 %3813, %v3743
    %v3815 = vpop.permute.xlu0 %3814
    %3816 = vset.pattern.permute.xlu0 0
    %3817 = vperm.xlu0 %3816, %v3744
    %v3818 = vpop.permute.xlu0 %3817
    %3819 = vset.pattern.permute.xlu0 0
    %3820 = vperm.xlu0 %3819, %v3745
    %v3821 = vpop.permute.xlu0 %3820
    %3822 = vset.pattern.permute.xlu0 0
    %3823 = vperm.xlu0 %3822, %v3746
    %v3824 = vpop.permute.xlu0 %3823
    %3825 = vset.pattern.permute.xlu0 0
    %3826 = vperm.xlu0 %3825, %v3747
    %v3827 = vpop.permute.xlu0 %3826
    %3828 = vset.pattern.permute.xlu0 0
    %3829 = vperm.xlu0 %3828, %v3748
    %v3830 = vpop.permute.xlu0 %3829
    %3831 = vset.pattern.permute.xlu0 0
    %3832 = vperm.xlu0 %3831, %v3749
    %v3833 = vpop.permute.xlu0 %3832
    %3834 = vset.pattern.permute.xlu0 0
    %3835 = vperm.xlu0 %3834, %v3750
    %v3836 = vpop.permute.xlu0 %3835
    %3837 = vset.pattern.permute.xlu0 0
    %3838 = vperm.xlu0 %3837, %v3751
    %v3839 = vpop.permute.xlu0 %3838
    %3840 = vset.pattern.permute.xlu0 0
    %3841 = vperm.xlu0 %3840, %v3752
    %v3842 = vpop.permute.xlu0 %3841
    %3843 = vset.pattern.permute.xlu0 0
    %3844 = vperm.xlu0 %3843, %v3753
    %v3845 = vpop.permute.xlu0 %3844
    %3846 = vset.pattern.permute.xlu0 0
    %3847 = vperm.xlu0 %3846, %v3754
    %v3848 = vpop.permute.xlu0 %3847
    %3849 = vset.pattern.permute.xlu0 0
    %3850 = vperm.xlu0 %3849, %v3755
    %v3851 = vpop.permute.xlu0 %3850
    %v3852 = vlaneseq
    %v3853 = vshrl.u32 %v3852, 7
    %v3854 = vsub.s32 %v917, %v3853
    %v3855 = vrot.slane %v3758, %v3854
    %v3856 = vlaneseq
    %v3857 = vshrl.u32 %v3856, 7
    %v3858 = vsub.s32 %v922, %v3857
    %v3859 = vrot.slane %v3761, %v3858
    %v3860 = vsel %vm927, %v3859, %v3855
    %v3861 = vlaneseq
    %v3862 = vshrl.u32 %v3861, 7
    %v3863 = vsub.s32 %v917, %v3862
    %v3864 = vrot.slane %v3764, %v3863
    %v3865 = vlaneseq
    %v3866 = vshrl.u32 %v3865, 7
    %v3867 = vsub.s32 %v922, %v3866
    %v3868 = vrot.slane %v3767, %v3867
    %v3869 = vsel %vm927, %v3868, %v3864
    %v3870 = vlaneseq
    %v3871 = vshrl.u32 %v3870, 7
    %v3872 = vsub.s32 %v917, %v3871
    %v3873 = vrot.slane %v3770, %v3872
    %v3874 = vlaneseq
    %v3875 = vshrl.u32 %v3874, 7
    %v3876 = vsub.s32 %v922, %v3875
    %v3877 = vrot.slane %v3773, %v3876
    %v3878 = vsel %vm927, %v3877, %v3873
    %v3879 = vlaneseq
    %v3880 = vshrl.u32 %v3879, 7
    %v3881 = vsub.s32 %v917, %v3880
    %v3882 = vrot.slane %v3776, %v3881
    %v3883 = vlaneseq
    %v3884 = vshrl.u32 %v3883, 7
    %v3885 = vsub.s32 %v922, %v3884
    %v3886 = vrot.slane %v3779, %v3885
    %v3887 = vsel %vm927, %v3886, %v3882
    %v3888 = vlaneseq
    %v3889 = vshrl.u32 %v3888, 7
    %v3890 = vsub.s32 %v917, %v3889
    %v3891 = vrot.slane %v3782, %v3890
    %v3892 = vlaneseq
    %v3893 = vshrl.u32 %v3892, 7
    %v3894 = vsub.s32 %v922, %v3893
    %v3895 = vrot.slane %v3785, %v3894
    %v3896 = vsel %vm927, %v3895, %v3891
    %v3897 = vlaneseq
    %v3898 = vshrl.u32 %v3897, 7
    %v3899 = vsub.s32 %v917, %v3898
    %v3900 = vrot.slane %v3788, %v3899
    %v3901 = vlaneseq
    %v3902 = vshrl.u32 %v3901, 7
    %v3903 = vsub.s32 %v922, %v3902
    %v3904 = vrot.slane %v3791, %v3903
    %v3905 = vsel %vm927, %v3904, %v3900
    %v3906 = vlaneseq
    %v3907 = vshrl.u32 %v3906, 7
    %v3908 = vsub.s32 %v917, %v3907
    %v3909 = vrot.slane %v3794, %v3908
    %v3910 = vlaneseq
    %v3911 = vshrl.u32 %v3910, 7
    %v3912 = vsub.s32 %v922, %v3911
    %v3913 = vrot.slane %v3797, %v3912
    %v3914 = vsel %vm927, %v3913, %v3909
    %v3915 = vlaneseq
    %v3916 = vshrl.u32 %v3915, 7
    %v3917 = vsub.s32 %v917, %v3916
    %v3918 = vrot.slane %v3800, %v3917
    %v3919 = vlaneseq
    %v3920 = vshrl.u32 %v3919, 7
    %v3921 = vsub.s32 %v922, %v3920
    %v3922 = vrot.slane %v3803, %v3921
    %v3923 = vsel %vm927, %v3922, %v3918
    %v3924 = vlaneseq
    %v3925 = vshrl.u32 %v3924, 7
    %v3926 = vsub.s32 %v917, %v3925
    %v3927 = vrot.slane %v3806, %v3926
    %v3928 = vlaneseq
    %v3929 = vshrl.u32 %v3928, 7
    %v3930 = vsub.s32 %v922, %v3929
    %v3931 = vrot.slane %v3809, %v3930
    %v3932 = vsel %vm927, %v3931, %v3927
    %v3933 = vlaneseq
    %v3934 = vshrl.u32 %v3933, 7
    %v3935 = vsub.s32 %v917, %v3934
    %v3936 = vrot.slane %v3812, %v3935
    %v3937 = vlaneseq
    %v3938 = vshrl.u32 %v3937, 7
    %v3939 = vsub.s32 %v922, %v3938
    %v3940 = vrot.slane %v3815, %v3939
    %v3941 = vsel %vm927, %v3940, %v3936
    %v3942 = vlaneseq
    %v3943 = vshrl.u32 %v3942, 7
    %v3944 = vsub.s32 %v917, %v3943
    %v3945 = vrot.slane %v3818, %v3944
    %v3946 = vlaneseq
    %v3947 = vshrl.u32 %v3946, 7
    %v3948 = vsub.s32 %v922, %v3947
    %v3949 = vrot.slane %v3821, %v3948
    %v3950 = vsel %vm927, %v3949, %v3945
    %v3951 = vlaneseq
    %v3952 = vshrl.u32 %v3951, 7
    %v3953 = vsub.s32 %v917, %v3952
    %v3954 = vrot.slane %v3824, %v3953
    %v3955 = vlaneseq
    %v3956 = vshrl.u32 %v3955, 7
    %v3957 = vsub.s32 %v922, %v3956
    %v3958 = vrot.slane %v3827, %v3957
    %v3959 = vsel %vm927, %v3958, %v3954
    %v3960 = vlaneseq
    %v3961 = vshrl.u32 %v3960, 7
    %v3962 = vsub.s32 %v917, %v3961
    %v3963 = vrot.slane %v3830, %v3962
    %v3964 = vlaneseq
    %v3965 = vshrl.u32 %v3964, 7
    %v3966 = vsub.s32 %v922, %v3965
    %v3967 = vrot.slane %v3833, %v3966
    %v3968 = vsel %vm927, %v3967, %v3963
    %v3969 = vlaneseq
    %v3970 = vshrl.u32 %v3969, 7
    %v3971 = vsub.s32 %v917, %v3970
    %v3972 = vrot.slane %v3836, %v3971
    %v3973 = vlaneseq
    %v3974 = vshrl.u32 %v3973, 7
    %v3975 = vsub.s32 %v922, %v3974
    %v3976 = vrot.slane %v3839, %v3975
    %v3977 = vsel %vm927, %v3976, %v3972
    %v3978 = vlaneseq
    %v3979 = vshrl.u32 %v3978, 7
    %v3980 = vsub.s32 %v917, %v3979
    %v3981 = vrot.slane %v3842, %v3980
    %v3982 = vlaneseq
    %v3983 = vshrl.u32 %v3982, 7
    %v3984 = vsub.s32 %v922, %v3983
    %v3985 = vrot.slane %v3845, %v3984
    %v3986 = vsel %vm927, %v3985, %v3981
    %v3987 = vlaneseq
    %v3988 = vshrl.u32 %v3987, 7
    %v3989 = vsub.s32 %v917, %v3988
    %v3990 = vrot.slane %v3848, %v3989
    %v3991 = vlaneseq
    %v3992 = vshrl.u32 %v3991, 7
    %v3993 = vsub.s32 %v922, %v3992
    %v3994 = vrot.slane %v3851, %v3993
    %v3995 = vsel %vm927, %v3994, %v3990
    %v3996 = vsel %vm1064, %v3869, %v3860
    %v3997 = vsel %vm1066, %v3878, %v3996
    %v3998 = vsel %vm1068, %v3887, %v3997
    %v3999 = vsel %vm1070, %v3896, %v3998
    %v4000 = vsel %vm1072, %v3905, %v3999
    %v4001 = vsel %vm1074, %v3914, %v4000
    %v4002 = vsel %vm1076, %v3923, %v4001
    %v4003 = vsel %vm1064, %v3941, %v3932
    %v4004 = vsel %vm1066, %v3950, %v4003
    %v4005 = vsel %vm1068, %v3959, %v4004
    %v4006 = vsel %vm1070, %v3968, %v4005
    %v4007 = vsel %vm1072, %v3977, %v4006
    %v4008 = vsel %vm1074, %v3986, %v4007
    %v4009 = vsel %vm1076, %v3995, %v4008
    %v4010 = vpack.c.b16 %v4009, %v4002
    %v4012 = vsel %vm1087, %v4010, 0
    %4014 = vmatprep.subr.bf16.mxu0 0
    %4015 = vmatpush1.bf16.msra.mxu0 %v2133
    %4016 = vmatprep.subr.bf16.mxu0 0
    %4017 = vmatpush1.bf16.msra.mxu0 0
    %4018 = vmatprep.subr.bf16.mxu0 0
    %4019 = vmatpush1.bf16.msra.mxu0 0
    %4020 = vmatprep.subr.bf16.mxu0 0
    %4021 = vmatpush1.bf16.msra.mxu0 0
    %4022 = vmatprep.subr.bf16.mxu0 0
    %4023 = vmatpush1.bf16.msra.mxu0 0
    %4024 = vmatprep.subr.bf16.mxu0 0
    %4025 = vmatpush1.bf16.msra.mxu0 0
    %4026 = vmatprep.subr.bf16.mxu0 0
    %4027 = vmatpush1.bf16.msra.mxu0 0
    %4028 = vmatprep.subr.bf16.mxu0 0
    %4029 = vmatpush1.bf16.msra.mxu0 0
    %4030 = vmatprep.subr.bf16.mxu0 0
    %4031 = vmatpush1.bf16.msra.mxu0 0
    %4032 = vmatprep.subr.bf16.mxu0 0
    %4033 = vmatpush1.bf16.msra.mxu0 0
    %4034 = vmatprep.subr.bf16.mxu0 0
    %4035 = vmatpush1.bf16.msra.mxu0 0
    %4036 = vmatprep.subr.bf16.mxu0 0
    %4037 = vmatpush1.bf16.msra.mxu0 0
    %4038 = vmatprep.subr.bf16.mxu0 0
    %4039 = vmatpush1.bf16.msra.mxu0 0
    %4040 = vmatprep.subr.bf16.mxu0 0
    %4041 = vmatpush1.bf16.msra.mxu0 0
    %4042 = vmatprep.subr.bf16.mxu0 0
    %4043 = vmatpush1.bf16.msra.mxu0 0
    %4044 = vmatprep.subr.bf16.mxu0 0
    %4045 = vmatpush1.bf16.msra.mxu0 0
    %4046 = vmatprep.mubr.bf16.mxu0 0
    %4047 = vmatmul.mubr.bf16.gmra.mrb[0].mxu0 %v4012
    %v4048 = vpop.f32.mrb[0].mxu0
    %v4049 = vadd.f32 %v2156, %v4048
    %v4050 = vpop.f32.mrb[0].mxu0
    %v4051 = vpop.f32.mrb[0].mxu0
    %v4052 = vadd.f32 %v2156, %v4051
    %v4053 = vpop.f32.mrb[0].mxu0
    %4054 = vdwg.mxu0
    %4055 = vst.msk [vmem:[#allocation3] sm:$0xff] %vm119, %v4049
    %4056 = vst.msk [vmem:[#allocation3 + $0x8] sm:$0xff] %vm119, %v4052
    %v4057 = vld [vmem:[#allocation3] sm:$0xff]
    %v4058 = vld [vmem:[#allocation3 + $0x8] sm:$0xff]
    %v4059 = vpack.c.bf16 %v4058, %v4057
    %v4060 = vld [vmem:[%s2] sm:$0x1]
    %v4062 = vsel %vm1087, %v4060, 0
    %4064 = vmatprep.subr.bf16.mxu0 0
    %4065 = vmatpush1.bf16.msra.mxu0 %v4059
    %4066 = vmatprep.subr.bf16.mxu0 0
    %4067 = vmatpush1.bf16.msra.mxu0 0
    %4068 = vmatprep.subr.bf16.mxu0 0
    %4069 = vmatpush1.bf16.msra.mxu0 0
    %4070 = vmatprep.subr.bf16.mxu0 0
    %4071 = vmatpush1.bf16.msra.mxu0 0
    %4072 = vmatprep.subr.bf16.mxu0 0
    %4073 = vmatpush1.bf16.msra.mxu0 0
    %4074 = vmatprep.subr.bf16.mxu0 0
    %4075 = vmatpush1.bf16.msra.mxu0 0
    %4076 = vmatprep.subr.bf16.mxu0 0
    %4077 = vmatpush1.bf16.msra.mxu0 0
    %4078 = vmatprep.subr.bf16.mxu0 0
    %4079 = vmatpush1.bf16.msra.mxu0 0
    %4080 = vmatprep.subr.bf16.mxu0 0
    %4081 = vmatpush1.bf16.msra.mxu0 0
    %4082 = vmatprep.subr.bf16.mxu0 0
    %4083 = vmatpush1.bf16.msra.mxu0 0
    %4084 = vmatprep.subr.bf16.mxu0 0
    %4085 = vmatpush1.bf16.msra.mxu0 0
    %4086 = vmatprep.subr.bf16.mxu0 0
    %4087 = vmatpush1.bf16.msra.mxu0 0
    %4088 = vmatprep.subr.bf16.mxu0 0
    %4089 = vmatpush1.bf16.msra.mxu0 0
    %4090 = vmatprep.subr.bf16.mxu0 0
    %4091 = vmatpush1.bf16.msra.mxu0 0
    %4092 = vmatprep.subr.bf16.mxu0 0
    %4093 = vmatpush1.bf16.msra.mxu0 0
    %4094 = vmatprep.subr.bf16.mxu0 0
    %4095 = vmatpush1.bf16.msra.mxu0 0
    %4096 = vmatprep.mubr.bf16.mxu0 0
    %4097 = vmatmul.mubr.bf16.gmra.mrb[0].mxu0 %v4062
    %v4098 = vpop.f32.mrb[0].mxu0
    %v4099 = vadd.f32 0.0, %v4098
    %v4100 = vpop.f32.mrb[0].mxu0
    %v4101 = vpop.f32.mrb[0].mxu0
    %v4102 = vpop.f32.mrb[0].mxu0
    %4103 = vdwg.mxu0
    %v4104 = vpack.c.bf16 %v4099, %v4099
    %v4105 = vld [vmem:[%s11] sm:$0xf]
    %v4106 = vld [vmem:[%s11 + $0x4] sm:$0xf]
    %v4107 = vld [vmem:[%s11 + $0x8] sm:$0xf]
    %v4108 = vld [vmem:[%s11 + $0xc] sm:$0xf]
    %v4109 = vld [vmem:[%s11 + $0x10] sm:$0xf]
    %v4110 = vld [vmem:[%s11 + $0x14] sm:$0xf]
    %v4111 = vld [vmem:[%s11 + $0x18] sm:$0xf]
    %v4112 = vld [vmem:[%s11 + $0x1c] sm:$0xf]
    %v4113 = vld [vmem:[%s12] sm:$0x1]
    %v4115 = vlaneseq
    %v4116 = vshrl.u32 %v4115, 7
    %v4117 = vsub.s32 0, %v4116
    %v4118 = vrot.slane %v4113, %v4117
    %v4128 = vunpack.c.l.b16 %v4105
    %v4129 = vunpack.c.l.b16 %v4106
    %v4130 = vunpack.c.l.b16 %v4107
    %v4131 = vunpack.c.l.b16 %v4108
    %v4132 = vunpack.c.l.b16 %v4109
    %v4133 = vunpack.c.l.b16 %v4110
    %v4134 = vunpack.c.l.b16 %v4111
    %v4135 = vunpack.c.l.b16 %v4112
    %v4136 = vpack.c.b16 %v4129, %v4128
    %v4137 = vpack.c.b16 %v4131, %v4130
    %v4138 = vpack.c.b16 %v4133, %v4132
    %v4139 = vpack.c.b16 %v4135, %v4134
    %v4145 = vsel %vm119, %v4104, 0
    %4147 = vmatprep.subr.bf16.mxu0 0
    %4148 = vmatpush1.bf16.msra.mxu0 %v4136
    %4149 = vmatprep.subr.bf16.mxu0 0
    %4150 = vmatpush1.bf16.msra.mxu0 %v4137
    %4151 = vmatprep.subr.bf16.mxu0 0
    %4152 = vmatpush1.bf16.msra.mxu0 %v4138
    %4153 = vmatprep.subr.bf16.mxu0 0
    %4154 = vmatpush1.bf16.msra.mxu0 %v4139
    %4155 = vmatprep.subr.bf16.mxu0 0
    %4156 = vmatpush1.bf16.msra.mxu0 0
    %4157 = vmatprep.subr.bf16.mxu0 0
    %4158 = vmatpush1.bf16.msra.mxu0 0
    %4159 = vmatprep.subr.bf16.mxu0 0
    %4160 = vmatpush1.bf16.msra.mxu0 0
    %4161 = vmatprep.subr.bf16.mxu0 0
    %4162 = vmatpush1.bf16.msra.mxu0 0
    %4163 = vmatprep.subr.bf16.mxu0 0
    %4164 = vmatpush1.bf16.msra.mxu0 0
    %4165 = vmatprep.subr.bf16.mxu0 0
    %4166 = vmatpush1.bf16.msra.mxu0 0
    %4167 = vmatprep.subr.bf16.mxu0 0
    %4168 = vmatpush1.bf16.msra.mxu0 0
    %4169 = vmatprep.subr.bf16.mxu0 0
    %4170 = vmatpush1.bf16.msra.mxu0 0
    %4171 = vmatprep.subr.bf16.mxu0 0
    %4172 = vmatpush1.bf16.msra.mxu0 0
    %4173 = vmatprep.subr.bf16.mxu0 0
    %4174 = vmatpush1.bf16.msra.mxu0 0
    %4175 = vmatprep.subr.bf16.mxu0 0
    %4176 = vmatpush1.bf16.msra.mxu0 0
    %4177 = vmatprep.subr.bf16.mxu0 0
    %4178 = vmatpush1.bf16.msra.mxu0 0
    %4179 = vmatprep.mubr.bf16.mxu0 0
    %4180 = vmatmul.mubr.bf16.gmra.mrb[0].mxu0 %v4145
    %v4181 = vpop.f32.mrb[0].mxu0
    %v4182 = vadd.f32 %v4118, %v4181
    %v4183 = vpop.f32.mrb[0].mxu0
    %v4184 = vpop.f32.mrb[0].mxu0
    %v4185 = vpop.f32.mrb[0].mxu0
    %4186 = vdwg.mxu0
    %vm4187 = vcmask 17408
    %4188 = vst.msk [vmem:[#allocation4] sm:$0x3] %vm4187, %v4182
    // Predicated region
    $region54: #{tpu_custom_call.1} parent=1 // pred_check
      _
    $region55: #{tpu_custom_call.1} parent=1 // pred_check_branch
      %4190 = sbr.rel (0) target = $region57
    $region56: #{tpu_custom_call.1} parent=1 // pred_region
      %s4192 = ssub.s32 32, 32
      %4193 = vsyncadd [#allocation5], %s4192
      %s4195 = sshll.u32 [#allocation4], 4
      %s4196 = int_to_ptr.vmem [resolvable:$true] %s4195
      %4198 = dma.vmem_to_hbm [thread:$0]  %s4196, 32, %s13, [#allocation5]
    $region57: #{tpu_custom_call.1} parent=1 // pred_fallthru
      _
    // Predicated region
    $region58: #{tpu_custom_call.1} parent=1 // pred_check
      _
    $region59: #{tpu_custom_call.1} parent=1 // pred_check_branch
      %4200 = sbr.rel (0) target = $region61
    $region60: #{tpu_custom_call.1} parent=1 // pred_region
      %4201 = dma.done [#allocation5], 32
    $region61: #{tpu_custom_call.1} parent=1 // pred_fallthru
      _
    %4202 = vsyncpa [#allocation5], 1

</llo_original>
